<compile_context>
chip_gen: v7x
topology: tpu7x:2x2x1
jax: 0.10.0
libtpu: 0.0.40
codegen_flags: <defaults>
</compile_context>

<pallas_src>
import jax
import jax.numpy as jnp
from jax.experimental import pallas as pl
from jax.experimental.pallas import tpu as pltpu


# ----------------------------------------------------------------------------
# Config (same structure as the documented module, shrunk for a small test).
# ----------------------------------------------------------------------------
D_FEATURE = 32          # d_feature
D_IN = 9                # points(3) + view_dirs(3) + normals(3)
D_OUT = 3
D_HIDDEN = 32
N_LAYERS = 4
MULTIRES_VIEW = 4
MODE = "idr"
SQUEEZE_OUT = True

# NeRF-style embedder output channels for view_dirs (include_input=True, sin+cos):
EMBED_CH = 3 + 3 * 2 * MULTIRES_VIEW          # 27
# dims[0] = d_in + d_feature + (input_ch - 3)
DIMS = [D_IN + D_FEATURE + (EMBED_CH - 3)] + [D_HIDDEN] * N_LAYERS + [D_OUT]
NUM_LAYERS = len(DIMS)                         # 6 -> 5 Linear layers

OUT_PAD = 128                                  # lane-dense output width (>= 128)


# ----------------------------------------------------------------------------
# Positional embedding of view directions (XLA-side glue, elementwise sin/cos).
# ----------------------------------------------------------------------------
def embed_view(view_dirs: jnp.ndarray, multires: int) -> jnp.ndarray:
    # log-sampled frequencies 2^0 .. 2^(multires-1), include the raw input,
    # per-frequency interleaved sin/cos (standard NeRF get_embedder order).
    outs = [view_dirs]
    for i in range(multires):
        f = 2.0 ** i
        outs.append(jnp.sin(view_dirs * f))
        outs.append(jnp.cos(view_dirs * f))
    return jnp.concatenate(outs, axis=-1)


# ----------------------------------------------------------------------------
# Deterministic parameter init (weight-norm applied explicitly to get the
# effective weight; at init this matches nn.utils.weight_norm's forward).
# ----------------------------------------------------------------------------
def init_params(key):
    params = []
    for l in range(NUM_LAYERS - 1):
        d_i, d_o = DIMS[l], DIMS[l + 1]
        key, kv, kg, kb = jax.random.split(key, 4)
        # torch.nn.Linear weight is (out, in); emulate weight_norm: w = g * v/||v||_row
        v = jax.random.normal(kv, (d_o, d_i), jnp.float32) * 0.1
        g = 1.0 + 0.01 * jax.random.normal(kg, (d_o,), jnp.float32)
        norm = jnp.sqrt(jnp.sum(v * v, axis=1, keepdims=True)) + 1e-12
        w_eff = (g[:, None] / norm) * v                  # (out, in)
        b = 0.01 * jax.random.normal(kb, (d_o,), jnp.float32)
        # store as (in, out) so the kernel computes x @ W
        params.append((w_eff.T, b.reshape(1, d_o)))
    return params


def pack_params(params):
    """Pack the 5 (w, b) pairs into a few VMEM-resident buffers.

    Returns:
      w0  : (DIMS[0], D_HIDDEN)      bf16  -- first layer
      wh  : (3, D_HIDDEN, D_HIDDEN)  bf16  -- hidden layers 1..3 stacked
      bh  : (4, D_HIDDEN)            f32   -- biases of layers 0..3 stacked
      w4p : (D_HIDDEN, OUT_PAD)      bf16  -- last layer, lane-padded 3 -> 128
      b4p : (1, OUT_PAD)             f32   -- last bias, lane-padded
    """
    w0 = params[0][0].astype(jnp.bfloat16)
    wh = jnp.stack([params[l][0] for l in (1, 2, 3)], axis=0).astype(jnp.bfloat16)
    bh = jnp.concatenate([params[l][1] for l in (0, 1, 2, 3)], axis=0)
    w4, b4 = params[4]
    w4p = jnp.zeros((D_HIDDEN, OUT_PAD), jnp.float32).at[:, :D_OUT].set(w4)
    w4p = w4p.astype(jnp.bfloat16)
    b4p = jnp.zeros((1, OUT_PAD), jnp.float32).at[:, :D_OUT].set(b4)
    return w0, wh, bh, w4p, b4p


# ----------------------------------------------------------------------------
# Pallas kernel: 5 chained matmuls (bf16 operands, f32 accumulation), ReLU on
# hidden layers, sigmoid on the lane-padded output slab.
# ----------------------------------------------------------------------------
def mlp_kernel(x_ref, w0_ref, wh_ref, bh_ref, w4_ref, b4_ref, o_ref):
    # x_ref: (tile_n, 65) bf16.  Elementwise math in f32 (v5e has no bf16 VPU).
    h = jnp.dot(x_ref[...], w0_ref[...], preferred_element_type=jnp.float32)
    h = jnp.maximum(h + bh_ref[0:1, :], 0.0)
    for l in range(N_LAYERS - 1):          # 3 hidden layers, statically unrolled
        h = jnp.dot(h.astype(jnp.bfloat16), wh_ref[l],
                    preferred_element_type=jnp.float32)
        h = jnp.maximum(h + bh_ref[l + 1:l + 2, :], 0.0)
    out = jnp.dot(h.astype(jnp.bfloat16), w4_ref[...],
                  preferred_element_type=jnp.float32) + b4_ref[...]
    if SQUEEZE_OUT:
        out = jax.nn.sigmoid(out)          # padded lanes -> sigmoid(0); sliced off by wrapper
    o_ref[...] = out.astype(o_ref.dtype)   # full 128-lane (unmasked) store


def rendering_network_forward(points, normals, view_dirs, feature_vectors,
                              params, *, tile_n=512):
    # --- XLA-side glue: view-dir positional embedding + concat (mode == 'idr').
    # TODO(synk): fuse the sin/cos embedding + concat into the kernel once Mosaic
    # exposes a reliable in-kernel trig lowering; until then x is fed in bf16 to
    # halve the materialised HBM traffic.
    view_emb = embed_view(view_dirs, MULTIRES_VIEW)
    x = jnp.concatenate([points, view_emb, normals, feature_vectors],
                        axis=-1).astype(jnp.float32)
    n, d0 = x.shape
    assert d0 == DIMS[0], (d0, DIMS[0])
    assert tile_n % 8 == 0, tile_n

    # Remainder handling: zero-pad the batch up to a multiple of tile_n.
    n_pad = int(pl.cdiv(n, tile_n)) * tile_n
    if n_pad != n:
        x = jnp.pad(x, ((0, n_pad - n), (0, 0)))
    x = x.astype(jnp.bfloat16)             # MXU-native operands, half the bytes

    w0, wh, bh, w4p, b4p = pack_params(params)

    def const_spec(a):                     # full array, resident across grid steps
        return pl.BlockSpec(a.shape, lambda i, _nd=a.ndim: (0,) * _nd)

    out = pl.pallas_call(
        mlp_kernel,
        out_shape=jax.ShapeDtypeStruct((n_pad, OUT_PAD), jnp.float32),
        grid=(n_pad // tile_n,),
        in_specs=[pl.BlockSpec((tile_n, d0), lambda i: (i, 0)),
                  const_spec(w0), const_spec(wh), const_spec(bh),
                  const_spec(w4p), const_spec(b4p)],
        # Lane-dense padded output block (tile_n, 128) -> unmasked stores.
        out_specs=pl.BlockSpec((tile_n, OUT_PAD), lambda i: (i, 0)),
        compiler_params=pltpu.CompilerParams(
            dimension_semantics=("parallel",)),   # megacore / v7x 2-TC sharding
    )(x, w0, wh, bh, w4p, b4p)
    return out[:n, :D_OUT]


# ----------------------------------------------------------------------------
# Pure-JAX reference (mirrors the PyTorch forward exactly, full f32).
# ----------------------------------------------------------------------------
def reference_forward(points, normals, view_dirs, feature_vectors, params):
    view_emb = embed_view(view_dirs, MULTIRES_VIEW)
    x = jnp.concatenate([points, view_emb, normals, feature_vectors], axis=-1)
    x = x.astype(jnp.float32)
    for l, (w, b) in enumerate(params):
        x = x @ w + b
        if l < NUM_LAYERS - 2:
            x = jnp.maximum(x, 0.0)
    if SQUEEZE_OUT:
        x = jax.nn.sigmoid(x)
    return x


if __name__ == "__main__":
    key = jax.random.PRNGKey(0)
    kp, kn, kv, kf, kw = jax.random.split(key, 5)

    N = 1000  # deliberately NOT a multiple of tile_n, to exercise remainder padding
    points = jax.random.normal(kp, (N, 3), jnp.float32)
    normals = jax.random.normal(kn, (N, 3), jnp.float32)
    view_dirs = jax.random.normal(kv, (N, 3), jnp.float32)
    view_dirs = view_dirs / (jnp.linalg.norm(view_dirs, axis=-1, keepdims=True) + 1e-8)
    feature_vectors = jax.random.normal(kf, (N, D_FEATURE), jnp.float32)

    params = init_params(kw)

    out = rendering_network_forward(points, normals, view_dirs,
                                    feature_vectors, params, tile_n=512)
    out = jax.block_until_ready(out)

    ref = reference_forward(points, normals, view_dirs, feature_vectors, params)
    assert out.shape == (N, D_OUT), out.shape
    max_err = float(jnp.max(jnp.abs(out - ref)))
    # bf16 operand rounding (f32 accumulation) vs. the pure-f32 reference:
    # post-sigmoid error stays well below 1e-2.
    assert max_err < 1e-2, max_err

    print("KERNEL_OK")
</pallas_src>

<mosaic_0001>
module attributes {stable_mosaic.version = 11 : i64} {
  func.func @mlp_kernel(%arg0: i32, %arg1: memref<512x65xbf16, #tpu.memory_space<vmem>>, %arg2: memref<65x32xbf16, #tpu.memory_space<vmem>>, %arg3: memref<3x32x32xbf16, #tpu.memory_space<vmem>>, %arg4: memref<4x32xf32, #tpu.memory_space<vmem>>, %arg5: memref<32x128xbf16, #tpu.memory_space<vmem>>, %arg6: memref<1x128xf32, #tpu.memory_space<vmem>>, %arg7: memref<512x128xf32, #tpu.memory_space<vmem>>) attributes {dimension_semantics = [#tpu.dimension_semantics<parallel>], iteration_bounds = array<i64: 2>, scalar_prefetch = 0 : i64, scratch_operands = 0 : i64, tpu.core_type = #tpu.core_type<tc>, window_params = [{transform_indices = @transform_0, window_bounds = array<i64: 512, 65>}, {pipeline_mode = #tpu.pipeline_mode<synchronous>, transform_indices = @transform_1, window_bounds = array<i64: 65, 32>}, {pipeline_mode = #tpu.pipeline_mode<synchronous>, transform_indices = @transform_2, window_bounds = array<i64: 3, 32, 32>}, {pipeline_mode = #tpu.pipeline_mode<synchronous>, transform_indices = @transform_3, window_bounds = array<i64: 4, 32>}, {pipeline_mode = #tpu.pipeline_mode<synchronous>, transform_indices = @transform_4, window_bounds = array<i64: 32, 128>}, {pipeline_mode = #tpu.pipeline_mode<synchronous>, transform_indices = @transform_5, window_bounds = array<i64: 1, 128>}, {transform_indices = @transform_6, window_bounds = array<i64: 512, 128>}]} {
    %c0 = arith.constant 0 : index
    %c0_0 = arith.constant 0 : index
    %0 = vector.load %arg1[%c0, %c0_0] : memref<512x65xbf16, #tpu.memory_space<vmem>>, vector<512x65xbf16>
    %c0_1 = arith.constant 0 : index
    %c0_2 = arith.constant 0 : index
    %1 = vector.load %arg2[%c0_1, %c0_2] : memref<65x32xbf16, #tpu.memory_space<vmem>>, vector<65x32xbf16>
    %cst = arith.constant dense<0.000000e+00> : vector<512x32xf32>
    %2 = tpu.matmul %0, %1, %cst {dimension_numbers = #tpu.dot_dimension_numbers<[1], [0], [0], [1], [0, 0, 1, 1], [], []>} : vector<512x65xbf16>, vector<65x32xbf16>, vector<512x32xf32> -> vector<512x32xf32>
    %c0_3 = arith.constant 0 : index
    %c0_4 = arith.constant 0 : index
    %3 = vector.load %arg4[%c0_3, %c0_4] : memref<4x32xf32, #tpu.memory_space<vmem>>, vector<1x32xf32>
    %4 = vector.broadcast %3 : vector<1x32xf32> to vector<512x32xf32>
    %5 = arith.addf %2, %4 : vector<512x32xf32>
    %cst_5 = arith.constant 0.000000e+00 : f32
    %6 = vector.broadcast %cst_5 : f32 to vector<512x32xf32>
    %7 = arith.maximumf %5, %6 : vector<512x32xf32>
    %8 = arith.truncf %7 : vector<512x32xf32> to vector<512x32xbf16>
    %c0_6 = arith.constant 0 : index
    %c0_7 = arith.constant 0 : index
    %c0_8 = arith.constant 0 : index
    %9 = vector.load %arg3[%c0_6, %c0_7, %c0_8] : memref<3x32x32xbf16, #tpu.memory_space<vmem>>, vector<1x32x32xbf16>
    %10 = vector.shape_cast %9 : vector<1x32x32xbf16> to vector<32x32xbf16>
    %cst_9 = arith.constant dense<0.000000e+00> : vector<512x32xf32>
    %11 = tpu.matmul %8, %10, %cst_9 {dimension_numbers = #tpu.dot_dimension_numbers<[1], [0], [0], [1], [0, 0, 1, 1], [], []>} : vector<512x32xbf16>, vector<32x32xbf16>, vector<512x32xf32> -> vector<512x32xf32>
    %c1 = arith.constant 1 : index
    %c0_10 = arith.constant 0 : index
    %12 = vector.load %arg4[%c1, %c0_10] : memref<4x32xf32, #tpu.memory_space<vmem>>, vector<1x32xf32>
    %13 = vector.broadcast %12 : vector<1x32xf32> to vector<512x32xf32>
    %14 = arith.addf %11, %13 : vector<512x32xf32>
    %cst_11 = arith.constant 0.000000e+00 : f32
    %15 = vector.broadcast %cst_11 : f32 to vector<512x32xf32>
    %16 = arith.maximumf %14, %15 : vector<512x32xf32>
    %17 = arith.truncf %16 : vector<512x32xf32> to vector<512x32xbf16>
    %c1_12 = arith.constant 1 : index
    %c0_13 = arith.constant 0 : index
    %c0_14 = arith.constant 0 : index
    %18 = vector.load %arg3[%c1_12, %c0_13, %c0_14] : memref<3x32x32xbf16, #tpu.memory_space<vmem>>, vector<1x32x32xbf16>
    %19 = vector.shape_cast %18 : vector<1x32x32xbf16> to vector<32x32xbf16>
    %cst_15 = arith.constant dense<0.000000e+00> : vector<512x32xf32>
    %20 = tpu.matmul %17, %19, %cst_15 {dimension_numbers = #tpu.dot_dimension_numbers<[1], [0], [0], [1], [0, 0, 1, 1], [], []>} : vector<512x32xbf16>, vector<32x32xbf16>, vector<512x32xf32> -> vector<512x32xf32>
    %c2 = arith.constant 2 : index
    %c0_16 = arith.constant 0 : index
    %21 = vector.load %arg4[%c2, %c0_16] : memref<4x32xf32, #tpu.memory_space<vmem>>, vector<1x32xf32>
    %22 = vector.broadcast %21 : vector<1x32xf32> to vector<512x32xf32>
    %23 = arith.addf %20, %22 : vector<512x32xf32>
    %cst_17 = arith.constant 0.000000e+00 : f32
    %24 = vector.broadcast %cst_17 : f32 to vector<512x32xf32>
    %25 = arith.maximumf %23, %24 : vector<512x32xf32>
    %26 = arith.truncf %25 : vector<512x32xf32> to vector<512x32xbf16>
    %c2_18 = arith.constant 2 : index
    %c0_19 = arith.constant 0 : index
    %c0_20 = arith.constant 0 : index
    %27 = vector.load %arg3[%c2_18, %c0_19, %c0_20] : memref<3x32x32xbf16, #tpu.memory_space<vmem>>, vector<1x32x32xbf16>
    %28 = vector.shape_cast %27 : vector<1x32x32xbf16> to vector<32x32xbf16>
    %cst_21 = arith.constant dense<0.000000e+00> : vector<512x32xf32>
    %29 = tpu.matmul %26, %28, %cst_21 {dimension_numbers = #tpu.dot_dimension_numbers<[1], [0], [0], [1], [0, 0, 1, 1], [], []>} : vector<512x32xbf16>, vector<32x32xbf16>, vector<512x32xf32> -> vector<512x32xf32>
    %c3 = arith.constant 3 : index
    %c0_22 = arith.constant 0 : index
    %30 = vector.load %arg4[%c3, %c0_22] : memref<4x32xf32, #tpu.memory_space<vmem>>, vector<1x32xf32>
    %31 = vector.broadcast %30 : vector<1x32xf32> to vector<512x32xf32>
    %32 = arith.addf %29, %31 : vector<512x32xf32>
    %cst_23 = arith.constant 0.000000e+00 : f32
    %33 = vector.broadcast %cst_23 : f32 to vector<512x32xf32>
    %34 = arith.maximumf %32, %33 : vector<512x32xf32>
    %35 = arith.truncf %34 : vector<512x32xf32> to vector<512x32xbf16>
    %c0_24 = arith.constant 0 : index
    %c0_25 = arith.constant 0 : index
    %36 = vector.load %arg5[%c0_24, %c0_25] : memref<32x128xbf16, #tpu.memory_space<vmem>>, vector<32x128xbf16>
    %cst_26 = arith.constant dense<0.000000e+00> : vector<512x128xf32>
    %37 = tpu.matmul %35, %36, %cst_26 {dimension_numbers = #tpu.dot_dimension_numbers<[1], [0], [0], [1], [0, 0, 1, 1], [], []>} : vector<512x32xbf16>, vector<32x128xbf16>, vector<512x128xf32> -> vector<512x128xf32>
    %c0_27 = arith.constant 0 : index
    %c0_28 = arith.constant 0 : index
    %38 = vector.load %arg6[%c0_27, %c0_28] : memref<1x128xf32, #tpu.memory_space<vmem>>, vector<1x128xf32>
    %39 = vector.broadcast %38 : vector<1x128xf32> to vector<512x128xf32>
    %40 = arith.addf %37, %39 : vector<512x128xf32>
    %41 = arith.negf %40 : vector<512x128xf32>
    %42 = math.exp %41 : vector<512x128xf32>
    %cst_29 = arith.constant 1.000000e+00 : f32
    %43 = vector.broadcast %cst_29 : f32 to vector<512x128xf32>
    %44 = arith.addf %43, %42 : vector<512x128xf32>
    %45 = arith.divf %43, %44 : vector<512x128xf32>
    %c0_30 = arith.constant 0 : index
    %c0_31 = arith.constant 0 : index
    %46 = vector.load %arg7[%c0_30, %c0_31] : memref<512x128xf32, #tpu.memory_space<vmem>>, vector<512x128xf32>
    tpu.vector_store %arg7[%c0_30, %c0_31], %45 {strides = array<i32>} : memref<512x128xf32, #tpu.memory_space<vmem>>, vector<512x128xf32>,
    return
  }
  func.func @transform_0(%arg0: i32) -> (i32, i32) {
    %c0_i32 = arith.constant 0 : i32
    %c0_i32_0 = arith.constant 0 : i32
    return %arg0, %c0_i32 : i32, i32
  }
  func.func @transform_1(%arg0: i32) -> (i32, i32) {
    %c0_i32 = arith.constant 0 : i32
    %c0_i32_0 = arith.constant 0 : i32
    %c0_i32_1 = arith.constant 0 : i32
    return %c0_i32, %c0_i32_0 : i32, i32
  }
  func.func @transform_2(%arg0: i32) -> (i32, i32, i32) {
    %c0_i32 = arith.constant 0 : i32
    %c0_i32_0 = arith.constant 0 : i32
    %c0_i32_1 = arith.constant 0 : i32
    %c0_i32_2 = arith.constant 0 : i32
    return %c0_i32, %c0_i32_0, %c0_i32_1 : i32, i32, i32
  }
  func.func @transform_3(%arg0: i32) -> (i32, i32) {
    %c0_i32 = arith.constant 0 : i32
    %c0_i32_0 = arith.constant 0 : i32
    %c0_i32_1 = arith.constant 0 : i32
    return %c0_i32, %c0_i32_0 : i32, i32
  }
  func.func @transform_4(%arg0: i32) -> (i32, i32) {
    %c0_i32 = arith.constant 0 : i32
    %c0_i32_0 = arith.constant 0 : i32
    %c0_i32_1 = arith.constant 0 : i32
    return %c0_i32, %c0_i32_0 : i32, i32
  }
  func.func @transform_5(%arg0: i32) -> (i32, i32) {
    %c0_i32 = arith.constant 0 : i32
    %c0_i32_0 = arith.constant 0 : i32
    %c0_i32_1 = arith.constant 0 : i32
    return %c0_i32, %c0_i32_0 : i32, i32
  }
  func.func @transform_6(%arg0: i32) -> (i32, i32) {
    %c0_i32 = arith.constant 0 : i32
    %c0_i32_0 = arith.constant 0 : i32
    return %arg0, %c0_i32 : i32, i32
  }
}

</mosaic_0001>

<llo_original>
// kernel: tpu_custom_call.1
$region0: #{tpu_custom_call.1}
  #allocation0 [shape = 'u32[]', space=smem, size = 0x4, offset = 0x4, fixed_abs, tag = 'smem constant byte address 0x4 - core index']
  #allocation1 [shape = 'u32[144,128]{1,0:T(1,128)}', space=vmem, size = 0x12000, scoped, tag = 'internal scratch']
  %s0 = inlined_call_operand.vmem [shape: bf16[1024,65], index: 0, kind: input, shape index: {}]
  %s1 = inlined_call_operand.vmem [shape: bf16[65,32], index: 1, kind: input, shape index: {}]
  %s2 = inlined_call_operand.vmem [shape: bf16[3,32,32], index: 2, kind: input, shape index: {}]
  %s3 = inlined_call_operand.vmem [shape: f32[4,32], index: 3, kind: input, shape index: {}]
  %s4 = inlined_call_operand.vmem [shape: bf16[32,128], index: 4, kind: input, shape index: {}]
  %s5 = inlined_call_operand.vmem [shape: f32[1,128], index: 5, kind: input, shape index: {}]
  %s6 = inlined_call_operand.hbm [shape: f32[1024,128], index: 6, kind: output, shape index: {}]
  %s7 = sld [smem:[#allocation0]]
  $region57: #{tpu_custom_call.1} parent=0
    _
  %s9 = ssub.s32 1, %s7
  %s10 = scalar_select 0, %s9, %s7
  $region1: #{tpu_custom_call.1} parent=0
    #allocation2 [shape = 'u8[524288]{0}', space=vmem, size = 0x80000, scoped, tag = 'output window, operand 0']
    #allocation3 [shape = 's32[2]{0}', space=sflag, size = 0x8, scoped, tag = 'scoped memory for tpu_custom_call.1']
    %11 = vsyncpa [#allocation3], 0
    %s12 = scalar_lea.sflag [#allocation3], 1
    %13 = vsyncpa %s12, 0
    loop: start=0, step=1, limit=4
    $region2: #{tpu_custom_call.1} parent=1 // loop_pre_header
      _
    $region3: #{tpu_custom_call.1} parent=1 // loop_header
      %s15 = sphi 0, %s19
      %p16 = scmp.ge.s32.totalorder %s15, 4
      %s25 = sphi 0, %s27
      %s28 = sphi 0, %s25
      %s29 = sphi 0, %s28
      %s45 = sphi 0, %s29
      %s49 = sphi 0, %s49
      %s51 = sphi 0, %s49
      %s52 = sphi 0, %s51
      %s66 = sphi 0, %s52
      %s70 = sphi 0, %s70
      %s72 = sphi 0, %s70
      %s73 = sphi 0, %s72
      %s87 = sphi 0, %s73
      %s91 = sphi 0, %s91
      %s93 = sphi 0, %s91
      %s94 = sphi 0, %s93
      %s108 = sphi 0, %s94
      %s112 = sphi 0, %s112
      %s114 = sphi 0, %s112
      %s115 = sphi 0, %s114
      %s129 = sphi 0, %s115
      %s133 = sphi 0, %s133
      %s135 = sphi 0, %s133
      %s136 = sphi 0, %s135
      %s150 = sphi 0, %s136
      %s156 = sphi 0, %s158
      %s159 = sphi 0, %s156
      %s160 = sphi 0, %s159
      %s176 = sphi 0, %s160
    $region4: #{tpu_custom_call.1} parent=1 // loop_header_branch
      %18 = sbr.rel (%p16) target = $region8
    $region5: #{tpu_custom_call.1} parent=1 // loop_body
      %s20 = ssub.s32 %s15, 1
      %s21 = ssub.s32 %s15, 2
      %s22 = sadd.s32 %s15, 1
      %s23 = ssub.s32 %s15, %s22
      %p24 = scmp.eq.s32.totalorder %s23, 0
      %s26 = sadd.s32 %s25, 1
      %s27 = scalar_select %p24, %s25, %s26
      %p30 = pneg %p24
      %p31 = scmp.eq.s32.totalorder %s15, 1
      %p32 = por %p30, %p31
      %p33 = scmp.ne.s32.totalorder %s25, %s28
      %p34 = scmp.eq.s32.totalorder %s15, 0
      %p35 = por %p33, %p34
      %p36 = scmp.ne.s32.totalorder %s25, %s28
      %p37 = scmp.eq.s32.totalorder %s20, 1
      %p38 = por %p36, %p37
      %p39 = scmp.ne.s32.totalorder %s28, %s29
      %p40 = scmp.eq.s32.totalorder %s20, 0
      %p41 = por %p39, %p40
      %p42 = scmp.ne.s32.totalorder %s28, %s29
      %p43 = scmp.eq.s32.totalorder %s21, 1
      %p44 = por %p42, %p43
      %p46 = scmp.ne.s32.totalorder %s29, %s45
      %p47 = scmp.eq.s32.totalorder %s21, 0
      %p48 = por %p46, %p47
      %s50 = sadd.s32 %s49, 1
      %p53 = scmp.eq.s32.totalorder %s15, 1
      %p54 = scmp.ne.s32.totalorder %s49, %s51
      %p55 = scmp.eq.s32.totalorder %s15, 0
      %p56 = por %p54, %p55
      %p57 = scmp.ne.s32.totalorder %s49, %s51
      %p58 = scmp.eq.s32.totalorder %s20, 1
      %p59 = por %p57, %p58
      %p60 = scmp.ne.s32.totalorder %s51, %s52
      %p61 = scmp.eq.s32.totalorder %s20, 0
      %p62 = por %p60, %p61
      %p63 = scmp.ne.s32.totalorder %s51, %s52
      %p64 = scmp.eq.s32.totalorder %s21, 1
      %p65 = por %p63, %p64
      %p67 = scmp.ne.s32.totalorder %s52, %s66
      %p68 = scmp.eq.s32.totalorder %s21, 0
      %p69 = por %p67, %p68
      %s71 = sadd.s32 %s70, 1
      %p74 = scmp.eq.s32.totalorder %s15, 1
      %p75 = scmp.ne.s32.totalorder %s70, %s72
      %p76 = scmp.eq.s32.totalorder %s15, 0
      %p77 = por %p75, %p76
      %p78 = scmp.ne.s32.totalorder %s70, %s72
      %p79 = scmp.eq.s32.totalorder %s20, 1
      %p80 = por %p78, %p79
      %p81 = scmp.ne.s32.totalorder %s72, %s73
      %p82 = scmp.eq.s32.totalorder %s20, 0
      %p83 = por %p81, %p82
      %p84 = scmp.ne.s32.totalorder %s72, %s73
      %p85 = scmp.eq.s32.totalorder %s21, 1
      %p86 = por %p84, %p85
      %p88 = scmp.ne.s32.totalorder %s73, %s87
      %p89 = scmp.eq.s32.totalorder %s21, 0
      %p90 = por %p88, %p89
      %s92 = sadd.s32 %s91, 1
      %p95 = scmp.eq.s32.totalorder %s15, 1
      %p96 = scmp.ne.s32.totalorder %s91, %s93
      %p97 = scmp.eq.s32.totalorder %s15, 0
      %p98 = por %p96, %p97
      %p99 = scmp.ne.s32.totalorder %s91, %s93
      %p100 = scmp.eq.s32.totalorder %s20, 1
      %p101 = por %p99, %p100
      %p102 = scmp.ne.s32.totalorder %s93, %s94
      %p103 = scmp.eq.s32.totalorder %s20, 0
      %p104 = por %p102, %p103
      %p105 = scmp.ne.s32.totalorder %s93, %s94
      %p106 = scmp.eq.s32.totalorder %s21, 1
      %p107 = por %p105, %p106
      %p109 = scmp.ne.s32.totalorder %s94, %s108
      %p110 = scmp.eq.s32.totalorder %s21, 0
      %p111 = por %p109, %p110
      %s113 = sadd.s32 %s112, 1
      %p116 = scmp.eq.s32.totalorder %s15, 1
      %p117 = scmp.ne.s32.totalorder %s112, %s114
      %p118 = scmp.eq.s32.totalorder %s15, 0
      %p119 = por %p117, %p118
      %p120 = scmp.ne.s32.totalorder %s112, %s114
      %p121 = scmp.eq.s32.totalorder %s20, 1
      %p122 = por %p120, %p121
      %p123 = scmp.ne.s32.totalorder %s114, %s115
      %p124 = scmp.eq.s32.totalorder %s20, 0
      %p125 = por %p123, %p124
      %p126 = scmp.ne.s32.totalorder %s114, %s115
      %p127 = scmp.eq.s32.totalorder %s21, 1
      %p128 = por %p126, %p127
      %p130 = scmp.ne.s32.totalorder %s115, %s129
      %p131 = scmp.eq.s32.totalorder %s21, 0
      %p132 = por %p130, %p131
      %s134 = sadd.s32 %s133, 1
      %p137 = scmp.eq.s32.totalorder %s15, 1
      %p138 = scmp.ne.s32.totalorder %s133, %s135
      %p139 = scmp.eq.s32.totalorder %s15, 0
      %p140 = por %p138, %p139
      %p141 = scmp.ne.s32.totalorder %s133, %s135
      %p142 = scmp.eq.s32.totalorder %s20, 1
      %p143 = por %p141, %p142
      %p144 = scmp.ne.s32.totalorder %s135, %s136
      %p145 = scmp.eq.s32.totalorder %s20, 0
      %p146 = por %p144, %p145
      %p147 = scmp.ne.s32.totalorder %s135, %s136
      %p148 = scmp.eq.s32.totalorder %s21, 1
      %p149 = por %p147, %p148
      %p151 = scmp.ne.s32.totalorder %s136, %s150
      %p152 = scmp.eq.s32.totalorder %s21, 0
      %p153 = por %p151, %p152
      %s154 = ssub.s32 %s15, %s22
      %p155 = scmp.eq.s32.totalorder %s154, 0
      %s157 = sadd.s32 %s156, 1
      %s158 = scalar_select %p155, %s156, %s157
      %p161 = pneg %p155
      %p162 = scmp.eq.s32.totalorder %s15, 1
      %p163 = por %p161, %p162
      %p164 = scmp.ne.s32.totalorder %s156, %s159
      %p165 = scmp.eq.s32.totalorder %s15, 0
      %p166 = por %p164, %p165
      %p167 = scmp.ne.s32.totalorder %s156, %s159
      %p168 = scmp.eq.s32.totalorder %s20, 1
      %p169 = por %p167, %p168
      %p170 = scmp.ne.s32.totalorder %s159, %s160
      %p171 = scmp.eq.s32.totalorder %s20, 0
      %p172 = por %p170, %p171
      %p173 = scmp.ne.s32.totalorder %s159, %s160
      %p174 = scmp.eq.s32.totalorder %s21, 1
      %p175 = por %p173, %p174
      %p177 = scmp.ne.s32.totalorder %s160, %s176
      %p178 = scmp.eq.s32.totalorder %s21, 0
      %p179 = por %p177, %p178
      %p180 = scmp.le.s32.totalorder 1, %s15
      %p181 = scmp.lt.s32.totalorder %s15, 3
      %p182 = pnand %p180, %p181
      %p183 = pneg %p182
      // Predicated region
      $region9: #{tpu_custom_call.1} parent=5 // pred_check
        _
      $region10: #{tpu_custom_call.1} parent=5 // pred_check_branch
        %185 = sbr.rel (%p182) target = $region12
      $region11: #{tpu_custom_call.1} parent=5 // pred_region
        %s186 = ssub.s32 %s15, 1
        // Predicated region
        $region13: #{tpu_custom_call.1} parent=11 // pred_check
          %p187 = pneg %p62
        $region14: #{tpu_custom_call.1} parent=11 // pred_check_branch
          %189 = sbr.rel (%p187) target = $region16
        $region15: #{tpu_custom_call.1} parent=11 // pred_region
          _
        $region16: #{tpu_custom_call.1} parent=11 // pred_fallthru
          _
        // Predicated region
        $region17: #{tpu_custom_call.1} parent=11 // pred_check
          %p190 = pneg %p83
        $region18: #{tpu_custom_call.1} parent=11 // pred_check_branch
          %192 = sbr.rel (%p190) target = $region20
        $region19: #{tpu_custom_call.1} parent=11 // pred_region
          _
        $region20: #{tpu_custom_call.1} parent=11 // pred_fallthru
          _
        // Predicated region
        $region21: #{tpu_custom_call.1} parent=11 // pred_check
          %p193 = pneg %p104
        $region22: #{tpu_custom_call.1} parent=11 // pred_check_branch
          %195 = sbr.rel (%p193) target = $region24
        $region23: #{tpu_custom_call.1} parent=11 // pred_region
          _
        $region24: #{tpu_custom_call.1} parent=11 // pred_fallthru
          _
        // Predicated region
        $region25: #{tpu_custom_call.1} parent=11 // pred_check
          %p196 = pneg %p125
        $region26: #{tpu_custom_call.1} parent=11 // pred_check_branch
          %198 = sbr.rel (%p196) target = $region28
        $region27: #{tpu_custom_call.1} parent=11 // pred_region
          _
        $region28: #{tpu_custom_call.1} parent=11 // pred_fallthru
          _
        // Predicated region
        $region29: #{tpu_custom_call.1} parent=11 // pred_check
          %p199 = pneg %p146
        $region30: #{tpu_custom_call.1} parent=11 // pred_check_branch
          %201 = sbr.rel (%p199) target = $region32
        $region31: #{tpu_custom_call.1} parent=11 // pred_region
          _
        $region32: #{tpu_custom_call.1} parent=11 // pred_fallthru
          _
      $region12: #{tpu_custom_call.1} parent=5 // pred_fallthru
        _
      %p202 = scmp.lt.s32.totalorder %s15, 2
      // Predicated region
      $region33: #{tpu_custom_call.1} parent=5 // pred_check
        %p203 = pneg %p202
      $region34: #{tpu_custom_call.1} parent=5 // pred_check_branch
        %205 = sbr.rel (%p203) target = $region36
      $region35: #{tpu_custom_call.1} parent=5 // pred_region
        // Predicated region
        $region37: #{tpu_custom_call.1} parent=35 // pred_check
          %p206 = pneg %p35
        $region38: #{tpu_custom_call.1} parent=35 // pred_check_branch
          %208 = sbr.rel (%p206) target = $region40
        $region39: #{tpu_custom_call.1} parent=35 // pred_region
          %s209 = smul.u32 64, %s15
          %p210 = scmp.lt.s32.totalorder %s209, 127
          %s211 = scalar_select %p210, %s209, 127
          %s212 = smul.addr %s211, 4
          %s213 = scalar_lea.vmem %s0, %s212
          %s214 = smul.u32 64, %s15
        $region40: #{tpu_custom_call.1} parent=35 // pred_fallthru
          _
      $region36: #{tpu_custom_call.1} parent=5 // pred_fallthru
        _
      %p215 = scmp.le.s32.totalorder 1, %s15
      %p216 = scmp.lt.s32.totalorder %s15, 3
      %p217 = pnand %p215, %p216
      %p218 = pneg %p217
      // Predicated region
      $region41: #{tpu_custom_call.1} parent=5 // pred_check
        _
      $region42: #{tpu_custom_call.1} parent=5 // pred_check_branch
        %220 = sbr.rel (%p217) target = $region44
      $region43: #{tpu_custom_call.1} parent=5 // pred_region
        %s221 = ssub.s32 %s15, 1
        %s222 = smul.u32 64, %s20
        %p223 = scmp.lt.s32.totalorder %s222, 127
        %s224 = scalar_select %p223, %s222, 127
        %s225 = smul.addr %s224, 4
        %s226 = scalar_lea.vmem %s0, %s225
        %p227 = pneg %p41
        %p228 = pneg %p38
        %p229 = pneg %p62
        %p230 = pneg %p59
        %p231 = pneg %p83
        %p232 = pneg %p80
        %p233 = pneg %p104
        %p234 = pneg %p101
        %p235 = pneg %p125
        %p236 = pneg %p122
        %p237 = pneg %p146
        %p238 = pneg %p143
        %p239 = pneg %p172
        %p240 = pneg %p169
        %s241 = sand.u32 %s159, 1
        %s242 = scalar_lea.sflag [#allocation3], %s241
        %s243 = sand.u32 %s159, 1
        %s244 = smul.addr %s243, 512
        %s245 = scalar_lea.vmem [#allocation2], %s244
        %s246 = smul.u32 64, %s20
        %p247 = scmp.lt.s32.totalorder %s246, 127
        %s248 = scalar_select %p247, %s246, 127
        %s249 = smul.addr %s248, 4
        %s250 = scalar_lea.vmem %s0, %s249
        %s251 = smul.u32 64, %s20
        %s252 = smul.u32 64, %s20
        %v254 = vld [vmem:[%s250] sm:$0xf]
        %v255 = vld [vmem:[%s250 + $0x4] sm:$0xf]
        %v256 = vld [vmem:[%s250 + $0x8] sm:$0xf]
        %v257 = vld [vmem:[%s250 + $0xc] sm:$0xf]
        %v258 = vld [vmem:[%s250 + $0x10] sm:$0xf]
        %v259 = vld [vmem:[%s250 + $0x14] sm:$0xf]
        %v260 = vld [vmem:[%s250 + $0x18] sm:$0xf]
        %v261 = vld [vmem:[%s250 + $0x1c] sm:$0xf]
        %v262 = vld [vmem:[%s250 + $0x20] sm:$0xf]
        %v263 = vld [vmem:[%s250 + $0x24] sm:$0xf]
        %v264 = vld [vmem:[%s250 + $0x28] sm:$0xf]
        %v265 = vld [vmem:[%s250 + $0x2c] sm:$0xf]
        %v266 = vld [vmem:[%s250 + $0x30] sm:$0xf]
        %v267 = vld [vmem:[%s250 + $0x34] sm:$0xf]
        %v268 = vld [vmem:[%s250 + $0x38] sm:$0xf]
        %v269 = vld [vmem:[%s250 + $0x3c] sm:$0xf]
        %v270 = vld [vmem:[%s250 + $0x40] sm:$0xf]
        %v271 = vld [vmem:[%s250 + $0x44] sm:$0xf]
        %v272 = vld [vmem:[%s250 + $0x48] sm:$0xf]
        %v273 = vld [vmem:[%s250 + $0x4c] sm:$0xf]
        %v274 = vld [vmem:[%s250 + $0x50] sm:$0xf]
        %v275 = vld [vmem:[%s250 + $0x54] sm:$0xf]
        %v276 = vld [vmem:[%s250 + $0x58] sm:$0xf]
        %v277 = vld [vmem:[%s250 + $0x5c] sm:$0xf]
        %v278 = vld [vmem:[%s250 + $0x60] sm:$0xf]
        %v279 = vld [vmem:[%s250 + $0x64] sm:$0xf]
        %v280 = vld [vmem:[%s250 + $0x68] sm:$0xf]
        %v281 = vld [vmem:[%s250 + $0x6c] sm:$0xf]
        %v282 = vld [vmem:[%s250 + $0x70] sm:$0xf]
        %v283 = vld [vmem:[%s250 + $0x74] sm:$0xf]
        %v284 = vld [vmem:[%s250 + $0x78] sm:$0xf]
        %v285 = vld [vmem:[%s250 + $0x7c] sm:$0xf]
        %v286 = vld [vmem:[%s250 + $0x80] sm:$0xf]
        %v287 = vld [vmem:[%s250 + $0x84] sm:$0xf]
        %v288 = vld [vmem:[%s250 + $0x88] sm:$0xf]
        %v289 = vld [vmem:[%s250 + $0x8c] sm:$0xf]
        %v290 = vld [vmem:[%s250 + $0x90] sm:$0xf]
        %v291 = vld [vmem:[%s250 + $0x94] sm:$0xf]
        %v292 = vld [vmem:[%s250 + $0x98] sm:$0xf]
        %v293 = vld [vmem:[%s250 + $0x9c] sm:$0xf]
        %v294 = vld [vmem:[%s250 + $0xa0] sm:$0xf]
        %v295 = vld [vmem:[%s250 + $0xa4] sm:$0xf]
        %v296 = vld [vmem:[%s250 + $0xa8] sm:$0xf]
        %v297 = vld [vmem:[%s250 + $0xac] sm:$0xf]
        %v298 = vld [vmem:[%s250 + $0xb0] sm:$0xf]
        %v299 = vld [vmem:[%s250 + $0xb4] sm:$0xf]
        %v300 = vld [vmem:[%s250 + $0xb8] sm:$0xf]
        %v301 = vld [vmem:[%s250 + $0xbc] sm:$0xf]
        %v302 = vld [vmem:[%s250 + $0xc0] sm:$0xf]
        %v303 = vld [vmem:[%s250 + $0xc4] sm:$0xf]
        %v304 = vld [vmem:[%s250 + $0xc8] sm:$0xf]
        %v305 = vld [vmem:[%s250 + $0xcc] sm:$0xf]
        %v306 = vld [vmem:[%s250 + $0xd0] sm:$0xf]
        %v307 = vld [vmem:[%s250 + $0xd4] sm:$0xf]
        %v308 = vld [vmem:[%s250 + $0xd8] sm:$0xf]
        %v309 = vld [vmem:[%s250 + $0xdc] sm:$0xf]
        %v310 = vld [vmem:[%s250 + $0xe0] sm:$0xf]
        %v311 = vld [vmem:[%s250 + $0xe4] sm:$0xf]
        %v312 = vld [vmem:[%s250 + $0xe8] sm:$0xf]
        %v313 = vld [vmem:[%s250 + $0xec] sm:$0xf]
        %v314 = vld [vmem:[%s250 + $0xf0] sm:$0xf]
        %v315 = vld [vmem:[%s250 + $0xf4] sm:$0xf]
        %v316 = vld [vmem:[%s250 + $0xf8] sm:$0xf]
        %v317 = vld [vmem:[%s250 + $0xfc] sm:$0xf]
        %v318 = vld [vmem:[%s1] sm:$0xf]
        %v319 = vld [vmem:[%s1 + $0x4] sm:$0xf]
        %v320 = vld [vmem:[%s1 + $0x8] sm:$0xf]
        %v321 = vld [vmem:[%s1 + $0xc] sm:$0xf]
        %v322 = vld [vmem:[%s1 + $0x10] sm:$0xf]
        %v323 = vld [vmem:[%s1 + $0x14] sm:$0xf]
        %v324 = vld [vmem:[%s1 + $0x18] sm:$0xf]
        %v325 = vld [vmem:[%s1 + $0x1c] sm:$0xf]
        %v326 = vld [vmem:[%s1 + $0x20] sm:$0x1]
        %v327 = vld [vmem:[%s3] sm:$0x1]
        %v328 = vlaneseq
        %v329 = vshrl.u32 %v328, 7
        %v330 = vsub.s32 0, %v329
        %v331 = vrot.slane %v327, %v330
        %v396 = vunpack.c.l.b16 %v254
        %v397 = vunpack.c.l.b16 %v255
        %v398 = vunpack.c.l.b16 %v256
        %v399 = vunpack.c.l.b16 %v257
        %v400 = vunpack.c.l.b16 %v258
        %v401 = vunpack.c.l.b16 %v259
        %v402 = vunpack.c.l.b16 %v260
        %v403 = vunpack.c.l.b16 %v261
        %v404 = vunpack.c.l.b16 %v262
        %v405 = vunpack.c.l.b16 %v263
        %v406 = vunpack.c.l.b16 %v264
        %v407 = vunpack.c.l.b16 %v265
        %v408 = vunpack.c.l.b16 %v266
        %v409 = vunpack.c.l.b16 %v267
        %v410 = vunpack.c.l.b16 %v268
        %v411 = vunpack.c.l.b16 %v269
        %v412 = vunpack.c.l.b16 %v270
        %v413 = vunpack.c.l.b16 %v271
        %v414 = vunpack.c.l.b16 %v272
        %v415 = vunpack.c.l.b16 %v273
        %v416 = vunpack.c.l.b16 %v274
        %v417 = vunpack.c.l.b16 %v275
        %v418 = vunpack.c.l.b16 %v276
        %v419 = vunpack.c.l.b16 %v277
        %v420 = vunpack.c.l.b16 %v278
        %v421 = vunpack.c.l.b16 %v279
        %v422 = vunpack.c.l.b16 %v280
        %v423 = vunpack.c.l.b16 %v281
        %v424 = vunpack.c.l.b16 %v282
        %v425 = vunpack.c.l.b16 %v283
        %v426 = vunpack.c.l.b16 %v284
        %v427 = vunpack.c.l.b16 %v285
        %v428 = vunpack.c.l.b16 %v286
        %v429 = vunpack.c.l.b16 %v287
        %v430 = vunpack.c.l.b16 %v288
        %v431 = vunpack.c.l.b16 %v289
        %v432 = vunpack.c.l.b16 %v290
        %v433 = vunpack.c.l.b16 %v291
        %v434 = vunpack.c.l.b16 %v292
        %v435 = vunpack.c.l.b16 %v293
        %v436 = vunpack.c.l.b16 %v294
        %v437 = vunpack.c.l.b16 %v295
        %v438 = vunpack.c.l.b16 %v296
        %v439 = vunpack.c.l.b16 %v297
        %v440 = vunpack.c.l.b16 %v298
        %v441 = vunpack.c.l.b16 %v299
        %v442 = vunpack.c.l.b16 %v300
        %v443 = vunpack.c.l.b16 %v301
        %v444 = vunpack.c.l.b16 %v302
        %v445 = vunpack.c.l.b16 %v303
        %v446 = vunpack.c.l.b16 %v304
        %v447 = vunpack.c.l.b16 %v305
        %v448 = vunpack.c.l.b16 %v306
        %v449 = vunpack.c.l.b16 %v307
        %v450 = vunpack.c.l.b16 %v308
        %v451 = vunpack.c.l.b16 %v309
        %v452 = vunpack.c.l.b16 %v310
        %v453 = vunpack.c.l.b16 %v311
        %v454 = vunpack.c.l.b16 %v312
        %v455 = vunpack.c.l.b16 %v313
        %v456 = vunpack.c.l.b16 %v314
        %v457 = vunpack.c.l.b16 %v315
        %v458 = vunpack.c.l.b16 %v316
        %v459 = vunpack.c.l.b16 %v317
        %v460 = vpack.c.b16 %v397, %v396
        %v461 = vpack.c.b16 %v399, %v398
        %v462 = vpack.c.b16 %v401, %v400
        %v463 = vpack.c.b16 %v403, %v402
        %v464 = vpack.c.b16 %v405, %v404
        %v465 = vpack.c.b16 %v407, %v406
        %v466 = vpack.c.b16 %v409, %v408
        %v467 = vpack.c.b16 %v411, %v410
        %v468 = vpack.c.b16 %v413, %v412
        %v469 = vpack.c.b16 %v415, %v414
        %v470 = vpack.c.b16 %v417, %v416
        %v471 = vpack.c.b16 %v419, %v418
        %v472 = vpack.c.b16 %v421, %v420
        %v473 = vpack.c.b16 %v423, %v422
        %v474 = vpack.c.b16 %v425, %v424
        %v475 = vpack.c.b16 %v427, %v426
        %v476 = vpack.c.b16 %v429, %v428
        %v477 = vpack.c.b16 %v431, %v430
        %v478 = vpack.c.b16 %v433, %v432
        %v479 = vpack.c.b16 %v435, %v434
        %v480 = vpack.c.b16 %v437, %v436
        %v481 = vpack.c.b16 %v439, %v438
        %v482 = vpack.c.b16 %v441, %v440
        %v483 = vpack.c.b16 %v443, %v442
        %v484 = vpack.c.b16 %v445, %v444
        %v485 = vpack.c.b16 %v447, %v446
        %v486 = vpack.c.b16 %v449, %v448
        %v487 = vpack.c.b16 %v451, %v450
        %v488 = vpack.c.b16 %v453, %v452
        %v489 = vpack.c.b16 %v455, %v454
        %v490 = vpack.c.b16 %v457, %v456
        %v491 = vpack.c.b16 %v459, %v458
        %v501 = vunpack.c.l.b16 %v318
        %v502 = vunpack.c.l.b16 %v319
        %v503 = vunpack.c.l.b16 %v320
        %v504 = vunpack.c.l.b16 %v321
        %v505 = vunpack.c.l.b16 %v322
        %v506 = vunpack.c.l.b16 %v323
        %v507 = vunpack.c.l.b16 %v324
        %v508 = vunpack.c.l.b16 %v325
        %v509 = vunpack.c.l.b16 %v326
        %v510 = vpack.c.b16 %v502, %v501
        %v511 = vpack.c.b16 %v504, %v503
        %v512 = vpack.c.b16 %v506, %v505
        %v513 = vpack.c.b16 %v508, %v507
        %v514 = vpack.c.b16 %v509, %v509
        %vm519 = vcmask 531456
        %v521 = vsel %vm519, %v460, 0
        %v524 = vsel %vm519, %v461, 0
        %v527 = vsel %vm519, %v462, 0
        %v530 = vsel %vm519, %v463, 0
        %v533 = vsel %vm519, %v464, 0
        %v536 = vsel %vm519, %v465, 0
        %v539 = vsel %vm519, %v466, 0
        %v542 = vsel %vm519, %v467, 0
        %v545 = vsel %vm519, %v468, 0
        %v548 = vsel %vm519, %v469, 0
        %v551 = vsel %vm519, %v470, 0
        %v554 = vsel %vm519, %v471, 0
        %v557 = vsel %vm519, %v472, 0
        %v560 = vsel %vm519, %v473, 0
        %v563 = vsel %vm519, %v474, 0
        %v566 = vsel %vm519, %v475, 0
        %v569 = vsel %vm519, %v476, 0
        %v572 = vsel %vm519, %v477, 0
        %v575 = vsel %vm519, %v478, 0
        %v578 = vsel %vm519, %v479, 0
        %v581 = vsel %vm519, %v480, 0
        %v584 = vsel %vm519, %v481, 0
        %v587 = vsel %vm519, %v482, 0
        %v590 = vsel %vm519, %v483, 0
        %v593 = vsel %vm519, %v484, 0
        %v596 = vsel %vm519, %v485, 0
        %v599 = vsel %vm519, %v486, 0
        %v602 = vsel %vm519, %v487, 0
        %v605 = vsel %vm519, %v488, 0
        %v608 = vsel %vm519, %v489, 0
        %v611 = vsel %vm519, %v490, 0
        %v614 = vsel %vm519, %v491, 0
        %vm616 = vcmask 1040384
        %v617 = vsel 0, 4294967295, 65535
        %v618 = vsel %vm616, %v617, 0
        %v620 = vand.u32 %v514, %v618
        %622 = vmatprep.subr.bf16.mxu0 0
        %623 = vmatpush1.bf16.msra.mxu0 %v510
        %624 = vmatprep.subr.bf16.mxu0 0
        %625 = vmatpush1.bf16.msra.mxu0 %v511
        %626 = vmatprep.subr.bf16.mxu0 0
        %627 = vmatpush1.bf16.msra.mxu0 %v512
        %628 = vmatprep.subr.bf16.mxu0 0
        %629 = vmatpush1.bf16.msra.mxu0 %v513
        %630 = vmatprep.subr.bf16.mxu0 0
        %631 = vmatpush1.bf16.msra.mxu0 %v620
        %632 = vmatprep.subr.bf16.mxu0 0
        %633 = vmatpush1.bf16.msra.mxu0 0
        %634 = vmatprep.subr.bf16.mxu0 0
        %635 = vmatpush1.bf16.msra.mxu0 0
        %636 = vmatprep.subr.bf16.mxu0 0
        %637 = vmatpush1.bf16.msra.mxu0 0
        %638 = vmatprep.subr.bf16.mxu0 0
        %639 = vmatpush1.bf16.msra.mxu0 0
        %640 = vmatprep.subr.bf16.mxu0 0
        %641 = vmatpush1.bf16.msra.mxu0 0
        %642 = vmatprep.subr.bf16.mxu0 0
        %643 = vmatpush1.bf16.msra.mxu0 0
        %644 = vmatprep.subr.bf16.mxu0 0
        %645 = vmatpush1.bf16.msra.mxu0 0
        %646 = vmatprep.subr.bf16.mxu0 0
        %647 = vmatpush1.bf16.msra.mxu0 0
        %648 = vmatprep.subr.bf16.mxu0 0
        %649 = vmatpush1.bf16.msra.mxu0 0
        %650 = vmatprep.subr.bf16.mxu0 0
        %651 = vmatpush1.bf16.msra.mxu0 0
        %652 = vmatprep.subr.bf16.mxu0 0
        %653 = vmatpush1.bf16.msra.mxu0 0
        %654 = vmatprep.mubr.bf16.mxu0 0
        %655 = vmatmul.mubr.bf16.gmra.mrb[0].mxu0 %v521
        %v656 = vpop.f32.mrb[0].mxu0
        %v657 = vadd.f32 %v331, %v656
        %v658 = vpop.f32.mrb[0].mxu0
        %v659 = vpop.f32.mrb[0].mxu0
        %v660 = vadd.f32 %v331, %v659
        %v661 = vpop.f32.mrb[0].mxu0
        %662 = vmatprep.mubr.bf16.mxu0 0
        %663 = vmatmul.mubr.bf16.gmra.mrb[0].mxu0 %v524
        %v664 = vpop.f32.mrb[0].mxu0
        %v665 = vadd.f32 %v331, %v664
        %v666 = vpop.f32.mrb[0].mxu0
        %v667 = vpop.f32.mrb[0].mxu0
        %v668 = vadd.f32 %v331, %v667
        %v669 = vpop.f32.mrb[0].mxu0
        %670 = vmatprep.mubr.bf16.mxu0 0
        %671 = vmatmul.mubr.bf16.gmra.mrb[0].mxu0 %v527
        %v672 = vpop.f32.mrb[0].mxu0
        %v673 = vadd.f32 %v331, %v672
        %v674 = vpop.f32.mrb[0].mxu0
        %v675 = vpop.f32.mrb[0].mxu0
        %v676 = vadd.f32 %v331, %v675
        %v677 = vpop.f32.mrb[0].mxu0
        %678 = vmatprep.mubr.bf16.mxu0 0
        %679 = vmatmul.mubr.bf16.gmra.mrb[0].mxu0 %v530
        %v680 = vpop.f32.mrb[0].mxu0
        %v681 = vadd.f32 %v331, %v680
        %v682 = vpop.f32.mrb[0].mxu0
        %v683 = vpop.f32.mrb[0].mxu0
        %v684 = vadd.f32 %v331, %v683
        %v685 = vpop.f32.mrb[0].mxu0
        %686 = vmatprep.mubr.bf16.mxu0 0
        %687 = vmatmul.mubr.bf16.gmra.mrb[0].mxu0 %v533
        %v688 = vpop.f32.mrb[0].mxu0
        %v689 = vadd.f32 %v331, %v688
        %v690 = vpop.f32.mrb[0].mxu0
        %v691 = vpop.f32.mrb[0].mxu0
        %v692 = vadd.f32 %v331, %v691
        %v693 = vpop.f32.mrb[0].mxu0
        %694 = vmatprep.mubr.bf16.mxu0 0
        %695 = vmatmul.mubr.bf16.gmra.mrb[0].mxu0 %v536
        %v696 = vpop.f32.mrb[0].mxu0
        %v697 = vadd.f32 %v331, %v696
        %v698 = vpop.f32.mrb[0].mxu0
        %v699 = vpop.f32.mrb[0].mxu0
        %v700 = vadd.f32 %v331, %v699
        %v701 = vpop.f32.mrb[0].mxu0
        %702 = vmatprep.mubr.bf16.mxu0 0
        %703 = vmatmul.mubr.bf16.gmra.mrb[0].mxu0 %v539
        %v704 = vpop.f32.mrb[0].mxu0
        %v705 = vadd.f32 %v331, %v704
        %v706 = vpop.f32.mrb[0].mxu0
        %v707 = vpop.f32.mrb[0].mxu0
        %v708 = vadd.f32 %v331, %v707
        %v709 = vpop.f32.mrb[0].mxu0
        %710 = vmatprep.mubr.bf16.mxu0 0
        %711 = vmatmul.mubr.bf16.gmra.mrb[0].mxu0 %v542
        %v712 = vpop.f32.mrb[0].mxu0
        %v713 = vadd.f32 %v331, %v712
        %v714 = vpop.f32.mrb[0].mxu0
        %v715 = vpop.f32.mrb[0].mxu0
        %v716 = vadd.f32 %v331, %v715
        %v717 = vpop.f32.mrb[0].mxu0
        %718 = vmatprep.mubr.bf16.mxu0 0
        %719 = vmatmul.mubr.bf16.gmra.mrb[0].mxu0 %v545
        %v720 = vpop.f32.mrb[0].mxu0
        %v721 = vadd.f32 %v331, %v720
        %v722 = vpop.f32.mrb[0].mxu0
        %v723 = vpop.f32.mrb[0].mxu0
        %v724 = vadd.f32 %v331, %v723
        %v725 = vpop.f32.mrb[0].mxu0
        %726 = vmatprep.mubr.bf16.mxu0 0
        %727 = vmatmul.mubr.bf16.gmra.mrb[0].mxu0 %v548
        %v728 = vpop.f32.mrb[0].mxu0
        %v729 = vadd.f32 %v331, %v728
        %v730 = vpop.f32.mrb[0].mxu0
        %v731 = vpop.f32.mrb[0].mxu0
        %v732 = vadd.f32 %v331, %v731
        %v733 = vpop.f32.mrb[0].mxu0
        %734 = vmatprep.mubr.bf16.mxu0 0
        %735 = vmatmul.mubr.bf16.gmra.mrb[0].mxu0 %v551
        %v736 = vpop.f32.mrb[0].mxu0
        %v737 = vadd.f32 %v331, %v736
        %v738 = vpop.f32.mrb[0].mxu0
        %v739 = vpop.f32.mrb[0].mxu0
        %v740 = vadd.f32 %v331, %v739
        %v741 = vpop.f32.mrb[0].mxu0
        %742 = vmatprep.mubr.bf16.mxu0 0
        %743 = vmatmul.mubr.bf16.gmra.mrb[0].mxu0 %v554
        %v744 = vpop.f32.mrb[0].mxu0
        %v745 = vadd.f32 %v331, %v744
        %v746 = vpop.f32.mrb[0].mxu0
        %v747 = vpop.f32.mrb[0].mxu0
        %v748 = vadd.f32 %v331, %v747
        %v749 = vpop.f32.mrb[0].mxu0
        %750 = vmatprep.mubr.bf16.mxu0 0
        %751 = vmatmul.mubr.bf16.gmra.mrb[0].mxu0 %v557
        %v752 = vpop.f32.mrb[0].mxu0
        %v753 = vadd.f32 %v331, %v752
        %v754 = vpop.f32.mrb[0].mxu0
        %v755 = vpop.f32.mrb[0].mxu0
        %v756 = vadd.f32 %v331, %v755
        %v757 = vpop.f32.mrb[0].mxu0
        %758 = vmatprep.mubr.bf16.mxu0 0
        %759 = vmatmul.mubr.bf16.gmra.mrb[0].mxu0 %v560
        %v760 = vpop.f32.mrb[0].mxu0
        %v761 = vadd.f32 %v331, %v760
        %v762 = vpop.f32.mrb[0].mxu0
        %v763 = vpop.f32.mrb[0].mxu0
        %v764 = vadd.f32 %v331, %v763
        %v765 = vpop.f32.mrb[0].mxu0
        %766 = vmatprep.mubr.bf16.mxu0 0
        %767 = vmatmul.mubr.bf16.gmra.mrb[0].mxu0 %v563
        %v768 = vpop.f32.mrb[0].mxu0
        %v769 = vadd.f32 %v331, %v768
        %v770 = vpop.f32.mrb[0].mxu0
        %v771 = vpop.f32.mrb[0].mxu0
        %v772 = vadd.f32 %v331, %v771
        %v773 = vpop.f32.mrb[0].mxu0
        %774 = vmatprep.mubr.bf16.mxu0 0
        %775 = vmatmul.mubr.bf16.gmra.mrb[0].mxu0 %v566
        %v776 = vpop.f32.mrb[0].mxu0
        %v777 = vadd.f32 %v331, %v776
        %v778 = vpop.f32.mrb[0].mxu0
        %v779 = vpop.f32.mrb[0].mxu0
        %v780 = vadd.f32 %v331, %v779
        %v781 = vpop.f32.mrb[0].mxu0
        %782 = vmatprep.mubr.bf16.mxu0 0
        %783 = vmatmul.mubr.bf16.gmra.mrb[0].mxu0 %v569
        %v784 = vpop.f32.mrb[0].mxu0
        %v785 = vadd.f32 %v331, %v784
        %v786 = vpop.f32.mrb[0].mxu0
        %v787 = vpop.f32.mrb[0].mxu0
        %v788 = vadd.f32 %v331, %v787
        %v789 = vpop.f32.mrb[0].mxu0
        %790 = vmatprep.mubr.bf16.mxu0 0
        %791 = vmatmul.mubr.bf16.gmra.mrb[0].mxu0 %v572
        %v792 = vpop.f32.mrb[0].mxu0
        %v793 = vadd.f32 %v331, %v792
        %v794 = vpop.f32.mrb[0].mxu0
        %v795 = vpop.f32.mrb[0].mxu0
        %v796 = vadd.f32 %v331, %v795
        %v797 = vpop.f32.mrb[0].mxu0
        %798 = vmatprep.mubr.bf16.mxu0 0
        %799 = vmatmul.mubr.bf16.gmra.mrb[0].mxu0 %v575
        %v800 = vpop.f32.mrb[0].mxu0
        %v801 = vadd.f32 %v331, %v800
        %v802 = vpop.f32.mrb[0].mxu0
        %v803 = vpop.f32.mrb[0].mxu0
        %v804 = vadd.f32 %v331, %v803
        %v805 = vpop.f32.mrb[0].mxu0
        %806 = vmatprep.mubr.bf16.mxu0 0
        %807 = vmatmul.mubr.bf16.gmra.mrb[0].mxu0 %v578
        %v808 = vpop.f32.mrb[0].mxu0
        %v809 = vadd.f32 %v331, %v808
        %v810 = vpop.f32.mrb[0].mxu0
        %v811 = vpop.f32.mrb[0].mxu0
        %v812 = vadd.f32 %v331, %v811
        %v813 = vpop.f32.mrb[0].mxu0
        %814 = vmatprep.mubr.bf16.mxu0 0
        %815 = vmatmul.mubr.bf16.gmra.mrb[0].mxu0 %v581
        %v816 = vpop.f32.mrb[0].mxu0
        %v817 = vadd.f32 %v331, %v816
        %v818 = vpop.f32.mrb[0].mxu0
        %v819 = vpop.f32.mrb[0].mxu0
        %v820 = vadd.f32 %v331, %v819
        %v821 = vpop.f32.mrb[0].mxu0
        %822 = vmatprep.mubr.bf16.mxu0 0
        %823 = vmatmul.mubr.bf16.gmra.mrb[0].mxu0 %v584
        %v824 = vpop.f32.mrb[0].mxu0
        %v825 = vadd.f32 %v331, %v824
        %v826 = vpop.f32.mrb[0].mxu0
        %v827 = vpop.f32.mrb[0].mxu0
        %v828 = vadd.f32 %v331, %v827
        %v829 = vpop.f32.mrb[0].mxu0
        %830 = vmatprep.mubr.bf16.mxu0 0
        %831 = vmatmul.mubr.bf16.gmra.mrb[0].mxu0 %v587
        %v832 = vpop.f32.mrb[0].mxu0
        %v833 = vadd.f32 %v331, %v832
        %v834 = vpop.f32.mrb[0].mxu0
        %v835 = vpop.f32.mrb[0].mxu0
        %v836 = vadd.f32 %v331, %v835
        %v837 = vpop.f32.mrb[0].mxu0
        %838 = vmatprep.mubr.bf16.mxu0 0
        %839 = vmatmul.mubr.bf16.gmra.mrb[0].mxu0 %v590
        %v840 = vpop.f32.mrb[0].mxu0
        %v841 = vadd.f32 %v331, %v840
        %v842 = vpop.f32.mrb[0].mxu0
        %v843 = vpop.f32.mrb[0].mxu0
        %v844 = vadd.f32 %v331, %v843
        %v845 = vpop.f32.mrb[0].mxu0
        %846 = vmatprep.mubr.bf16.mxu0 0
        %847 = vmatmul.mubr.bf16.gmra.mrb[0].mxu0 %v593
        %v848 = vpop.f32.mrb[0].mxu0
        %v849 = vadd.f32 %v331, %v848
        %v850 = vpop.f32.mrb[0].mxu0
        %v851 = vpop.f32.mrb[0].mxu0
        %v852 = vadd.f32 %v331, %v851
        %v853 = vpop.f32.mrb[0].mxu0
        %854 = vmatprep.mubr.bf16.mxu0 0
        %855 = vmatmul.mubr.bf16.gmra.mrb[0].mxu0 %v596
        %v856 = vpop.f32.mrb[0].mxu0
        %v857 = vadd.f32 %v331, %v856
        %v858 = vpop.f32.mrb[0].mxu0
        %v859 = vpop.f32.mrb[0].mxu0
        %v860 = vadd.f32 %v331, %v859
        %v861 = vpop.f32.mrb[0].mxu0
        %862 = vmatprep.mubr.bf16.mxu0 0
        %863 = vmatmul.mubr.bf16.gmra.mrb[0].mxu0 %v599
        %v864 = vpop.f32.mrb[0].mxu0
        %v865 = vadd.f32 %v331, %v864
        %v866 = vpop.f32.mrb[0].mxu0
        %v867 = vpop.f32.mrb[0].mxu0
        %v868 = vadd.f32 %v331, %v867
        %v869 = vpop.f32.mrb[0].mxu0
        %870 = vmatprep.mubr.bf16.mxu0 0
        %871 = vmatmul.mubr.bf16.gmra.mrb[0].mxu0 %v602
        %v872 = vpop.f32.mrb[0].mxu0
        %v873 = vadd.f32 %v331, %v872
        %v874 = vpop.f32.mrb[0].mxu0
        %v875 = vpop.f32.mrb[0].mxu0
        %v876 = vadd.f32 %v331, %v875
        %v877 = vpop.f32.mrb[0].mxu0
        %878 = vmatprep.mubr.bf16.mxu0 0
        %879 = vmatmul.mubr.bf16.gmra.mrb[0].mxu0 %v605
        %v880 = vpop.f32.mrb[0].mxu0
        %v881 = vadd.f32 %v331, %v880
        %v882 = vpop.f32.mrb[0].mxu0
        %v883 = vpop.f32.mrb[0].mxu0
        %v884 = vadd.f32 %v331, %v883
        %v885 = vpop.f32.mrb[0].mxu0
        %886 = vmatprep.mubr.bf16.mxu0 0
        %887 = vmatmul.mubr.bf16.gmra.mrb[0].mxu0 %v608
        %v888 = vpop.f32.mrb[0].mxu0
        %v889 = vadd.f32 %v331, %v888
        %v890 = vpop.f32.mrb[0].mxu0
        %v891 = vpop.f32.mrb[0].mxu0
        %v892 = vadd.f32 %v331, %v891
        %v893 = vpop.f32.mrb[0].mxu0
        %894 = vmatprep.mubr.bf16.mxu0 0
        %895 = vmatmul.mubr.bf16.gmra.mrb[0].mxu0 %v611
        %v896 = vpop.f32.mrb[0].mxu0
        %v897 = vadd.f32 %v331, %v896
        %v898 = vpop.f32.mrb[0].mxu0
        %v899 = vpop.f32.mrb[0].mxu0
        %v900 = vadd.f32 %v331, %v899
        %v901 = vpop.f32.mrb[0].mxu0
        %902 = vmatprep.mubr.bf16.mxu0 0
        %903 = vmatmul.mubr.bf16.gmra.mrb[0].mxu0 %v614
        %v904 = vpop.f32.mrb[0].mxu0
        %v905 = vadd.f32 %v331, %v904
        %v906 = vpop.f32.mrb[0].mxu0
        %v907 = vpop.f32.mrb[0].mxu0
        %v908 = vadd.f32 %v331, %v907
        %v909 = vpop.f32.mrb[0].mxu0
        %910 = vdwg.mxu0
        %v911 = vmax.f32 %v657, 0.0
        %v912 = vmax.f32 %v660, 0.0
        %v913 = vmax.f32 %v665, 0.0
        %v914 = vmax.f32 %v668, 0.0
        %v915 = vmax.f32 %v673, 0.0
        %v916 = vmax.f32 %v676, 0.0
        %v917 = vmax.f32 %v681, 0.0
        %v918 = vmax.f32 %v684, 0.0
        %v919 = vmax.f32 %v689, 0.0
        %v920 = vmax.f32 %v692, 0.0
        %v921 = vmax.f32 %v697, 0.0
        %v922 = vmax.f32 %v700, 0.0
        %v923 = vmax.f32 %v705, 0.0
        %v924 = vmax.f32 %v708, 0.0
        %v925 = vmax.f32 %v713, 0.0
        %v926 = vmax.f32 %v716, 0.0
        %v927 = vmax.f32 %v721, 0.0
        %v928 = vmax.f32 %v724, 0.0
        %v929 = vmax.f32 %v729, 0.0
        %v930 = vmax.f32 %v732, 0.0
        %v931 = vmax.f32 %v737, 0.0
        %v932 = vmax.f32 %v740, 0.0
        %v933 = vmax.f32 %v745, 0.0
        %v934 = vmax.f32 %v748, 0.0
        %v935 = vmax.f32 %v753, 0.0
        %v936 = vmax.f32 %v756, 0.0
        %v937 = vmax.f32 %v761, 0.0
        %v938 = vmax.f32 %v764, 0.0
        %v939 = vmax.f32 %v769, 0.0
        %v940 = vmax.f32 %v772, 0.0
        %v941 = vmax.f32 %v777, 0.0
        %v942 = vmax.f32 %v780, 0.0
        %v943 = vmax.f32 %v785, 0.0
        %v944 = vmax.f32 %v788, 0.0
        %v945 = vmax.f32 %v793, 0.0
        %v946 = vmax.f32 %v796, 0.0
        %v947 = vmax.f32 %v801, 0.0
        %v948 = vmax.f32 %v804, 0.0
        %v949 = vmax.f32 %v809, 0.0
        %v950 = vmax.f32 %v812, 0.0
        %v951 = vmax.f32 %v817, 0.0
        %v952 = vmax.f32 %v820, 0.0
        %v953 = vmax.f32 %v825, 0.0
        %v954 = vmax.f32 %v828, 0.0
        %v955 = vmax.f32 %v833, 0.0
        %v956 = vmax.f32 %v836, 0.0
        %v957 = vmax.f32 %v841, 0.0
        %v958 = vmax.f32 %v844, 0.0
        %v959 = vmax.f32 %v849, 0.0
        %v960 = vmax.f32 %v852, 0.0
        %v961 = vmax.f32 %v857, 0.0
        %v962 = vmax.f32 %v860, 0.0
        %v963 = vmax.f32 %v865, 0.0
        %v964 = vmax.f32 %v868, 0.0
        %v965 = vmax.f32 %v873, 0.0
        %v966 = vmax.f32 %v876, 0.0
        %v967 = vmax.f32 %v881, 0.0
        %v968 = vmax.f32 %v884, 0.0
        %v969 = vmax.f32 %v889, 0.0
        %v970 = vmax.f32 %v892, 0.0
        %v971 = vmax.f32 %v897, 0.0
        %v972 = vmax.f32 %v900, 0.0
        %v973 = vmax.f32 %v905, 0.0
        %v974 = vmax.f32 %v908, 0.0
        %v975 = vpack.c.bf16 %v912, %v911
        %v976 = vpack.c.bf16 %v914, %v913
        %v977 = vpack.c.bf16 %v916, %v915
        %v978 = vpack.c.bf16 %v918, %v917
        %v979 = vpack.c.bf16 %v920, %v919
        %v980 = vpack.c.bf16 %v922, %v921
        %v981 = vpack.c.bf16 %v924, %v923
        %v982 = vpack.c.bf16 %v926, %v925
        %v983 = vpack.c.bf16 %v928, %v927
        %v984 = vpack.c.bf16 %v930, %v929
        %v985 = vpack.c.bf16 %v932, %v931
        %v986 = vpack.c.bf16 %v934, %v933
        %v987 = vpack.c.bf16 %v936, %v935
        %v988 = vpack.c.bf16 %v938, %v937
        %v989 = vpack.c.bf16 %v940, %v939
        %v990 = vpack.c.bf16 %v942, %v941
        %v991 = vpack.c.bf16 %v944, %v943
        %v992 = vpack.c.bf16 %v946, %v945
        %v993 = vpack.c.bf16 %v948, %v947
        %v994 = vpack.c.bf16 %v950, %v949
        %v995 = vpack.c.bf16 %v952, %v951
        %v996 = vpack.c.bf16 %v954, %v953
        %v997 = vpack.c.bf16 %v956, %v955
        %v998 = vpack.c.bf16 %v958, %v957
        %v999 = vpack.c.bf16 %v960, %v959
        %v1000 = vpack.c.bf16 %v962, %v961
        %v1001 = vpack.c.bf16 %v964, %v963
        %v1002 = vpack.c.bf16 %v966, %v965
        %v1003 = vpack.c.bf16 %v968, %v967
        %v1004 = vpack.c.bf16 %v970, %v969
        %v1005 = vpack.c.bf16 %v972, %v971
        %v1006 = vpack.c.bf16 %v974, %v973
        %v1007 = vld [vmem:[%s2] sm:$0xf]
        %v1008 = vld [vmem:[%s2 + $0x4] sm:$0xf]
        %v1009 = vld [vmem:[%s2 + $0x8] sm:$0xf]
        %v1010 = vld [vmem:[%s2 + $0xc] sm:$0xf]
        %v1011 = vld [vmem:[%s3 + $0x1] sm:$0x1]
        %v1012 = vlaneseq
        %v1013 = vshrl.u32 %v1012, 7
        %v1014 = vsub.s32 0, %v1013
        %v1015 = vrot.slane %v1011, %v1014
        %v1020 = vunpack.c.l.b16 %v1007
        %v1021 = vunpack.c.l.b16 %v1008
        %v1022 = vunpack.c.l.b16 %v1009
        %v1023 = vunpack.c.l.b16 %v1010
        %v1024 = vpack.c.b16 %v1021, %v1020
        %v1025 = vpack.c.b16 %v1023, %v1022
        %vm1028 = vcmask 261120
        %v1030 = vsel %vm1028, %v975, 0
        %v1033 = vsel %vm1028, %v976, 0
        %v1036 = vsel %vm1028, %v977, 0
        %v1039 = vsel %vm1028, %v978, 0
        %v1042 = vsel %vm1028, %v979, 0
        %v1045 = vsel %vm1028, %v980, 0
        %v1048 = vsel %vm1028, %v981, 0
        %v1051 = vsel %vm1028, %v982, 0
        %v1054 = vsel %vm1028, %v983, 0
        %v1057 = vsel %vm1028, %v984, 0
        %v1060 = vsel %vm1028, %v985, 0
        %v1063 = vsel %vm1028, %v986, 0
        %v1066 = vsel %vm1028, %v987, 0
        %v1069 = vsel %vm1028, %v988, 0
        %v1072 = vsel %vm1028, %v989, 0
        %v1075 = vsel %vm1028, %v990, 0
        %v1078 = vsel %vm1028, %v991, 0
        %v1081 = vsel %vm1028, %v992, 0
        %v1084 = vsel %vm1028, %v993, 0
        %v1087 = vsel %vm1028, %v994, 0
        %v1090 = vsel %vm1028, %v995, 0
        %v1093 = vsel %vm1028, %v996, 0
        %v1096 = vsel %vm1028, %v997, 0
        %v1099 = vsel %vm1028, %v998, 0
        %v1102 = vsel %vm1028, %v999, 0
        %v1105 = vsel %vm1028, %v1000, 0
        %v1108 = vsel %vm1028, %v1001, 0
        %v1111 = vsel %vm1028, %v1002, 0
        %v1114 = vsel %vm1028, %v1003, 0
        %v1117 = vsel %vm1028, %v1004, 0
        %v1120 = vsel %vm1028, %v1005, 0
        %v1123 = vsel %vm1028, %v1006, 0
        %1125 = vmatprep.subr.bf16.mxu0 0
        %1126 = vmatpush1.bf16.msra.mxu0 %v1024
        %1127 = vmatprep.subr.bf16.mxu0 0
        %1128 = vmatpush1.bf16.msra.mxu0 %v1025
        %1129 = vmatprep.subr.bf16.mxu0 0
        %1130 = vmatpush1.bf16.msra.mxu0 0
        %1131 = vmatprep.subr.bf16.mxu0 0
        %1132 = vmatpush1.bf16.msra.mxu0 0
        %1133 = vmatprep.subr.bf16.mxu0 0
        %1134 = vmatpush1.bf16.msra.mxu0 0
        %1135 = vmatprep.subr.bf16.mxu0 0
        %1136 = vmatpush1.bf16.msra.mxu0 0
        %1137 = vmatprep.subr.bf16.mxu0 0
        %1138 = vmatpush1.bf16.msra.mxu0 0
        %1139 = vmatprep.subr.bf16.mxu0 0
        %1140 = vmatpush1.bf16.msra.mxu0 0
        %1141 = vmatprep.subr.bf16.mxu0 0
        %1142 = vmatpush1.bf16.msra.mxu0 0
        %1143 = vmatprep.subr.bf16.mxu0 0
        %1144 = vmatpush1.bf16.msra.mxu0 0
        %1145 = vmatprep.subr.bf16.mxu0 0
        %1146 = vmatpush1.bf16.msra.mxu0 0
        %1147 = vmatprep.subr.bf16.mxu0 0
        %1148 = vmatpush1.bf16.msra.mxu0 0
        %1149 = vmatprep.subr.bf16.mxu0 0
        %1150 = vmatpush1.bf16.msra.mxu0 0
        %1151 = vmatprep.subr.bf16.mxu0 0
        %1152 = vmatpush1.bf16.msra.mxu0 0
        %1153 = vmatprep.subr.bf16.mxu0 0
        %1154 = vmatpush1.bf16.msra.mxu0 0
        %1155 = vmatprep.subr.bf16.mxu0 0
        %1156 = vmatpush1.bf16.msra.mxu0 0
        %1157 = vmatprep.mubr.bf16.mxu0 0
        %1158 = vmatmul.mubr.bf16.gmra.mrb[0].mxu0 %v1030
        %v1159 = vpop.f32.mrb[0].mxu0
        %v1160 = vadd.f32 %v1015, %v1159
        %v1161 = vpop.f32.mrb[0].mxu0
        %v1162 = vpop.f32.mrb[0].mxu0
        %v1163 = vadd.f32 %v1015, %v1162
        %v1164 = vpop.f32.mrb[0].mxu0
        %1165 = vmatprep.mubr.bf16.mxu0 0
        %1166 = vmatmul.mubr.bf16.gmra.mrb[0].mxu0 %v1033
        %v1167 = vpop.f32.mrb[0].mxu0
        %v1168 = vadd.f32 %v1015, %v1167
        %v1169 = vpop.f32.mrb[0].mxu0
        %v1170 = vpop.f32.mrb[0].mxu0
        %v1171 = vadd.f32 %v1015, %v1170
        %v1172 = vpop.f32.mrb[0].mxu0
        %1173 = vmatprep.mubr.bf16.mxu0 0
        %1174 = vmatmul.mubr.bf16.gmra.mrb[0].mxu0 %v1036
        %v1175 = vpop.f32.mrb[0].mxu0
        %v1176 = vadd.f32 %v1015, %v1175
        %v1177 = vpop.f32.mrb[0].mxu0
        %v1178 = vpop.f32.mrb[0].mxu0
        %v1179 = vadd.f32 %v1015, %v1178
        %v1180 = vpop.f32.mrb[0].mxu0
        %1181 = vmatprep.mubr.bf16.mxu0 0
        %1182 = vmatmul.mubr.bf16.gmra.mrb[0].mxu0 %v1039
        %v1183 = vpop.f32.mrb[0].mxu0
        %v1184 = vadd.f32 %v1015, %v1183
        %v1185 = vpop.f32.mrb[0].mxu0
        %v1186 = vpop.f32.mrb[0].mxu0
        %v1187 = vadd.f32 %v1015, %v1186
        %v1188 = vpop.f32.mrb[0].mxu0
        %1189 = vmatprep.mubr.bf16.mxu0 0
        %1190 = vmatmul.mubr.bf16.gmra.mrb[0].mxu0 %v1042
        %v1191 = vpop.f32.mrb[0].mxu0
        %v1192 = vadd.f32 %v1015, %v1191
        %v1193 = vpop.f32.mrb[0].mxu0
        %v1194 = vpop.f32.mrb[0].mxu0
        %v1195 = vadd.f32 %v1015, %v1194
        %v1196 = vpop.f32.mrb[0].mxu0
        %1197 = vmatprep.mubr.bf16.mxu0 0
        %1198 = vmatmul.mubr.bf16.gmra.mrb[0].mxu0 %v1045
        %v1199 = vpop.f32.mrb[0].mxu0
        %v1200 = vadd.f32 %v1015, %v1199
        %v1201 = vpop.f32.mrb[0].mxu0
        %v1202 = vpop.f32.mrb[0].mxu0
        %v1203 = vadd.f32 %v1015, %v1202
        %v1204 = vpop.f32.mrb[0].mxu0
        %1205 = vmatprep.mubr.bf16.mxu0 0
        %1206 = vmatmul.mubr.bf16.gmra.mrb[0].mxu0 %v1048
        %v1207 = vpop.f32.mrb[0].mxu0
        %v1208 = vadd.f32 %v1015, %v1207
        %v1209 = vpop.f32.mrb[0].mxu0
        %v1210 = vpop.f32.mrb[0].mxu0
        %v1211 = vadd.f32 %v1015, %v1210
        %v1212 = vpop.f32.mrb[0].mxu0
        %1213 = vmatprep.mubr.bf16.mxu0 0
        %1214 = vmatmul.mubr.bf16.gmra.mrb[0].mxu0 %v1051
        %v1215 = vpop.f32.mrb[0].mxu0
        %v1216 = vadd.f32 %v1015, %v1215
        %v1217 = vpop.f32.mrb[0].mxu0
        %v1218 = vpop.f32.mrb[0].mxu0
        %v1219 = vadd.f32 %v1015, %v1218
        %v1220 = vpop.f32.mrb[0].mxu0
        %1221 = vmatprep.mubr.bf16.mxu0 0
        %1222 = vmatmul.mubr.bf16.gmra.mrb[0].mxu0 %v1054
        %v1223 = vpop.f32.mrb[0].mxu0
        %v1224 = vadd.f32 %v1015, %v1223
        %v1225 = vpop.f32.mrb[0].mxu0
        %v1226 = vpop.f32.mrb[0].mxu0
        %v1227 = vadd.f32 %v1015, %v1226
        %v1228 = vpop.f32.mrb[0].mxu0
        %1229 = vmatprep.mubr.bf16.mxu0 0
        %1230 = vmatmul.mubr.bf16.gmra.mrb[0].mxu0 %v1057
        %v1231 = vpop.f32.mrb[0].mxu0
        %v1232 = vadd.f32 %v1015, %v1231
        %v1233 = vpop.f32.mrb[0].mxu0
        %v1234 = vpop.f32.mrb[0].mxu0
        %v1235 = vadd.f32 %v1015, %v1234
        %v1236 = vpop.f32.mrb[0].mxu0
        %1237 = vmatprep.mubr.bf16.mxu0 0
        %1238 = vmatmul.mubr.bf16.gmra.mrb[0].mxu0 %v1060
        %v1239 = vpop.f32.mrb[0].mxu0
        %v1240 = vadd.f32 %v1015, %v1239
        %v1241 = vpop.f32.mrb[0].mxu0
        %v1242 = vpop.f32.mrb[0].mxu0
        %v1243 = vadd.f32 %v1015, %v1242
        %v1244 = vpop.f32.mrb[0].mxu0
        %1245 = vmatprep.mubr.bf16.mxu0 0
        %1246 = vmatmul.mubr.bf16.gmra.mrb[0].mxu0 %v1063
        %v1247 = vpop.f32.mrb[0].mxu0
        %v1248 = vadd.f32 %v1015, %v1247
        %v1249 = vpop.f32.mrb[0].mxu0
        %v1250 = vpop.f32.mrb[0].mxu0
        %v1251 = vadd.f32 %v1015, %v1250
        %v1252 = vpop.f32.mrb[0].mxu0
        %1253 = vmatprep.mubr.bf16.mxu0 0
        %1254 = vmatmul.mubr.bf16.gmra.mrb[0].mxu0 %v1066
        %v1255 = vpop.f32.mrb[0].mxu0
        %v1256 = vadd.f32 %v1015, %v1255
        %v1257 = vpop.f32.mrb[0].mxu0
        %v1258 = vpop.f32.mrb[0].mxu0
        %v1259 = vadd.f32 %v1015, %v1258
        %v1260 = vpop.f32.mrb[0].mxu0
        %1261 = vmatprep.mubr.bf16.mxu0 0
        %1262 = vmatmul.mubr.bf16.gmra.mrb[0].mxu0 %v1069
        %v1263 = vpop.f32.mrb[0].mxu0
        %v1264 = vadd.f32 %v1015, %v1263
        %v1265 = vpop.f32.mrb[0].mxu0
        %v1266 = vpop.f32.mrb[0].mxu0
        %v1267 = vadd.f32 %v1015, %v1266
        %v1268 = vpop.f32.mrb[0].mxu0
        %1269 = vmatprep.mubr.bf16.mxu0 0
        %1270 = vmatmul.mubr.bf16.gmra.mrb[0].mxu0 %v1072
        %v1271 = vpop.f32.mrb[0].mxu0
        %v1272 = vadd.f32 %v1015, %v1271
        %v1273 = vpop.f32.mrb[0].mxu0
        %v1274 = vpop.f32.mrb[0].mxu0
        %v1275 = vadd.f32 %v1015, %v1274
        %v1276 = vpop.f32.mrb[0].mxu0
        %1277 = vmatprep.mubr.bf16.mxu0 0
        %1278 = vmatmul.mubr.bf16.gmra.mrb[0].mxu0 %v1075
        %v1279 = vpop.f32.mrb[0].mxu0
        %v1280 = vadd.f32 %v1015, %v1279
        %v1281 = vpop.f32.mrb[0].mxu0
        %v1282 = vpop.f32.mrb[0].mxu0
        %v1283 = vadd.f32 %v1015, %v1282
        %v1284 = vpop.f32.mrb[0].mxu0
        %1285 = vmatprep.mubr.bf16.mxu0 0
        %1286 = vmatmul.mubr.bf16.gmra.mrb[0].mxu0 %v1078
        %v1287 = vpop.f32.mrb[0].mxu0
        %v1288 = vadd.f32 %v1015, %v1287
        %v1289 = vpop.f32.mrb[0].mxu0
        %v1290 = vpop.f32.mrb[0].mxu0
        %v1291 = vadd.f32 %v1015, %v1290
        %v1292 = vpop.f32.mrb[0].mxu0
        %1293 = vmatprep.mubr.bf16.mxu0 0
        %1294 = vmatmul.mubr.bf16.gmra.mrb[0].mxu0 %v1081
        %v1295 = vpop.f32.mrb[0].mxu0
        %v1296 = vadd.f32 %v1015, %v1295
        %v1297 = vpop.f32.mrb[0].mxu0
        %v1298 = vpop.f32.mrb[0].mxu0
        %v1299 = vadd.f32 %v1015, %v1298
        %v1300 = vpop.f32.mrb[0].mxu0
        %1301 = vmatprep.mubr.bf16.mxu0 0
        %1302 = vmatmul.mubr.bf16.gmra.mrb[0].mxu0 %v1084
        %v1303 = vpop.f32.mrb[0].mxu0
        %v1304 = vadd.f32 %v1015, %v1303
        %v1305 = vpop.f32.mrb[0].mxu0
        %v1306 = vpop.f32.mrb[0].mxu0
        %v1307 = vadd.f32 %v1015, %v1306
        %v1308 = vpop.f32.mrb[0].mxu0
        %1309 = vmatprep.mubr.bf16.mxu0 0
        %1310 = vmatmul.mubr.bf16.gmra.mrb[0].mxu0 %v1087
        %v1311 = vpop.f32.mrb[0].mxu0
        %v1312 = vadd.f32 %v1015, %v1311
        %v1313 = vpop.f32.mrb[0].mxu0
        %v1314 = vpop.f32.mrb[0].mxu0
        %v1315 = vadd.f32 %v1015, %v1314
        %v1316 = vpop.f32.mrb[0].mxu0
        %1317 = vmatprep.mubr.bf16.mxu0 0
        %1318 = vmatmul.mubr.bf16.gmra.mrb[0].mxu0 %v1090
        %v1319 = vpop.f32.mrb[0].mxu0
        %v1320 = vadd.f32 %v1015, %v1319
        %v1321 = vpop.f32.mrb[0].mxu0
        %v1322 = vpop.f32.mrb[0].mxu0
        %v1323 = vadd.f32 %v1015, %v1322
        %v1324 = vpop.f32.mrb[0].mxu0
        %1325 = vmatprep.mubr.bf16.mxu0 0
        %1326 = vmatmul.mubr.bf16.gmra.mrb[0].mxu0 %v1093
        %v1327 = vpop.f32.mrb[0].mxu0
        %v1328 = vadd.f32 %v1015, %v1327
        %v1329 = vpop.f32.mrb[0].mxu0
        %v1330 = vpop.f32.mrb[0].mxu0
        %v1331 = vadd.f32 %v1015, %v1330
        %v1332 = vpop.f32.mrb[0].mxu0
        %1333 = vmatprep.mubr.bf16.mxu0 0
        %1334 = vmatmul.mubr.bf16.gmra.mrb[0].mxu0 %v1096
        %v1335 = vpop.f32.mrb[0].mxu0
        %v1336 = vadd.f32 %v1015, %v1335
        %v1337 = vpop.f32.mrb[0].mxu0
        %v1338 = vpop.f32.mrb[0].mxu0
        %v1339 = vadd.f32 %v1015, %v1338
        %v1340 = vpop.f32.mrb[0].mxu0
        %1341 = vmatprep.mubr.bf16.mxu0 0
        %1342 = vmatmul.mubr.bf16.gmra.mrb[0].mxu0 %v1099
        %v1343 = vpop.f32.mrb[0].mxu0
        %v1344 = vadd.f32 %v1015, %v1343
        %v1345 = vpop.f32.mrb[0].mxu0
        %v1346 = vpop.f32.mrb[0].mxu0
        %v1347 = vadd.f32 %v1015, %v1346
        %v1348 = vpop.f32.mrb[0].mxu0
        %1349 = vmatprep.mubr.bf16.mxu0 0
        %1350 = vmatmul.mubr.bf16.gmra.mrb[0].mxu0 %v1102
        %v1351 = vpop.f32.mrb[0].mxu0
        %v1352 = vadd.f32 %v1015, %v1351
        %v1353 = vpop.f32.mrb[0].mxu0
        %v1354 = vpop.f32.mrb[0].mxu0
        %v1355 = vadd.f32 %v1015, %v1354
        %v1356 = vpop.f32.mrb[0].mxu0
        %1357 = vmatprep.mubr.bf16.mxu0 0
        %1358 = vmatmul.mubr.bf16.gmra.mrb[0].mxu0 %v1105
        %v1359 = vpop.f32.mrb[0].mxu0
        %v1360 = vadd.f32 %v1015, %v1359
        %v1361 = vpop.f32.mrb[0].mxu0
        %v1362 = vpop.f32.mrb[0].mxu0
        %v1363 = vadd.f32 %v1015, %v1362
        %v1364 = vpop.f32.mrb[0].mxu0
        %1365 = vmatprep.mubr.bf16.mxu0 0
        %1366 = vmatmul.mubr.bf16.gmra.mrb[0].mxu0 %v1108
        %v1367 = vpop.f32.mrb[0].mxu0
        %v1368 = vadd.f32 %v1015, %v1367
        %v1369 = vpop.f32.mrb[0].mxu0
        %v1370 = vpop.f32.mrb[0].mxu0
        %v1371 = vadd.f32 %v1015, %v1370
        %v1372 = vpop.f32.mrb[0].mxu0
        %1373 = vmatprep.mubr.bf16.mxu0 0
        %1374 = vmatmul.mubr.bf16.gmra.mrb[0].mxu0 %v1111
        %v1375 = vpop.f32.mrb[0].mxu0
        %v1376 = vadd.f32 %v1015, %v1375
        %v1377 = vpop.f32.mrb[0].mxu0
        %v1378 = vpop.f32.mrb[0].mxu0
        %v1379 = vadd.f32 %v1015, %v1378
        %v1380 = vpop.f32.mrb[0].mxu0
        %1381 = vmatprep.mubr.bf16.mxu0 0
        %1382 = vmatmul.mubr.bf16.gmra.mrb[0].mxu0 %v1114
        %v1383 = vpop.f32.mrb[0].mxu0
        %v1384 = vadd.f32 %v1015, %v1383
        %v1385 = vpop.f32.mrb[0].mxu0
        %v1386 = vpop.f32.mrb[0].mxu0
        %v1387 = vadd.f32 %v1015, %v1386
        %v1388 = vpop.f32.mrb[0].mxu0
        %1389 = vmatprep.mubr.bf16.mxu0 0
        %1390 = vmatmul.mubr.bf16.gmra.mrb[0].mxu0 %v1117
        %v1391 = vpop.f32.mrb[0].mxu0
        %v1392 = vadd.f32 %v1015, %v1391
        %v1393 = vpop.f32.mrb[0].mxu0
        %v1394 = vpop.f32.mrb[0].mxu0
        %v1395 = vadd.f32 %v1015, %v1394
        %v1396 = vpop.f32.mrb[0].mxu0
        %1397 = vmatprep.mubr.bf16.mxu0 0
        %1398 = vmatmul.mubr.bf16.gmra.mrb[0].mxu0 %v1120
        %v1399 = vpop.f32.mrb[0].mxu0
        %v1400 = vadd.f32 %v1015, %v1399
        %v1401 = vpop.f32.mrb[0].mxu0
        %v1402 = vpop.f32.mrb[0].mxu0
        %v1403 = vadd.f32 %v1015, %v1402
        %v1404 = vpop.f32.mrb[0].mxu0
        %1405 = vmatprep.mubr.bf16.mxu0 0
        %1406 = vmatmul.mubr.bf16.gmra.mrb[0].mxu0 %v1123
        %v1407 = vpop.f32.mrb[0].mxu0
        %v1408 = vadd.f32 %v1015, %v1407
        %v1409 = vpop.f32.mrb[0].mxu0
        %v1410 = vpop.f32.mrb[0].mxu0
        %v1411 = vadd.f32 %v1015, %v1410
        %v1412 = vpop.f32.mrb[0].mxu0
        %1413 = vdwg.mxu0
        %v1414 = vmax.f32 %v1160, 0.0
        %v1415 = vmax.f32 %v1163, 0.0
        %v1416 = vmax.f32 %v1168, 0.0
        %v1417 = vmax.f32 %v1171, 0.0
        %v1418 = vmax.f32 %v1176, 0.0
        %v1419 = vmax.f32 %v1179, 0.0
        %v1420 = vmax.f32 %v1184, 0.0
        %v1421 = vmax.f32 %v1187, 0.0
        %v1422 = vmax.f32 %v1192, 0.0
        %v1423 = vmax.f32 %v1195, 0.0
        %v1424 = vmax.f32 %v1200, 0.0
        %v1425 = vmax.f32 %v1203, 0.0
        %v1426 = vmax.f32 %v1208, 0.0
        %v1427 = vmax.f32 %v1211, 0.0
        %v1428 = vmax.f32 %v1216, 0.0
        %v1429 = vmax.f32 %v1219, 0.0
        %v1430 = vmax.f32 %v1224, 0.0
        %v1431 = vmax.f32 %v1227, 0.0
        %v1432 = vmax.f32 %v1232, 0.0
        %v1433 = vmax.f32 %v1235, 0.0
        %v1434 = vmax.f32 %v1240, 0.0
        %v1435 = vmax.f32 %v1243, 0.0
        %v1436 = vmax.f32 %v1248, 0.0
        %v1437 = vmax.f32 %v1251, 0.0
        %v1438 = vmax.f32 %v1256, 0.0
        %v1439 = vmax.f32 %v1259, 0.0
        %v1440 = vmax.f32 %v1264, 0.0
        %v1441 = vmax.f32 %v1267, 0.0
        %v1442 = vmax.f32 %v1272, 0.0
        %v1443 = vmax.f32 %v1275, 0.0
        %v1444 = vmax.f32 %v1280, 0.0
        %v1445 = vmax.f32 %v1283, 0.0
        %v1446 = vmax.f32 %v1288, 0.0
        %v1447 = vmax.f32 %v1291, 0.0
        %v1448 = vmax.f32 %v1296, 0.0
        %v1449 = vmax.f32 %v1299, 0.0
        %v1450 = vmax.f32 %v1304, 0.0
        %v1451 = vmax.f32 %v1307, 0.0
        %v1452 = vmax.f32 %v1312, 0.0
        %v1453 = vmax.f32 %v1315, 0.0
        %v1454 = vmax.f32 %v1320, 0.0
        %v1455 = vmax.f32 %v1323, 0.0
        %v1456 = vmax.f32 %v1328, 0.0
        %v1457 = vmax.f32 %v1331, 0.0
        %v1458 = vmax.f32 %v1336, 0.0
        %v1459 = vmax.f32 %v1339, 0.0
        %v1460 = vmax.f32 %v1344, 0.0
        %v1461 = vmax.f32 %v1347, 0.0
        %v1462 = vmax.f32 %v1352, 0.0
        %v1463 = vmax.f32 %v1355, 0.0
        %v1464 = vmax.f32 %v1360, 0.0
        %v1465 = vmax.f32 %v1363, 0.0
        %v1466 = vmax.f32 %v1368, 0.0
        %v1467 = vmax.f32 %v1371, 0.0
        %v1468 = vmax.f32 %v1376, 0.0
        %v1469 = vmax.f32 %v1379, 0.0
        %v1470 = vmax.f32 %v1384, 0.0
        %v1471 = vmax.f32 %v1387, 0.0
        %v1472 = vmax.f32 %v1392, 0.0
        %v1473 = vmax.f32 %v1395, 0.0
        %v1474 = vmax.f32 %v1400, 0.0
        %v1475 = vmax.f32 %v1403, 0.0
        %v1476 = vmax.f32 %v1408, 0.0
        %v1477 = vmax.f32 %v1411, 0.0
        %v1478 = vpack.c.bf16 %v1415, %v1414
        %v1479 = vpack.c.bf16 %v1417, %v1416
        %v1480 = vpack.c.bf16 %v1419, %v1418
        %v1481 = vpack.c.bf16 %v1421, %v1420
        %v1482 = vpack.c.bf16 %v1423, %v1422
        %v1483 = vpack.c.bf16 %v1425, %v1424
        %v1484 = vpack.c.bf16 %v1427, %v1426
        %v1485 = vpack.c.bf16 %v1429, %v1428
        %v1486 = vpack.c.bf16 %v1431, %v1430
        %v1487 = vpack.c.bf16 %v1433, %v1432
        %v1488 = vpack.c.bf16 %v1435, %v1434
        %v1489 = vpack.c.bf16 %v1437, %v1436
        %v1490 = vpack.c.bf16 %v1439, %v1438
        %v1491 = vpack.c.bf16 %v1441, %v1440
        %v1492 = vpack.c.bf16 %v1443, %v1442
        %v1493 = vpack.c.bf16 %v1445, %v1444
        %v1494 = vpack.c.bf16 %v1447, %v1446
        %v1495 = vpack.c.bf16 %v1449, %v1448
        %v1496 = vpack.c.bf16 %v1451, %v1450
        %v1497 = vpack.c.bf16 %v1453, %v1452
        %v1498 = vpack.c.bf16 %v1455, %v1454
        %v1499 = vpack.c.bf16 %v1457, %v1456
        %v1500 = vpack.c.bf16 %v1459, %v1458
        %v1501 = vpack.c.bf16 %v1461, %v1460
        %v1502 = vpack.c.bf16 %v1463, %v1462
        %v1503 = vpack.c.bf16 %v1465, %v1464
        %v1504 = vpack.c.bf16 %v1467, %v1466
        %v1505 = vpack.c.bf16 %v1469, %v1468
        %v1506 = vpack.c.bf16 %v1471, %v1470
        %v1507 = vpack.c.bf16 %v1473, %v1472
        %v1508 = vpack.c.bf16 %v1475, %v1474
        %v1509 = vpack.c.bf16 %v1477, %v1476
        %s1510 = scalar_lea.vmem %s2, 16
        %v1511 = vld [vmem:[%s1510] sm:$0xf]
        %v1512 = vld [vmem:[%s1510 + $0x4] sm:$0xf]
        %v1513 = vld [vmem:[%s1510 + $0x8] sm:$0xf]
        %v1514 = vld [vmem:[%s1510 + $0xc] sm:$0xf]
        %v1515 = vld [vmem:[%s3 + $0x2] sm:$0x1]
        %v1516 = vlaneseq
        %v1517 = vshrl.u32 %v1516, 7
        %v1518 = vsub.s32 0, %v1517
        %v1519 = vrot.slane %v1515, %v1518
        %v1524 = vunpack.c.l.b16 %v1511
        %v1525 = vunpack.c.l.b16 %v1512
        %v1526 = vunpack.c.l.b16 %v1513
        %v1527 = vunpack.c.l.b16 %v1514
        %v1528 = vpack.c.b16 %v1525, %v1524
        %v1529 = vpack.c.b16 %v1527, %v1526
        %v1533 = vsel %vm1028, %v1478, 0
        %v1536 = vsel %vm1028, %v1479, 0
        %v1539 = vsel %vm1028, %v1480, 0
        %v1542 = vsel %vm1028, %v1481, 0
        %v1545 = vsel %vm1028, %v1482, 0
        %v1548 = vsel %vm1028, %v1483, 0
        %v1551 = vsel %vm1028, %v1484, 0
        %v1554 = vsel %vm1028, %v1485, 0
        %v1557 = vsel %vm1028, %v1486, 0
        %v1560 = vsel %vm1028, %v1487, 0
        %v1563 = vsel %vm1028, %v1488, 0
        %v1566 = vsel %vm1028, %v1489, 0
        %v1569 = vsel %vm1028, %v1490, 0
        %v1572 = vsel %vm1028, %v1491, 0
        %v1575 = vsel %vm1028, %v1492, 0
        %v1578 = vsel %vm1028, %v1493, 0
        %v1581 = vsel %vm1028, %v1494, 0
        %v1584 = vsel %vm1028, %v1495, 0
        %v1587 = vsel %vm1028, %v1496, 0
        %v1590 = vsel %vm1028, %v1497, 0
        %v1593 = vsel %vm1028, %v1498, 0
        %v1596 = vsel %vm1028, %v1499, 0
        %v1599 = vsel %vm1028, %v1500, 0
        %v1602 = vsel %vm1028, %v1501, 0
        %v1605 = vsel %vm1028, %v1502, 0
        %v1608 = vsel %vm1028, %v1503, 0
        %v1611 = vsel %vm1028, %v1504, 0
        %v1614 = vsel %vm1028, %v1505, 0
        %v1617 = vsel %vm1028, %v1506, 0
        %v1620 = vsel %vm1028, %v1507, 0
        %v1623 = vsel %vm1028, %v1508, 0
        %v1626 = vsel %vm1028, %v1509, 0
        %1628 = vmatprep.subr.bf16.mxu0 0
        %1629 = vmatpush1.bf16.msra.mxu0 %v1528
        %1630 = vmatprep.subr.bf16.mxu0 0
        %1631 = vmatpush1.bf16.msra.mxu0 %v1529
        %1632 = vmatprep.subr.bf16.mxu0 0
        %1633 = vmatpush1.bf16.msra.mxu0 0
        %1634 = vmatprep.subr.bf16.mxu0 0
        %1635 = vmatpush1.bf16.msra.mxu0 0
        %1636 = vmatprep.subr.bf16.mxu0 0
        %1637 = vmatpush1.bf16.msra.mxu0 0
        %1638 = vmatprep.subr.bf16.mxu0 0
        %1639 = vmatpush1.bf16.msra.mxu0 0
        %1640 = vmatprep.subr.bf16.mxu0 0
        %1641 = vmatpush1.bf16.msra.mxu0 0
        %1642 = vmatprep.subr.bf16.mxu0 0
        %1643 = vmatpush1.bf16.msra.mxu0 0
        %1644 = vmatprep.subr.bf16.mxu0 0
        %1645 = vmatpush1.bf16.msra.mxu0 0
        %1646 = vmatprep.subr.bf16.mxu0 0
        %1647 = vmatpush1.bf16.msra.mxu0 0
        %1648 = vmatprep.subr.bf16.mxu0 0
        %1649 = vmatpush1.bf16.msra.mxu0 0
        %1650 = vmatprep.subr.bf16.mxu0 0
        %1651 = vmatpush1.bf16.msra.mxu0 0
        %1652 = vmatprep.subr.bf16.mxu0 0
        %1653 = vmatpush1.bf16.msra.mxu0 0
        %1654 = vmatprep.subr.bf16.mxu0 0
        %1655 = vmatpush1.bf16.msra.mxu0 0
        %1656 = vmatprep.subr.bf16.mxu0 0
        %1657 = vmatpush1.bf16.msra.mxu0 0
        %1658 = vmatprep.subr.bf16.mxu0 0
        %1659 = vmatpush1.bf16.msra.mxu0 0
        %1660 = vmatprep.mubr.bf16.mxu0 0
        %1661 = vmatmul.mubr.bf16.gmra.mrb[0].mxu0 %v1533
        %v1662 = vpop.f32.mrb[0].mxu0
        %v1663 = vadd.f32 %v1519, %v1662
        %v1664 = vpop.f32.mrb[0].mxu0
        %v1665 = vpop.f32.mrb[0].mxu0
        %v1666 = vadd.f32 %v1519, %v1665
        %v1667 = vpop.f32.mrb[0].mxu0
        %1668 = vmatprep.mubr.bf16.mxu0 0
        %1669 = vmatmul.mubr.bf16.gmra.mrb[0].mxu0 %v1536
        %v1670 = vpop.f32.mrb[0].mxu0
        %v1671 = vadd.f32 %v1519, %v1670
        %v1672 = vpop.f32.mrb[0].mxu0
        %v1673 = vpop.f32.mrb[0].mxu0
        %v1674 = vadd.f32 %v1519, %v1673
        %v1675 = vpop.f32.mrb[0].mxu0
        %1676 = vmatprep.mubr.bf16.mxu0 0
        %1677 = vmatmul.mubr.bf16.gmra.mrb[0].mxu0 %v1539
        %v1678 = vpop.f32.mrb[0].mxu0
        %v1679 = vadd.f32 %v1519, %v1678
        %v1680 = vpop.f32.mrb[0].mxu0
        %v1681 = vpop.f32.mrb[0].mxu0
        %v1682 = vadd.f32 %v1519, %v1681
        %v1683 = vpop.f32.mrb[0].mxu0
        %1684 = vmatprep.mubr.bf16.mxu0 0
        %1685 = vmatmul.mubr.bf16.gmra.mrb[0].mxu0 %v1542
        %v1686 = vpop.f32.mrb[0].mxu0
        %v1687 = vadd.f32 %v1519, %v1686
        %v1688 = vpop.f32.mrb[0].mxu0
        %v1689 = vpop.f32.mrb[0].mxu0
        %v1690 = vadd.f32 %v1519, %v1689
        %v1691 = vpop.f32.mrb[0].mxu0
        %1692 = vmatprep.mubr.bf16.mxu0 0
        %1693 = vmatmul.mubr.bf16.gmra.mrb[0].mxu0 %v1545
        %v1694 = vpop.f32.mrb[0].mxu0
        %v1695 = vadd.f32 %v1519, %v1694
        %v1696 = vpop.f32.mrb[0].mxu0
        %v1697 = vpop.f32.mrb[0].mxu0
        %v1698 = vadd.f32 %v1519, %v1697
        %v1699 = vpop.f32.mrb[0].mxu0
        %1700 = vmatprep.mubr.bf16.mxu0 0
        %1701 = vmatmul.mubr.bf16.gmra.mrb[0].mxu0 %v1548
        %v1702 = vpop.f32.mrb[0].mxu0
        %v1703 = vadd.f32 %v1519, %v1702
        %v1704 = vpop.f32.mrb[0].mxu0
        %v1705 = vpop.f32.mrb[0].mxu0
        %v1706 = vadd.f32 %v1519, %v1705
        %v1707 = vpop.f32.mrb[0].mxu0
        %1708 = vmatprep.mubr.bf16.mxu0 0
        %1709 = vmatmul.mubr.bf16.gmra.mrb[0].mxu0 %v1551
        %v1710 = vpop.f32.mrb[0].mxu0
        %v1711 = vadd.f32 %v1519, %v1710
        %v1712 = vpop.f32.mrb[0].mxu0
        %v1713 = vpop.f32.mrb[0].mxu0
        %v1714 = vadd.f32 %v1519, %v1713
        %v1715 = vpop.f32.mrb[0].mxu0
        %1716 = vmatprep.mubr.bf16.mxu0 0
        %1717 = vmatmul.mubr.bf16.gmra.mrb[0].mxu0 %v1554
        %v1718 = vpop.f32.mrb[0].mxu0
        %v1719 = vadd.f32 %v1519, %v1718
        %v1720 = vpop.f32.mrb[0].mxu0
        %v1721 = vpop.f32.mrb[0].mxu0
        %v1722 = vadd.f32 %v1519, %v1721
        %v1723 = vpop.f32.mrb[0].mxu0
        %1724 = vmatprep.mubr.bf16.mxu0 0
        %1725 = vmatmul.mubr.bf16.gmra.mrb[0].mxu0 %v1557
        %v1726 = vpop.f32.mrb[0].mxu0
        %v1727 = vadd.f32 %v1519, %v1726
        %v1728 = vpop.f32.mrb[0].mxu0
        %v1729 = vpop.f32.mrb[0].mxu0
        %v1730 = vadd.f32 %v1519, %v1729
        %v1731 = vpop.f32.mrb[0].mxu0
        %1732 = vmatprep.mubr.bf16.mxu0 0
        %1733 = vmatmul.mubr.bf16.gmra.mrb[0].mxu0 %v1560
        %v1734 = vpop.f32.mrb[0].mxu0
        %v1735 = vadd.f32 %v1519, %v1734
        %v1736 = vpop.f32.mrb[0].mxu0
        %v1737 = vpop.f32.mrb[0].mxu0
        %v1738 = vadd.f32 %v1519, %v1737
        %v1739 = vpop.f32.mrb[0].mxu0
        %1740 = vmatprep.mubr.bf16.mxu0 0
        %1741 = vmatmul.mubr.bf16.gmra.mrb[0].mxu0 %v1563
        %v1742 = vpop.f32.mrb[0].mxu0
        %v1743 = vadd.f32 %v1519, %v1742
        %v1744 = vpop.f32.mrb[0].mxu0
        %v1745 = vpop.f32.mrb[0].mxu0
        %v1746 = vadd.f32 %v1519, %v1745
        %v1747 = vpop.f32.mrb[0].mxu0
        %1748 = vmatprep.mubr.bf16.mxu0 0
        %1749 = vmatmul.mubr.bf16.gmra.mrb[0].mxu0 %v1566
        %v1750 = vpop.f32.mrb[0].mxu0
        %v1751 = vadd.f32 %v1519, %v1750
        %v1752 = vpop.f32.mrb[0].mxu0
        %v1753 = vpop.f32.mrb[0].mxu0
        %v1754 = vadd.f32 %v1519, %v1753
        %v1755 = vpop.f32.mrb[0].mxu0
        %1756 = vmatprep.mubr.bf16.mxu0 0
        %1757 = vmatmul.mubr.bf16.gmra.mrb[0].mxu0 %v1569
        %v1758 = vpop.f32.mrb[0].mxu0
        %v1759 = vadd.f32 %v1519, %v1758
        %v1760 = vpop.f32.mrb[0].mxu0
        %v1761 = vpop.f32.mrb[0].mxu0
        %v1762 = vadd.f32 %v1519, %v1761
        %v1763 = vpop.f32.mrb[0].mxu0
        %1764 = vmatprep.mubr.bf16.mxu0 0
        %1765 = vmatmul.mubr.bf16.gmra.mrb[0].mxu0 %v1572
        %v1766 = vpop.f32.mrb[0].mxu0
        %v1767 = vadd.f32 %v1519, %v1766
        %v1768 = vpop.f32.mrb[0].mxu0
        %v1769 = vpop.f32.mrb[0].mxu0
        %v1770 = vadd.f32 %v1519, %v1769
        %v1771 = vpop.f32.mrb[0].mxu0
        %1772 = vmatprep.mubr.bf16.mxu0 0
        %1773 = vmatmul.mubr.bf16.gmra.mrb[0].mxu0 %v1575
        %v1774 = vpop.f32.mrb[0].mxu0
        %v1775 = vadd.f32 %v1519, %v1774
        %v1776 = vpop.f32.mrb[0].mxu0
        %v1777 = vpop.f32.mrb[0].mxu0
        %v1778 = vadd.f32 %v1519, %v1777
        %v1779 = vpop.f32.mrb[0].mxu0
        %1780 = vmatprep.mubr.bf16.mxu0 0
        %1781 = vmatmul.mubr.bf16.gmra.mrb[0].mxu0 %v1578
        %v1782 = vpop.f32.mrb[0].mxu0
        %v1783 = vadd.f32 %v1519, %v1782
        %v1784 = vpop.f32.mrb[0].mxu0
        %v1785 = vpop.f32.mrb[0].mxu0
        %v1786 = vadd.f32 %v1519, %v1785
        %v1787 = vpop.f32.mrb[0].mxu0
        %1788 = vmatprep.mubr.bf16.mxu0 0
        %1789 = vmatmul.mubr.bf16.gmra.mrb[0].mxu0 %v1581
        %v1790 = vpop.f32.mrb[0].mxu0
        %v1791 = vadd.f32 %v1519, %v1790
        %v1792 = vpop.f32.mrb[0].mxu0
        %v1793 = vpop.f32.mrb[0].mxu0
        %v1794 = vadd.f32 %v1519, %v1793
        %v1795 = vpop.f32.mrb[0].mxu0
        %1796 = vmatprep.mubr.bf16.mxu0 0
        %1797 = vmatmul.mubr.bf16.gmra.mrb[0].mxu0 %v1584
        %v1798 = vpop.f32.mrb[0].mxu0
        %v1799 = vadd.f32 %v1519, %v1798
        %v1800 = vpop.f32.mrb[0].mxu0
        %v1801 = vpop.f32.mrb[0].mxu0
        %v1802 = vadd.f32 %v1519, %v1801
        %v1803 = vpop.f32.mrb[0].mxu0
        %1804 = vmatprep.mubr.bf16.mxu0 0
        %1805 = vmatmul.mubr.bf16.gmra.mrb[0].mxu0 %v1587
        %v1806 = vpop.f32.mrb[0].mxu0
        %v1807 = vadd.f32 %v1519, %v1806
        %v1808 = vpop.f32.mrb[0].mxu0
        %v1809 = vpop.f32.mrb[0].mxu0
        %v1810 = vadd.f32 %v1519, %v1809
        %v1811 = vpop.f32.mrb[0].mxu0
        %1812 = vmatprep.mubr.bf16.mxu0 0
        %1813 = vmatmul.mubr.bf16.gmra.mrb[0].mxu0 %v1590
        %v1814 = vpop.f32.mrb[0].mxu0
        %v1815 = vadd.f32 %v1519, %v1814
        %v1816 = vpop.f32.mrb[0].mxu0
        %v1817 = vpop.f32.mrb[0].mxu0
        %v1818 = vadd.f32 %v1519, %v1817
        %v1819 = vpop.f32.mrb[0].mxu0
        %1820 = vmatprep.mubr.bf16.mxu0 0
        %1821 = vmatmul.mubr.bf16.gmra.mrb[0].mxu0 %v1593
        %v1822 = vpop.f32.mrb[0].mxu0
        %v1823 = vadd.f32 %v1519, %v1822
        %v1824 = vpop.f32.mrb[0].mxu0
        %v1825 = vpop.f32.mrb[0].mxu0
        %v1826 = vadd.f32 %v1519, %v1825
        %v1827 = vpop.f32.mrb[0].mxu0
        %1828 = vmatprep.mubr.bf16.mxu0 0
        %1829 = vmatmul.mubr.bf16.gmra.mrb[0].mxu0 %v1596
        %v1830 = vpop.f32.mrb[0].mxu0
        %v1831 = vadd.f32 %v1519, %v1830
        %v1832 = vpop.f32.mrb[0].mxu0
        %v1833 = vpop.f32.mrb[0].mxu0
        %v1834 = vadd.f32 %v1519, %v1833
        %v1835 = vpop.f32.mrb[0].mxu0
        %1836 = vmatprep.mubr.bf16.mxu0 0
        %1837 = vmatmul.mubr.bf16.gmra.mrb[0].mxu0 %v1599
        %v1838 = vpop.f32.mrb[0].mxu0
        %v1839 = vadd.f32 %v1519, %v1838
        %v1840 = vpop.f32.mrb[0].mxu0
        %v1841 = vpop.f32.mrb[0].mxu0
        %v1842 = vadd.f32 %v1519, %v1841
        %v1843 = vpop.f32.mrb[0].mxu0
        %1844 = vmatprep.mubr.bf16.mxu0 0
        %1845 = vmatmul.mubr.bf16.gmra.mrb[0].mxu0 %v1602
        %v1846 = vpop.f32.mrb[0].mxu0
        %v1847 = vadd.f32 %v1519, %v1846
        %v1848 = vpop.f32.mrb[0].mxu0
        %v1849 = vpop.f32.mrb[0].mxu0
        %v1850 = vadd.f32 %v1519, %v1849
        %v1851 = vpop.f32.mrb[0].mxu0
        %1852 = vmatprep.mubr.bf16.mxu0 0
        %1853 = vmatmul.mubr.bf16.gmra.mrb[0].mxu0 %v1605
        %v1854 = vpop.f32.mrb[0].mxu0
        %v1855 = vadd.f32 %v1519, %v1854
        %v1856 = vpop.f32.mrb[0].mxu0
        %v1857 = vpop.f32.mrb[0].mxu0
        %v1858 = vadd.f32 %v1519, %v1857
        %v1859 = vpop.f32.mrb[0].mxu0
        %1860 = vmatprep.mubr.bf16.mxu0 0
        %1861 = vmatmul.mubr.bf16.gmra.mrb[0].mxu0 %v1608
        %v1862 = vpop.f32.mrb[0].mxu0
        %v1863 = vadd.f32 %v1519, %v1862
        %v1864 = vpop.f32.mrb[0].mxu0
        %v1865 = vpop.f32.mrb[0].mxu0
        %v1866 = vadd.f32 %v1519, %v1865
        %v1867 = vpop.f32.mrb[0].mxu0
        %1868 = vmatprep.mubr.bf16.mxu0 0
        %1869 = vmatmul.mubr.bf16.gmra.mrb[0].mxu0 %v1611
        %v1870 = vpop.f32.mrb[0].mxu0
        %v1871 = vadd.f32 %v1519, %v1870
        %v1872 = vpop.f32.mrb[0].mxu0
        %v1873 = vpop.f32.mrb[0].mxu0
        %v1874 = vadd.f32 %v1519, %v1873
        %v1875 = vpop.f32.mrb[0].mxu0
        %1876 = vmatprep.mubr.bf16.mxu0 0
        %1877 = vmatmul.mubr.bf16.gmra.mrb[0].mxu0 %v1614
        %v1878 = vpop.f32.mrb[0].mxu0
        %v1879 = vadd.f32 %v1519, %v1878
        %v1880 = vpop.f32.mrb[0].mxu0
        %v1881 = vpop.f32.mrb[0].mxu0
        %v1882 = vadd.f32 %v1519, %v1881
        %v1883 = vpop.f32.mrb[0].mxu0
        %1884 = vmatprep.mubr.bf16.mxu0 0
        %1885 = vmatmul.mubr.bf16.gmra.mrb[0].mxu0 %v1617
        %v1886 = vpop.f32.mrb[0].mxu0
        %v1887 = vadd.f32 %v1519, %v1886
        %v1888 = vpop.f32.mrb[0].mxu0
        %v1889 = vpop.f32.mrb[0].mxu0
        %v1890 = vadd.f32 %v1519, %v1889
        %v1891 = vpop.f32.mrb[0].mxu0
        %1892 = vmatprep.mubr.bf16.mxu0 0
        %1893 = vmatmul.mubr.bf16.gmra.mrb[0].mxu0 %v1620
        %v1894 = vpop.f32.mrb[0].mxu0
        %v1895 = vadd.f32 %v1519, %v1894
        %v1896 = vpop.f32.mrb[0].mxu0
        %v1897 = vpop.f32.mrb[0].mxu0
        %v1898 = vadd.f32 %v1519, %v1897
        %v1899 = vpop.f32.mrb[0].mxu0
        %1900 = vmatprep.mubr.bf16.mxu0 0
        %1901 = vmatmul.mubr.bf16.gmra.mrb[0].mxu0 %v1623
        %v1902 = vpop.f32.mrb[0].mxu0
        %v1903 = vadd.f32 %v1519, %v1902
        %v1904 = vpop.f32.mrb[0].mxu0
        %v1905 = vpop.f32.mrb[0].mxu0
        %v1906 = vadd.f32 %v1519, %v1905
        %v1907 = vpop.f32.mrb[0].mxu0
        %1908 = vmatprep.mubr.bf16.mxu0 0
        %1909 = vmatmul.mubr.bf16.gmra.mrb[0].mxu0 %v1626
        %v1910 = vpop.f32.mrb[0].mxu0
        %v1911 = vadd.f32 %v1519, %v1910
        %v1912 = vpop.f32.mrb[0].mxu0
        %v1913 = vpop.f32.mrb[0].mxu0
        %v1914 = vadd.f32 %v1519, %v1913
        %v1915 = vpop.f32.mrb[0].mxu0
        %1916 = vdwg.mxu0
        %v1917 = vmax.f32 %v1663, 0.0
        %v1918 = vmax.f32 %v1666, 0.0
        %v1919 = vmax.f32 %v1671, 0.0
        %v1920 = vmax.f32 %v1674, 0.0
        %v1921 = vmax.f32 %v1679, 0.0
        %v1922 = vmax.f32 %v1682, 0.0
        %v1923 = vmax.f32 %v1687, 0.0
        %v1924 = vmax.f32 %v1690, 0.0
        %v1925 = vmax.f32 %v1695, 0.0
        %v1926 = vmax.f32 %v1698, 0.0
        %v1927 = vmax.f32 %v1703, 0.0
        %v1928 = vmax.f32 %v1706, 0.0
        %v1929 = vmax.f32 %v1711, 0.0
        %v1930 = vmax.f32 %v1714, 0.0
        %v1931 = vmax.f32 %v1719, 0.0
        %v1932 = vmax.f32 %v1722, 0.0
        %v1933 = vmax.f32 %v1727, 0.0
        %v1934 = vmax.f32 %v1730, 0.0
        %v1935 = vmax.f32 %v1735, 0.0
        %v1936 = vmax.f32 %v1738, 0.0
        %v1937 = vmax.f32 %v1743, 0.0
        %v1938 = vmax.f32 %v1746, 0.0
        %v1939 = vmax.f32 %v1751, 0.0
        %v1940 = vmax.f32 %v1754, 0.0
        %v1941 = vmax.f32 %v1759, 0.0
        %v1942 = vmax.f32 %v1762, 0.0
        %v1943 = vmax.f32 %v1767, 0.0
        %v1944 = vmax.f32 %v1770, 0.0
        %v1945 = vmax.f32 %v1775, 0.0
        %v1946 = vmax.f32 %v1778, 0.0
        %v1947 = vmax.f32 %v1783, 0.0
        %v1948 = vmax.f32 %v1786, 0.0
        %v1949 = vmax.f32 %v1791, 0.0
        %v1950 = vmax.f32 %v1794, 0.0
        %v1951 = vmax.f32 %v1799, 0.0
        %v1952 = vmax.f32 %v1802, 0.0
        %v1953 = vmax.f32 %v1807, 0.0
        %v1954 = vmax.f32 %v1810, 0.0
        %v1955 = vmax.f32 %v1815, 0.0
        %v1956 = vmax.f32 %v1818, 0.0
        %v1957 = vmax.f32 %v1823, 0.0
        %v1958 = vmax.f32 %v1826, 0.0
        %v1959 = vmax.f32 %v1831, 0.0
        %v1960 = vmax.f32 %v1834, 0.0
        %v1961 = vmax.f32 %v1839, 0.0
        %v1962 = vmax.f32 %v1842, 0.0
        %v1963 = vmax.f32 %v1847, 0.0
        %v1964 = vmax.f32 %v1850, 0.0
        %v1965 = vmax.f32 %v1855, 0.0
        %v1966 = vmax.f32 %v1858, 0.0
        %v1967 = vmax.f32 %v1863, 0.0
        %v1968 = vmax.f32 %v1866, 0.0
        %v1969 = vmax.f32 %v1871, 0.0
        %v1970 = vmax.f32 %v1874, 0.0
        %v1971 = vmax.f32 %v1879, 0.0
        %v1972 = vmax.f32 %v1882, 0.0
        %v1973 = vmax.f32 %v1887, 0.0
        %v1974 = vmax.f32 %v1890, 0.0
        %v1975 = vmax.f32 %v1895, 0.0
        %v1976 = vmax.f32 %v1898, 0.0
        %v1977 = vmax.f32 %v1903, 0.0
        %v1978 = vmax.f32 %v1906, 0.0
        %v1979 = vmax.f32 %v1911, 0.0
        %v1980 = vmax.f32 %v1914, 0.0
        %v1981 = vpack.c.bf16 %v1918, %v1917
        %v1982 = vpack.c.bf16 %v1920, %v1919
        %v1983 = vpack.c.bf16 %v1922, %v1921
        %v1984 = vpack.c.bf16 %v1924, %v1923
        %v1985 = vpack.c.bf16 %v1926, %v1925
        %v1986 = vpack.c.bf16 %v1928, %v1927
        %v1987 = vpack.c.bf16 %v1930, %v1929
        %v1988 = vpack.c.bf16 %v1932, %v1931
        %v1989 = vpack.c.bf16 %v1934, %v1933
        %v1990 = vpack.c.bf16 %v1936, %v1935
        %v1991 = vpack.c.bf16 %v1938, %v1937
        %v1992 = vpack.c.bf16 %v1940, %v1939
        %v1993 = vpack.c.bf16 %v1942, %v1941
        %v1994 = vpack.c.bf16 %v1944, %v1943
        %v1995 = vpack.c.bf16 %v1946, %v1945
        %v1996 = vpack.c.bf16 %v1948, %v1947
        %v1997 = vpack.c.bf16 %v1950, %v1949
        %v1998 = vpack.c.bf16 %v1952, %v1951
        %v1999 = vpack.c.bf16 %v1954, %v1953
        %v2000 = vpack.c.bf16 %v1956, %v1955
        %v2001 = vpack.c.bf16 %v1958, %v1957
        %v2002 = vpack.c.bf16 %v1960, %v1959
        %v2003 = vpack.c.bf16 %v1962, %v1961
        %v2004 = vpack.c.bf16 %v1964, %v1963
        %v2005 = vpack.c.bf16 %v1966, %v1965
        %v2006 = vpack.c.bf16 %v1968, %v1967
        %v2007 = vpack.c.bf16 %v1970, %v1969
        %v2008 = vpack.c.bf16 %v1972, %v1971
        %v2009 = vpack.c.bf16 %v1974, %v1973
        %v2010 = vpack.c.bf16 %v1976, %v1975
        %v2011 = vpack.c.bf16 %v1978, %v1977
        %v2012 = vpack.c.bf16 %v1980, %v1979
        %s2013 = scalar_lea.vmem %s2, 32
        %v2014 = vld [vmem:[%s2013] sm:$0xf]
        %v2015 = vld [vmem:[%s2013 + $0x4] sm:$0xf]
        %v2016 = vld [vmem:[%s2013 + $0x8] sm:$0xf]
        %v2017 = vld [vmem:[%s2013 + $0xc] sm:$0xf]
        %v2018 = vld [vmem:[%s3 + $0x3] sm:$0x1]
        %v2019 = vlaneseq
        %v2020 = vshrl.u32 %v2019, 7
        %v2021 = vsub.s32 0, %v2020
        %v2022 = vrot.slane %v2018, %v2021
        %v2027 = vunpack.c.l.b16 %v2014
        %v2028 = vunpack.c.l.b16 %v2015
        %v2029 = vunpack.c.l.b16 %v2016
        %v2030 = vunpack.c.l.b16 %v2017
        %v2031 = vpack.c.b16 %v2028, %v2027
        %v2032 = vpack.c.b16 %v2030, %v2029
        %v2036 = vsel %vm1028, %v1981, 0
        %v2039 = vsel %vm1028, %v1982, 0
        %v2042 = vsel %vm1028, %v1983, 0
        %v2045 = vsel %vm1028, %v1984, 0
        %v2048 = vsel %vm1028, %v1985, 0
        %v2051 = vsel %vm1028, %v1986, 0
        %v2054 = vsel %vm1028, %v1987, 0
        %v2057 = vsel %vm1028, %v1988, 0
        %v2060 = vsel %vm1028, %v1989, 0
        %v2063 = vsel %vm1028, %v1990, 0
        %v2066 = vsel %vm1028, %v1991, 0
        %v2069 = vsel %vm1028, %v1992, 0
        %v2072 = vsel %vm1028, %v1993, 0
        %v2075 = vsel %vm1028, %v1994, 0
        %v2078 = vsel %vm1028, %v1995, 0
        %v2081 = vsel %vm1028, %v1996, 0
        %v2084 = vsel %vm1028, %v1997, 0
        %v2087 = vsel %vm1028, %v1998, 0
        %v2090 = vsel %vm1028, %v1999, 0
        %v2093 = vsel %vm1028, %v2000, 0
        %v2096 = vsel %vm1028, %v2001, 0
        %v2099 = vsel %vm1028, %v2002, 0
        %v2102 = vsel %vm1028, %v2003, 0
        %v2105 = vsel %vm1028, %v2004, 0
        %v2108 = vsel %vm1028, %v2005, 0
        %v2111 = vsel %vm1028, %v2006, 0
        %v2114 = vsel %vm1028, %v2007, 0
        %v2117 = vsel %vm1028, %v2008, 0
        %v2120 = vsel %vm1028, %v2009, 0
        %v2123 = vsel %vm1028, %v2010, 0
        %v2126 = vsel %vm1028, %v2011, 0
        %v2129 = vsel %vm1028, %v2012, 0
        %2131 = vmatprep.subr.bf16.mxu0 0
        %2132 = vmatpush1.bf16.msra.mxu0 %v2031
        %2133 = vmatprep.subr.bf16.mxu0 0
        %2134 = vmatpush1.bf16.msra.mxu0 %v2032
        %2135 = vmatprep.subr.bf16.mxu0 0
        %2136 = vmatpush1.bf16.msra.mxu0 0
        %2137 = vmatprep.subr.bf16.mxu0 0
        %2138 = vmatpush1.bf16.msra.mxu0 0
        %2139 = vmatprep.subr.bf16.mxu0 0
        %2140 = vmatpush1.bf16.msra.mxu0 0
        %2141 = vmatprep.subr.bf16.mxu0 0
        %2142 = vmatpush1.bf16.msra.mxu0 0
        %2143 = vmatprep.subr.bf16.mxu0 0
        %2144 = vmatpush1.bf16.msra.mxu0 0
        %2145 = vmatprep.subr.bf16.mxu0 0
        %2146 = vmatpush1.bf16.msra.mxu0 0
        %2147 = vmatprep.subr.bf16.mxu0 0
        %2148 = vmatpush1.bf16.msra.mxu0 0
        %2149 = vmatprep.subr.bf16.mxu0 0
        %2150 = vmatpush1.bf16.msra.mxu0 0
        %2151 = vmatprep.subr.bf16.mxu0 0
        %2152 = vmatpush1.bf16.msra.mxu0 0
        %2153 = vmatprep.subr.bf16.mxu0 0
        %2154 = vmatpush1.bf16.msra.mxu0 0
        %2155 = vmatprep.subr.bf16.mxu0 0
        %2156 = vmatpush1.bf16.msra.mxu0 0
        %2157 = vmatprep.subr.bf16.mxu0 0
        %2158 = vmatpush1.bf16.msra.mxu0 0
        %2159 = vmatprep.subr.bf16.mxu0 0
        %2160 = vmatpush1.bf16.msra.mxu0 0
        %2161 = vmatprep.subr.bf16.mxu0 0
        %2162 = vmatpush1.bf16.msra.mxu0 0
        %2163 = vmatprep.mubr.bf16.mxu0 0
        %2164 = vmatmul.mubr.bf16.gmra.mrb[0].mxu0 %v2036
        %v2165 = vpop.f32.mrb[0].mxu0
        %v2166 = vadd.f32 %v2022, %v2165
        %v2167 = vpop.f32.mrb[0].mxu0
        %v2168 = vpop.f32.mrb[0].mxu0
        %v2169 = vadd.f32 %v2022, %v2168
        %v2170 = vpop.f32.mrb[0].mxu0
        %2171 = vmatprep.mubr.bf16.mxu0 0
        %2172 = vmatmul.mubr.bf16.gmra.mrb[0].mxu0 %v2039
        %v2173 = vpop.f32.mrb[0].mxu0
        %v2174 = vadd.f32 %v2022, %v2173
        %v2175 = vpop.f32.mrb[0].mxu0
        %v2176 = vpop.f32.mrb[0].mxu0
        %v2177 = vadd.f32 %v2022, %v2176
        %v2178 = vpop.f32.mrb[0].mxu0
        %2179 = vmatprep.mubr.bf16.mxu0 0
        %2180 = vmatmul.mubr.bf16.gmra.mrb[0].mxu0 %v2042
        %v2181 = vpop.f32.mrb[0].mxu0
        %v2182 = vadd.f32 %v2022, %v2181
        %v2183 = vpop.f32.mrb[0].mxu0
        %v2184 = vpop.f32.mrb[0].mxu0
        %v2185 = vadd.f32 %v2022, %v2184
        %v2186 = vpop.f32.mrb[0].mxu0
        %2187 = vmatprep.mubr.bf16.mxu0 0
        %2188 = vmatmul.mubr.bf16.gmra.mrb[0].mxu0 %v2045
        %v2189 = vpop.f32.mrb[0].mxu0
        %v2190 = vadd.f32 %v2022, %v2189
        %v2191 = vpop.f32.mrb[0].mxu0
        %v2192 = vpop.f32.mrb[0].mxu0
        %v2193 = vadd.f32 %v2022, %v2192
        %v2194 = vpop.f32.mrb[0].mxu0
        %2195 = vmatprep.mubr.bf16.mxu0 0
        %2196 = vmatmul.mubr.bf16.gmra.mrb[0].mxu0 %v2048
        %v2197 = vpop.f32.mrb[0].mxu0
        %v2198 = vadd.f32 %v2022, %v2197
        %v2199 = vpop.f32.mrb[0].mxu0
        %v2200 = vpop.f32.mrb[0].mxu0
        %v2201 = vadd.f32 %v2022, %v2200
        %v2202 = vpop.f32.mrb[0].mxu0
        %2203 = vmatprep.mubr.bf16.mxu0 0
        %2204 = vmatmul.mubr.bf16.gmra.mrb[0].mxu0 %v2051
        %v2205 = vpop.f32.mrb[0].mxu0
        %v2206 = vadd.f32 %v2022, %v2205
        %v2207 = vpop.f32.mrb[0].mxu0
        %v2208 = vpop.f32.mrb[0].mxu0
        %v2209 = vadd.f32 %v2022, %v2208
        %v2210 = vpop.f32.mrb[0].mxu0
        %2211 = vmatprep.mubr.bf16.mxu0 0
        %2212 = vmatmul.mubr.bf16.gmra.mrb[0].mxu0 %v2054
        %v2213 = vpop.f32.mrb[0].mxu0
        %v2214 = vadd.f32 %v2022, %v2213
        %v2215 = vpop.f32.mrb[0].mxu0
        %v2216 = vpop.f32.mrb[0].mxu0
        %v2217 = vadd.f32 %v2022, %v2216
        %v2218 = vpop.f32.mrb[0].mxu0
        %2219 = vmatprep.mubr.bf16.mxu0 0
        %2220 = vmatmul.mubr.bf16.gmra.mrb[0].mxu0 %v2057
        %v2221 = vpop.f32.mrb[0].mxu0
        %v2222 = vadd.f32 %v2022, %v2221
        %v2223 = vpop.f32.mrb[0].mxu0
        %v2224 = vpop.f32.mrb[0].mxu0
        %v2225 = vadd.f32 %v2022, %v2224
        %v2226 = vpop.f32.mrb[0].mxu0
        %2227 = vmatprep.mubr.bf16.mxu0 0
        %2228 = vmatmul.mubr.bf16.gmra.mrb[0].mxu0 %v2060
        %v2229 = vpop.f32.mrb[0].mxu0
        %v2230 = vadd.f32 %v2022, %v2229
        %v2231 = vpop.f32.mrb[0].mxu0
        %v2232 = vpop.f32.mrb[0].mxu0
        %v2233 = vadd.f32 %v2022, %v2232
        %v2234 = vpop.f32.mrb[0].mxu0
        %2235 = vmatprep.mubr.bf16.mxu0 0
        %2236 = vmatmul.mubr.bf16.gmra.mrb[0].mxu0 %v2063
        %v2237 = vpop.f32.mrb[0].mxu0
        %v2238 = vadd.f32 %v2022, %v2237
        %v2239 = vpop.f32.mrb[0].mxu0
        %v2240 = vpop.f32.mrb[0].mxu0
        %v2241 = vadd.f32 %v2022, %v2240
        %v2242 = vpop.f32.mrb[0].mxu0
        %2243 = vmatprep.mubr.bf16.mxu0 0
        %2244 = vmatmul.mubr.bf16.gmra.mrb[0].mxu0 %v2066
        %v2245 = vpop.f32.mrb[0].mxu0
        %v2246 = vadd.f32 %v2022, %v2245
        %v2247 = vpop.f32.mrb[0].mxu0
        %v2248 = vpop.f32.mrb[0].mxu0
        %v2249 = vadd.f32 %v2022, %v2248
        %v2250 = vpop.f32.mrb[0].mxu0
        %2251 = vmatprep.mubr.bf16.mxu0 0
        %2252 = vmatmul.mubr.bf16.gmra.mrb[0].mxu0 %v2069
        %v2253 = vpop.f32.mrb[0].mxu0
        %v2254 = vadd.f32 %v2022, %v2253
        %v2255 = vpop.f32.mrb[0].mxu0
        %v2256 = vpop.f32.mrb[0].mxu0
        %v2257 = vadd.f32 %v2022, %v2256
        %v2258 = vpop.f32.mrb[0].mxu0
        %2259 = vmatprep.mubr.bf16.mxu0 0
        %2260 = vmatmul.mubr.bf16.gmra.mrb[0].mxu0 %v2072
        %v2261 = vpop.f32.mrb[0].mxu0
        %v2262 = vadd.f32 %v2022, %v2261
        %v2263 = vpop.f32.mrb[0].mxu0
        %v2264 = vpop.f32.mrb[0].mxu0
        %v2265 = vadd.f32 %v2022, %v2264
        %v2266 = vpop.f32.mrb[0].mxu0
        %2267 = vmatprep.mubr.bf16.mxu0 0
        %2268 = vmatmul.mubr.bf16.gmra.mrb[0].mxu0 %v2075
        %v2269 = vpop.f32.mrb[0].mxu0
        %v2270 = vadd.f32 %v2022, %v2269
        %v2271 = vpop.f32.mrb[0].mxu0
        %v2272 = vpop.f32.mrb[0].mxu0
        %v2273 = vadd.f32 %v2022, %v2272
        %v2274 = vpop.f32.mrb[0].mxu0
        %2275 = vmatprep.mubr.bf16.mxu0 0
        %2276 = vmatmul.mubr.bf16.gmra.mrb[0].mxu0 %v2078
        %v2277 = vpop.f32.mrb[0].mxu0
        %v2278 = vadd.f32 %v2022, %v2277
        %v2279 = vpop.f32.mrb[0].mxu0
        %v2280 = vpop.f32.mrb[0].mxu0
        %v2281 = vadd.f32 %v2022, %v2280
        %v2282 = vpop.f32.mrb[0].mxu0
        %2283 = vmatprep.mubr.bf16.mxu0 0
        %2284 = vmatmul.mubr.bf16.gmra.mrb[0].mxu0 %v2081
        %v2285 = vpop.f32.mrb[0].mxu0
        %v2286 = vadd.f32 %v2022, %v2285
        %v2287 = vpop.f32.mrb[0].mxu0
        %v2288 = vpop.f32.mrb[0].mxu0
        %v2289 = vadd.f32 %v2022, %v2288
        %v2290 = vpop.f32.mrb[0].mxu0
        %2291 = vmatprep.mubr.bf16.mxu0 0
        %2292 = vmatmul.mubr.bf16.gmra.mrb[0].mxu0 %v2084
        %v2293 = vpop.f32.mrb[0].mxu0
        %v2294 = vadd.f32 %v2022, %v2293
        %v2295 = vpop.f32.mrb[0].mxu0
        %v2296 = vpop.f32.mrb[0].mxu0
        %v2297 = vadd.f32 %v2022, %v2296
        %v2298 = vpop.f32.mrb[0].mxu0
        %2299 = vmatprep.mubr.bf16.mxu0 0
        %2300 = vmatmul.mubr.bf16.gmra.mrb[0].mxu0 %v2087
        %v2301 = vpop.f32.mrb[0].mxu0
        %v2302 = vadd.f32 %v2022, %v2301
        %v2303 = vpop.f32.mrb[0].mxu0
        %v2304 = vpop.f32.mrb[0].mxu0
        %v2305 = vadd.f32 %v2022, %v2304
        %v2306 = vpop.f32.mrb[0].mxu0
        %2307 = vmatprep.mubr.bf16.mxu0 0
        %2308 = vmatmul.mubr.bf16.gmra.mrb[0].mxu0 %v2090
        %v2309 = vpop.f32.mrb[0].mxu0
        %v2310 = vadd.f32 %v2022, %v2309
        %v2311 = vpop.f32.mrb[0].mxu0
        %v2312 = vpop.f32.mrb[0].mxu0
        %v2313 = vadd.f32 %v2022, %v2312
        %v2314 = vpop.f32.mrb[0].mxu0
        %2315 = vmatprep.mubr.bf16.mxu0 0
        %2316 = vmatmul.mubr.bf16.gmra.mrb[0].mxu0 %v2093
        %v2317 = vpop.f32.mrb[0].mxu0
        %v2318 = vadd.f32 %v2022, %v2317
        %v2319 = vpop.f32.mrb[0].mxu0
        %v2320 = vpop.f32.mrb[0].mxu0
        %v2321 = vadd.f32 %v2022, %v2320
        %v2322 = vpop.f32.mrb[0].mxu0
        %2323 = vmatprep.mubr.bf16.mxu0 0
        %2324 = vmatmul.mubr.bf16.gmra.mrb[0].mxu0 %v2096
        %v2325 = vpop.f32.mrb[0].mxu0
        %v2326 = vadd.f32 %v2022, %v2325
        %v2327 = vpop.f32.mrb[0].mxu0
        %v2328 = vpop.f32.mrb[0].mxu0
        %v2329 = vadd.f32 %v2022, %v2328
        %v2330 = vpop.f32.mrb[0].mxu0
        %2331 = vmatprep.mubr.bf16.mxu0 0
        %2332 = vmatmul.mubr.bf16.gmra.mrb[0].mxu0 %v2099
        %v2333 = vpop.f32.mrb[0].mxu0
        %v2334 = vadd.f32 %v2022, %v2333
        %v2335 = vpop.f32.mrb[0].mxu0
        %v2336 = vpop.f32.mrb[0].mxu0
        %v2337 = vadd.f32 %v2022, %v2336
        %v2338 = vpop.f32.mrb[0].mxu0
        %2339 = vmatprep.mubr.bf16.mxu0 0
        %2340 = vmatmul.mubr.bf16.gmra.mrb[0].mxu0 %v2102
        %v2341 = vpop.f32.mrb[0].mxu0
        %v2342 = vadd.f32 %v2022, %v2341
        %v2343 = vpop.f32.mrb[0].mxu0
        %v2344 = vpop.f32.mrb[0].mxu0
        %v2345 = vadd.f32 %v2022, %v2344
        %v2346 = vpop.f32.mrb[0].mxu0
        %2347 = vmatprep.mubr.bf16.mxu0 0
        %2348 = vmatmul.mubr.bf16.gmra.mrb[0].mxu0 %v2105
        %v2349 = vpop.f32.mrb[0].mxu0
        %v2350 = vadd.f32 %v2022, %v2349
        %v2351 = vpop.f32.mrb[0].mxu0
        %v2352 = vpop.f32.mrb[0].mxu0
        %v2353 = vadd.f32 %v2022, %v2352
        %v2354 = vpop.f32.mrb[0].mxu0
        %2355 = vmatprep.mubr.bf16.mxu0 0
        %2356 = vmatmul.mubr.bf16.gmra.mrb[0].mxu0 %v2108
        %v2357 = vpop.f32.mrb[0].mxu0
        %v2358 = vadd.f32 %v2022, %v2357
        %v2359 = vpop.f32.mrb[0].mxu0
        %v2360 = vpop.f32.mrb[0].mxu0
        %v2361 = vadd.f32 %v2022, %v2360
        %v2362 = vpop.f32.mrb[0].mxu0
        %2363 = vmatprep.mubr.bf16.mxu0 0
        %2364 = vmatmul.mubr.bf16.gmra.mrb[0].mxu0 %v2111
        %v2365 = vpop.f32.mrb[0].mxu0
        %v2366 = vadd.f32 %v2022, %v2365
        %v2367 = vpop.f32.mrb[0].mxu0
        %v2368 = vpop.f32.mrb[0].mxu0
        %v2369 = vadd.f32 %v2022, %v2368
        %v2370 = vpop.f32.mrb[0].mxu0
        %2371 = vmatprep.mubr.bf16.mxu0 0
        %2372 = vmatmul.mubr.bf16.gmra.mrb[0].mxu0 %v2114
        %v2373 = vpop.f32.mrb[0].mxu0
        %v2374 = vadd.f32 %v2022, %v2373
        %v2375 = vpop.f32.mrb[0].mxu0
        %v2376 = vpop.f32.mrb[0].mxu0
        %v2377 = vadd.f32 %v2022, %v2376
        %v2378 = vpop.f32.mrb[0].mxu0
        %2379 = vmatprep.mubr.bf16.mxu0 0
        %2380 = vmatmul.mubr.bf16.gmra.mrb[0].mxu0 %v2117
        %v2381 = vpop.f32.mrb[0].mxu0
        %v2382 = vadd.f32 %v2022, %v2381
        %v2383 = vpop.f32.mrb[0].mxu0
        %v2384 = vpop.f32.mrb[0].mxu0
        %v2385 = vadd.f32 %v2022, %v2384
        %v2386 = vpop.f32.mrb[0].mxu0
        %2387 = vmatprep.mubr.bf16.mxu0 0
        %2388 = vmatmul.mubr.bf16.gmra.mrb[0].mxu0 %v2120
        %v2389 = vpop.f32.mrb[0].mxu0
        %v2390 = vadd.f32 %v2022, %v2389
        %v2391 = vpop.f32.mrb[0].mxu0
        %v2392 = vpop.f32.mrb[0].mxu0
        %v2393 = vadd.f32 %v2022, %v2392
        %v2394 = vpop.f32.mrb[0].mxu0
        %2395 = vmatprep.mubr.bf16.mxu0 0
        %2396 = vmatmul.mubr.bf16.gmra.mrb[0].mxu0 %v2123
        %v2397 = vpop.f32.mrb[0].mxu0
        %v2398 = vadd.f32 %v2022, %v2397
        %v2399 = vpop.f32.mrb[0].mxu0
        %v2400 = vpop.f32.mrb[0].mxu0
        %v2401 = vadd.f32 %v2022, %v2400
        %v2402 = vpop.f32.mrb[0].mxu0
        %2403 = vmatprep.mubr.bf16.mxu0 0
        %2404 = vmatmul.mubr.bf16.gmra.mrb[0].mxu0 %v2126
        %v2405 = vpop.f32.mrb[0].mxu0
        %v2406 = vadd.f32 %v2022, %v2405
        %v2407 = vpop.f32.mrb[0].mxu0
        %v2408 = vpop.f32.mrb[0].mxu0
        %v2409 = vadd.f32 %v2022, %v2408
        %v2410 = vpop.f32.mrb[0].mxu0
        %2411 = vmatprep.mubr.bf16.mxu0 0
        %2412 = vmatmul.mubr.bf16.gmra.mrb[0].mxu0 %v2129
        %v2413 = vpop.f32.mrb[0].mxu0
        %v2414 = vadd.f32 %v2022, %v2413
        %v2415 = vpop.f32.mrb[0].mxu0
        %v2416 = vpop.f32.mrb[0].mxu0
        %v2417 = vadd.f32 %v2022, %v2416
        %v2418 = vpop.f32.mrb[0].mxu0
        %2419 = vdwg.mxu0
        %v2420 = vmax.f32 %v2166, 0.0
        %v2421 = vmax.f32 %v2169, 0.0
        %v2422 = vmax.f32 %v2174, 0.0
        %v2423 = vmax.f32 %v2177, 0.0
        %v2424 = vmax.f32 %v2182, 0.0
        %v2425 = vmax.f32 %v2185, 0.0
        %v2426 = vmax.f32 %v2190, 0.0
        %v2427 = vmax.f32 %v2193, 0.0
        %v2428 = vmax.f32 %v2198, 0.0
        %v2429 = vmax.f32 %v2201, 0.0
        %v2430 = vmax.f32 %v2206, 0.0
        %v2431 = vmax.f32 %v2209, 0.0
        %v2432 = vmax.f32 %v2214, 0.0
        %v2433 = vmax.f32 %v2217, 0.0
        %v2434 = vmax.f32 %v2222, 0.0
        %v2435 = vmax.f32 %v2225, 0.0
        %v2436 = vmax.f32 %v2230, 0.0
        %v2437 = vmax.f32 %v2233, 0.0
        %v2438 = vmax.f32 %v2238, 0.0
        %v2439 = vmax.f32 %v2241, 0.0
        %v2440 = vmax.f32 %v2246, 0.0
        %v2441 = vmax.f32 %v2249, 0.0
        %v2442 = vmax.f32 %v2254, 0.0
        %v2443 = vmax.f32 %v2257, 0.0
        %v2444 = vmax.f32 %v2262, 0.0
        %v2445 = vmax.f32 %v2265, 0.0
        %v2446 = vmax.f32 %v2270, 0.0
        %v2447 = vmax.f32 %v2273, 0.0
        %v2448 = vmax.f32 %v2278, 0.0
        %v2449 = vmax.f32 %v2281, 0.0
        %v2450 = vmax.f32 %v2286, 0.0
        %v2451 = vmax.f32 %v2289, 0.0
        %v2452 = vmax.f32 %v2294, 0.0
        %v2453 = vmax.f32 %v2297, 0.0
        %v2454 = vmax.f32 %v2302, 0.0
        %v2455 = vmax.f32 %v2305, 0.0
        %v2456 = vmax.f32 %v2310, 0.0
        %v2457 = vmax.f32 %v2313, 0.0
        %v2458 = vmax.f32 %v2318, 0.0
        %v2459 = vmax.f32 %v2321, 0.0
        %v2460 = vmax.f32 %v2326, 0.0
        %v2461 = vmax.f32 %v2329, 0.0
        %v2462 = vmax.f32 %v2334, 0.0
        %v2463 = vmax.f32 %v2337, 0.0
        %v2464 = vmax.f32 %v2342, 0.0
        %v2465 = vmax.f32 %v2345, 0.0
        %v2466 = vmax.f32 %v2350, 0.0
        %v2467 = vmax.f32 %v2353, 0.0
        %v2468 = vmax.f32 %v2358, 0.0
        %v2469 = vmax.f32 %v2361, 0.0
        %v2470 = vmax.f32 %v2366, 0.0
        %v2471 = vmax.f32 %v2369, 0.0
        %v2472 = vmax.f32 %v2374, 0.0
        %v2473 = vmax.f32 %v2377, 0.0
        %v2474 = vmax.f32 %v2382, 0.0
        %v2475 = vmax.f32 %v2385, 0.0
        %v2476 = vmax.f32 %v2390, 0.0
        %v2477 = vmax.f32 %v2393, 0.0
        %v2478 = vmax.f32 %v2398, 0.0
        %v2479 = vmax.f32 %v2401, 0.0
        %v2480 = vmax.f32 %v2406, 0.0
        %v2481 = vmax.f32 %v2409, 0.0
        %v2482 = vmax.f32 %v2414, 0.0
        %v2483 = vmax.f32 %v2417, 0.0
        %v2484 = vpack.c.bf16 %v2421, %v2420
        %v2485 = vpack.c.bf16 %v2423, %v2422
        %v2486 = vpack.c.bf16 %v2425, %v2424
        %v2487 = vpack.c.bf16 %v2427, %v2426
        %v2488 = vpack.c.bf16 %v2429, %v2428
        %v2489 = vpack.c.bf16 %v2431, %v2430
        %v2490 = vpack.c.bf16 %v2433, %v2432
        %v2491 = vpack.c.bf16 %v2435, %v2434
        %v2492 = vpack.c.bf16 %v2437, %v2436
        %v2493 = vpack.c.bf16 %v2439, %v2438
        %v2494 = vpack.c.bf16 %v2441, %v2440
        %v2495 = vpack.c.bf16 %v2443, %v2442
        %v2496 = vpack.c.bf16 %v2445, %v2444
        %v2497 = vpack.c.bf16 %v2447, %v2446
        %v2498 = vpack.c.bf16 %v2449, %v2448
        %v2499 = vpack.c.bf16 %v2451, %v2450
        %v2500 = vpack.c.bf16 %v2453, %v2452
        %v2501 = vpack.c.bf16 %v2455, %v2454
        %v2502 = vpack.c.bf16 %v2457, %v2456
        %v2503 = vpack.c.bf16 %v2459, %v2458
        %v2504 = vpack.c.bf16 %v2461, %v2460
        %v2505 = vpack.c.bf16 %v2463, %v2462
        %v2506 = vpack.c.bf16 %v2465, %v2464
        %v2507 = vpack.c.bf16 %v2467, %v2466
        %v2508 = vpack.c.bf16 %v2469, %v2468
        %v2509 = vpack.c.bf16 %v2471, %v2470
        %v2510 = vpack.c.bf16 %v2473, %v2472
        %v2511 = vpack.c.bf16 %v2475, %v2474
        %v2512 = vpack.c.bf16 %v2477, %v2476
        %v2513 = vpack.c.bf16 %v2479, %v2478
        %v2514 = vpack.c.bf16 %v2481, %v2480
        %v2515 = vpack.c.bf16 %v2483, %v2482
        %v2516 = vld [vmem:[%s4] sm:$0xf]
        %v2517 = vld [vmem:[%s4 + $0x4] sm:$0xf]
        %v2518 = vld [vmem:[%s4 + $0x8] sm:$0xf]
        %v2519 = vld [vmem:[%s4 + $0xc] sm:$0xf]
        %v2520 = vld [vmem:[%s5] sm:$0x1]
        %v2522 = vlaneseq
        %v2523 = vshrl.u32 %v2522, 7
        %v2524 = vsub.s32 0, %v2523
        %v2525 = vrot.slane %v2520, %v2524
        %v2531 = vunpack.c.l.b16 %v2516
        %v2532 = vunpack.c.l.b16 %v2517
        %v2533 = vunpack.c.l.b16 %v2518
        %v2534 = vunpack.c.l.b16 %v2519
        %v2535 = vpack.c.b16 %v2532, %v2531
        %v2536 = vpack.c.b16 %v2534, %v2533
        %v2540 = vsel %vm1028, %v2484, 0
        %v2543 = vsel %vm1028, %v2485, 0
        %v2546 = vsel %vm1028, %v2486, 0
        %v2549 = vsel %vm1028, %v2487, 0
        %v2552 = vsel %vm1028, %v2488, 0
        %v2555 = vsel %vm1028, %v2489, 0
        %v2558 = vsel %vm1028, %v2490, 0
        %v2561 = vsel %vm1028, %v2491, 0
        %v2564 = vsel %vm1028, %v2492, 0
        %v2567 = vsel %vm1028, %v2493, 0
        %v2570 = vsel %vm1028, %v2494, 0
        %v2573 = vsel %vm1028, %v2495, 0
        %v2576 = vsel %vm1028, %v2496, 0
        %v2579 = vsel %vm1028, %v2497, 0
        %v2582 = vsel %vm1028, %v2498, 0
        %v2585 = vsel %vm1028, %v2499, 0
        %v2588 = vsel %vm1028, %v2500, 0
        %v2591 = vsel %vm1028, %v2501, 0
        %v2594 = vsel %vm1028, %v2502, 0
        %v2597 = vsel %vm1028, %v2503, 0
        %v2600 = vsel %vm1028, %v2504, 0
        %v2603 = vsel %vm1028, %v2505, 0
        %v2606 = vsel %vm1028, %v2506, 0
        %v2609 = vsel %vm1028, %v2507, 0
        %v2612 = vsel %vm1028, %v2508, 0
        %v2615 = vsel %vm1028, %v2509, 0
        %v2618 = vsel %vm1028, %v2510, 0
        %v2621 = vsel %vm1028, %v2511, 0
        %v2624 = vsel %vm1028, %v2512, 0
        %v2627 = vsel %vm1028, %v2513, 0
        %v2630 = vsel %vm1028, %v2514, 0
        %v2633 = vsel %vm1028, %v2515, 0
        %2635 = vmatprep.subr.bf16.mxu0 0
        %2636 = vmatpush1.bf16.msra.mxu0 %v2535
        %2637 = vmatprep.subr.bf16.mxu0 0
        %2638 = vmatpush1.bf16.msra.mxu0 %v2536
        %2639 = vmatprep.subr.bf16.mxu0 0
        %2640 = vmatpush1.bf16.msra.mxu0 0
        %2641 = vmatprep.subr.bf16.mxu0 0
        %2642 = vmatpush1.bf16.msra.mxu0 0
        %2643 = vmatprep.subr.bf16.mxu0 0
        %2644 = vmatpush1.bf16.msra.mxu0 0
        %2645 = vmatprep.subr.bf16.mxu0 0
        %2646 = vmatpush1.bf16.msra.mxu0 0
        %2647 = vmatprep.subr.bf16.mxu0 0
        %2648 = vmatpush1.bf16.msra.mxu0 0
        %2649 = vmatprep.subr.bf16.mxu0 0
        %2650 = vmatpush1.bf16.msra.mxu0 0
        %2651 = vmatprep.subr.bf16.mxu0 0
        %2652 = vmatpush1.bf16.msra.mxu0 0
        %2653 = vmatprep.subr.bf16.mxu0 0
        %2654 = vmatpush1.bf16.msra.mxu0 0
        %2655 = vmatprep.subr.bf16.mxu0 0
        %2656 = vmatpush1.bf16.msra.mxu0 0
        %2657 = vmatprep.subr.bf16.mxu0 0
        %2658 = vmatpush1.bf16.msra.mxu0 0
        %2659 = vmatprep.subr.bf16.mxu0 0
        %2660 = vmatpush1.bf16.msra.mxu0 0
        %2661 = vmatprep.subr.bf16.mxu0 0
        %2662 = vmatpush1.bf16.msra.mxu0 0
        %2663 = vmatprep.subr.bf16.mxu0 0
        %2664 = vmatpush1.bf16.msra.mxu0 0
        %2665 = vmatprep.subr.bf16.mxu0 0
        %2666 = vmatpush1.bf16.msra.mxu0 0
        %2667 = vmatprep.mubr.bf16.mxu0 0
        %2668 = vmatmul.mubr.bf16.gmra.mrb[0].mxu0 %v2540
        %v2669 = vpop.f32.mrb[0].mxu0
        %v2670 = vadd.f32 %v2525, %v2669
        %v2671 = vpop.f32.mrb[0].mxu0
        %v2672 = vpop.f32.mrb[0].mxu0
        %v2673 = vadd.f32 %v2525, %v2672
        %v2674 = vpop.f32.mrb[0].mxu0
        %2675 = vmatprep.mubr.bf16.mxu0 0
        %2676 = vmatmul.mubr.bf16.gmra.mrb[0].mxu0 %v2543
        %v2677 = vpop.f32.mrb[0].mxu0
        %v2678 = vadd.f32 %v2525, %v2677
        %v2679 = vpop.f32.mrb[0].mxu0
        %v2680 = vpop.f32.mrb[0].mxu0
        %v2681 = vadd.f32 %v2525, %v2680
        %v2682 = vpop.f32.mrb[0].mxu0
        %2683 = vmatprep.mubr.bf16.mxu0 0
        %2684 = vmatmul.mubr.bf16.gmra.mrb[0].mxu0 %v2546
        %v2685 = vpop.f32.mrb[0].mxu0
        %v2686 = vadd.f32 %v2525, %v2685
        %v2687 = vpop.f32.mrb[0].mxu0
        %v2688 = vpop.f32.mrb[0].mxu0
        %v2689 = vadd.f32 %v2525, %v2688
        %v2690 = vpop.f32.mrb[0].mxu0
        %2691 = vmatprep.mubr.bf16.mxu0 0
        %2692 = vmatmul.mubr.bf16.gmra.mrb[0].mxu0 %v2549
        %v2693 = vpop.f32.mrb[0].mxu0
        %v2694 = vadd.f32 %v2525, %v2693
        %v2695 = vpop.f32.mrb[0].mxu0
        %v2696 = vpop.f32.mrb[0].mxu0
        %v2697 = vadd.f32 %v2525, %v2696
        %v2698 = vpop.f32.mrb[0].mxu0
        %2699 = vmatprep.mubr.bf16.mxu0 0
        %2700 = vmatmul.mubr.bf16.gmra.mrb[0].mxu0 %v2552
        %v2701 = vpop.f32.mrb[0].mxu0
        %v2702 = vadd.f32 %v2525, %v2701
        %v2703 = vpop.f32.mrb[0].mxu0
        %v2704 = vpop.f32.mrb[0].mxu0
        %v2705 = vadd.f32 %v2525, %v2704
        %v2706 = vpop.f32.mrb[0].mxu0
        %2707 = vmatprep.mubr.bf16.mxu0 0
        %2708 = vmatmul.mubr.bf16.gmra.mrb[0].mxu0 %v2555
        %v2709 = vpop.f32.mrb[0].mxu0
        %v2710 = vadd.f32 %v2525, %v2709
        %v2711 = vpop.f32.mrb[0].mxu0
        %v2712 = vpop.f32.mrb[0].mxu0
        %v2713 = vadd.f32 %v2525, %v2712
        %v2714 = vpop.f32.mrb[0].mxu0
        %2715 = vmatprep.mubr.bf16.mxu0 0
        %2716 = vmatmul.mubr.bf16.gmra.mrb[0].mxu0 %v2558
        %v2717 = vpop.f32.mrb[0].mxu0
        %v2718 = vadd.f32 %v2525, %v2717
        %v2719 = vpop.f32.mrb[0].mxu0
        %v2720 = vpop.f32.mrb[0].mxu0
        %v2721 = vadd.f32 %v2525, %v2720
        %v2722 = vpop.f32.mrb[0].mxu0
        %2723 = vmatprep.mubr.bf16.mxu0 0
        %2724 = vmatmul.mubr.bf16.gmra.mrb[0].mxu0 %v2561
        %v2725 = vpop.f32.mrb[0].mxu0
        %v2726 = vadd.f32 %v2525, %v2725
        %v2727 = vpop.f32.mrb[0].mxu0
        %v2728 = vpop.f32.mrb[0].mxu0
        %v2729 = vadd.f32 %v2525, %v2728
        %v2730 = vpop.f32.mrb[0].mxu0
        %2731 = vmatprep.mubr.bf16.mxu0 0
        %2732 = vmatmul.mubr.bf16.gmra.mrb[0].mxu0 %v2564
        %v2733 = vpop.f32.mrb[0].mxu0
        %v2734 = vadd.f32 %v2525, %v2733
        %v2735 = vpop.f32.mrb[0].mxu0
        %v2736 = vpop.f32.mrb[0].mxu0
        %v2737 = vadd.f32 %v2525, %v2736
        %v2738 = vpop.f32.mrb[0].mxu0
        %2739 = vmatprep.mubr.bf16.mxu0 0
        %2740 = vmatmul.mubr.bf16.gmra.mrb[0].mxu0 %v2567
        %v2741 = vpop.f32.mrb[0].mxu0
        %v2742 = vadd.f32 %v2525, %v2741
        %v2743 = vpop.f32.mrb[0].mxu0
        %v2744 = vpop.f32.mrb[0].mxu0
        %v2745 = vadd.f32 %v2525, %v2744
        %v2746 = vpop.f32.mrb[0].mxu0
        %2747 = vmatprep.mubr.bf16.mxu0 0
        %2748 = vmatmul.mubr.bf16.gmra.mrb[0].mxu0 %v2570
        %v2749 = vpop.f32.mrb[0].mxu0
        %v2750 = vadd.f32 %v2525, %v2749
        %v2751 = vpop.f32.mrb[0].mxu0
        %v2752 = vpop.f32.mrb[0].mxu0
        %v2753 = vadd.f32 %v2525, %v2752
        %v2754 = vpop.f32.mrb[0].mxu0
        %2755 = vmatprep.mubr.bf16.mxu0 0
        %2756 = vmatmul.mubr.bf16.gmra.mrb[0].mxu0 %v2573
        %v2757 = vpop.f32.mrb[0].mxu0
        %v2758 = vadd.f32 %v2525, %v2757
        %v2759 = vpop.f32.mrb[0].mxu0
        %v2760 = vpop.f32.mrb[0].mxu0
        %v2761 = vadd.f32 %v2525, %v2760
        %v2762 = vpop.f32.mrb[0].mxu0
        %2763 = vmatprep.mubr.bf16.mxu0 0
        %2764 = vmatmul.mubr.bf16.gmra.mrb[0].mxu0 %v2576
        %v2765 = vpop.f32.mrb[0].mxu0
        %v2766 = vadd.f32 %v2525, %v2765
        %v2767 = vpop.f32.mrb[0].mxu0
        %v2768 = vpop.f32.mrb[0].mxu0
        %v2769 = vadd.f32 %v2525, %v2768
        %v2770 = vpop.f32.mrb[0].mxu0
        %2771 = vmatprep.mubr.bf16.mxu0 0
        %2772 = vmatmul.mubr.bf16.gmra.mrb[0].mxu0 %v2579
        %v2773 = vpop.f32.mrb[0].mxu0
        %v2774 = vadd.f32 %v2525, %v2773
        %v2775 = vpop.f32.mrb[0].mxu0
        %v2776 = vpop.f32.mrb[0].mxu0
        %v2777 = vadd.f32 %v2525, %v2776
        %v2778 = vpop.f32.mrb[0].mxu0
        %2779 = vmatprep.mubr.bf16.mxu0 0
        %2780 = vmatmul.mubr.bf16.gmra.mrb[0].mxu0 %v2582
        %v2781 = vpop.f32.mrb[0].mxu0
        %v2782 = vadd.f32 %v2525, %v2781
        %v2783 = vpop.f32.mrb[0].mxu0
        %v2784 = vpop.f32.mrb[0].mxu0
        %v2785 = vadd.f32 %v2525, %v2784
        %v2786 = vpop.f32.mrb[0].mxu0
        %2787 = vmatprep.mubr.bf16.mxu0 0
        %2788 = vmatmul.mubr.bf16.gmra.mrb[0].mxu0 %v2585
        %v2789 = vpop.f32.mrb[0].mxu0
        %v2790 = vadd.f32 %v2525, %v2789
        %v2791 = vpop.f32.mrb[0].mxu0
        %v2792 = vpop.f32.mrb[0].mxu0
        %v2793 = vadd.f32 %v2525, %v2792
        %v2794 = vpop.f32.mrb[0].mxu0
        %2795 = vmatprep.mubr.bf16.mxu0 0
        %2796 = vmatmul.mubr.bf16.gmra.mrb[0].mxu0 %v2588
        %v2797 = vpop.f32.mrb[0].mxu0
        %v2798 = vadd.f32 %v2525, %v2797
        %v2799 = vpop.f32.mrb[0].mxu0
        %v2800 = vpop.f32.mrb[0].mxu0
        %v2801 = vadd.f32 %v2525, %v2800
        %v2802 = vpop.f32.mrb[0].mxu0
        %2803 = vmatprep.mubr.bf16.mxu0 0
        %2804 = vmatmul.mubr.bf16.gmra.mrb[0].mxu0 %v2591
        %v2805 = vpop.f32.mrb[0].mxu0
        %v2806 = vadd.f32 %v2525, %v2805
        %v2807 = vpop.f32.mrb[0].mxu0
        %v2808 = vpop.f32.mrb[0].mxu0
        %v2809 = vadd.f32 %v2525, %v2808
        %v2810 = vpop.f32.mrb[0].mxu0
        %2811 = vmatprep.mubr.bf16.mxu0 0
        %2812 = vmatmul.mubr.bf16.gmra.mrb[0].mxu0 %v2594
        %v2813 = vpop.f32.mrb[0].mxu0
        %v2814 = vadd.f32 %v2525, %v2813
        %v2815 = vpop.f32.mrb[0].mxu0
        %v2816 = vpop.f32.mrb[0].mxu0
        %v2817 = vadd.f32 %v2525, %v2816
        %v2818 = vpop.f32.mrb[0].mxu0
        %2819 = vmatprep.mubr.bf16.mxu0 0
        %2820 = vmatmul.mubr.bf16.gmra.mrb[0].mxu0 %v2597
        %v2821 = vpop.f32.mrb[0].mxu0
        %v2822 = vadd.f32 %v2525, %v2821
        %v2823 = vpop.f32.mrb[0].mxu0
        %v2824 = vpop.f32.mrb[0].mxu0
        %v2825 = vadd.f32 %v2525, %v2824
        %v2826 = vpop.f32.mrb[0].mxu0
        %2827 = vmatprep.mubr.bf16.mxu0 0
        %2828 = vmatmul.mubr.bf16.gmra.mrb[0].mxu0 %v2600
        %v2829 = vpop.f32.mrb[0].mxu0
        %v2830 = vadd.f32 %v2525, %v2829
        %v2831 = vpop.f32.mrb[0].mxu0
        %v2832 = vpop.f32.mrb[0].mxu0
        %v2833 = vadd.f32 %v2525, %v2832
        %v2834 = vpop.f32.mrb[0].mxu0
        %2835 = vmatprep.mubr.bf16.mxu0 0
        %2836 = vmatmul.mubr.bf16.gmra.mrb[0].mxu0 %v2603
        %v2837 = vpop.f32.mrb[0].mxu0
        %v2838 = vadd.f32 %v2525, %v2837
        %v2839 = vpop.f32.mrb[0].mxu0
        %v2840 = vpop.f32.mrb[0].mxu0
        %v2841 = vadd.f32 %v2525, %v2840
        %v2842 = vpop.f32.mrb[0].mxu0
        %2843 = vmatprep.mubr.bf16.mxu0 0
        %2844 = vmatmul.mubr.bf16.gmra.mrb[0].mxu0 %v2606
        %v2845 = vpop.f32.mrb[0].mxu0
        %v2846 = vadd.f32 %v2525, %v2845
        %v2847 = vpop.f32.mrb[0].mxu0
        %v2848 = vpop.f32.mrb[0].mxu0
        %v2849 = vadd.f32 %v2525, %v2848
        %v2850 = vpop.f32.mrb[0].mxu0
        %2851 = vmatprep.mubr.bf16.mxu0 0
        %2852 = vmatmul.mubr.bf16.gmra.mrb[0].mxu0 %v2609
        %v2853 = vpop.f32.mrb[0].mxu0
        %v2854 = vadd.f32 %v2525, %v2853
        %v2855 = vpop.f32.mrb[0].mxu0
        %v2856 = vpop.f32.mrb[0].mxu0
        %v2857 = vadd.f32 %v2525, %v2856
        %v2858 = vpop.f32.mrb[0].mxu0
        %2859 = vmatprep.mubr.bf16.mxu0 0
        %2860 = vmatmul.mubr.bf16.gmra.mrb[0].mxu0 %v2612
        %v2861 = vpop.f32.mrb[0].mxu0
        %v2862 = vadd.f32 %v2525, %v2861
        %v2863 = vpop.f32.mrb[0].mxu0
        %v2864 = vpop.f32.mrb[0].mxu0
        %v2865 = vadd.f32 %v2525, %v2864
        %v2866 = vpop.f32.mrb[0].mxu0
        %2867 = vmatprep.mubr.bf16.mxu0 0
        %2868 = vmatmul.mubr.bf16.gmra.mrb[0].mxu0 %v2615
        %v2869 = vpop.f32.mrb[0].mxu0
        %v2870 = vadd.f32 %v2525, %v2869
        %v2871 = vpop.f32.mrb[0].mxu0
        %v2872 = vpop.f32.mrb[0].mxu0
        %v2873 = vadd.f32 %v2525, %v2872
        %v2874 = vpop.f32.mrb[0].mxu0
        %2875 = vmatprep.mubr.bf16.mxu0 0
        %2876 = vmatmul.mubr.bf16.gmra.mrb[0].mxu0 %v2618
        %v2877 = vpop.f32.mrb[0].mxu0
        %v2878 = vadd.f32 %v2525, %v2877
        %v2879 = vpop.f32.mrb[0].mxu0
        %v2880 = vpop.f32.mrb[0].mxu0
        %v2881 = vadd.f32 %v2525, %v2880
        %v2882 = vpop.f32.mrb[0].mxu0
        %2883 = vmatprep.mubr.bf16.mxu0 0
        %2884 = vmatmul.mubr.bf16.gmra.mrb[0].mxu0 %v2621
        %v2885 = vpop.f32.mrb[0].mxu0
        %v2886 = vadd.f32 %v2525, %v2885
        %v2887 = vpop.f32.mrb[0].mxu0
        %v2888 = vpop.f32.mrb[0].mxu0
        %v2889 = vadd.f32 %v2525, %v2888
        %v2890 = vpop.f32.mrb[0].mxu0
        %2891 = vmatprep.mubr.bf16.mxu0 0
        %2892 = vmatmul.mubr.bf16.gmra.mrb[0].mxu0 %v2624
        %v2893 = vpop.f32.mrb[0].mxu0
        %v2894 = vadd.f32 %v2525, %v2893
        %v2895 = vpop.f32.mrb[0].mxu0
        %v2896 = vpop.f32.mrb[0].mxu0
        %v2897 = vadd.f32 %v2525, %v2896
        %v2898 = vpop.f32.mrb[0].mxu0
        %2899 = vmatprep.mubr.bf16.mxu0 0
        %2900 = vmatmul.mubr.bf16.gmra.mrb[0].mxu0 %v2627
        %v2901 = vpop.f32.mrb[0].mxu0
        %v2902 = vadd.f32 %v2525, %v2901
        %v2903 = vpop.f32.mrb[0].mxu0
        %v2904 = vpop.f32.mrb[0].mxu0
        %v2905 = vadd.f32 %v2525, %v2904
        %v2906 = vpop.f32.mrb[0].mxu0
        %2907 = vmatprep.mubr.bf16.mxu0 0
        %2908 = vmatmul.mubr.bf16.gmra.mrb[0].mxu0 %v2630
        %v2909 = vpop.f32.mrb[0].mxu0
        %v2910 = vadd.f32 %v2525, %v2909
        %v2911 = vpop.f32.mrb[0].mxu0
        %v2912 = vpop.f32.mrb[0].mxu0
        %v2913 = vadd.f32 %v2525, %v2912
        %v2914 = vpop.f32.mrb[0].mxu0
        %2915 = vmatprep.mubr.bf16.mxu0 0
        %2916 = vmatmul.mubr.bf16.gmra.mrb[0].mxu0 %v2633
        %v2917 = vpop.f32.mrb[0].mxu0
        %v2918 = vadd.f32 %v2525, %v2917
        %v2919 = vpop.f32.mrb[0].mxu0
        %v2920 = vpop.f32.mrb[0].mxu0
        %v2921 = vadd.f32 %v2525, %v2920
        %v2922 = vpop.f32.mrb[0].mxu0
        %2923 = vdwg.mxu0
        %v2924 = vxor.u32 %v2670, 2147483648
        %v2925 = vxor.u32 %v2673, 2147483648
        %v2926 = vxor.u32 %v2678, 2147483648
        %v2927 = vxor.u32 %v2681, 2147483648
        %v2928 = vxor.u32 %v2686, 2147483648
        %v2929 = vxor.u32 %v2689, 2147483648
        %v2930 = vxor.u32 %v2694, 2147483648
        %v2931 = vxor.u32 %v2697, 2147483648
        %v2932 = vxor.u32 %v2702, 2147483648
        %v2933 = vxor.u32 %v2705, 2147483648
        %v2934 = vxor.u32 %v2710, 2147483648
        %v2935 = vxor.u32 %v2713, 2147483648
        %v2936 = vxor.u32 %v2718, 2147483648
        %v2937 = vxor.u32 %v2721, 2147483648
        %v2938 = vxor.u32 %v2726, 2147483648
        %v2939 = vxor.u32 %v2729, 2147483648
        %v2940 = vxor.u32 %v2734, 2147483648
        %v2941 = vxor.u32 %v2737, 2147483648
        %v2942 = vxor.u32 %v2742, 2147483648
        %v2943 = vxor.u32 %v2745, 2147483648
        %v2944 = vxor.u32 %v2750, 2147483648
        %v2945 = vxor.u32 %v2753, 2147483648
        %v2946 = vxor.u32 %v2758, 2147483648
        %v2947 = vxor.u32 %v2761, 2147483648
        %v2948 = vxor.u32 %v2766, 2147483648
        %v2949 = vxor.u32 %v2769, 2147483648
        %v2950 = vxor.u32 %v2774, 2147483648
        %v2951 = vxor.u32 %v2777, 2147483648
        %v2952 = vxor.u32 %v2782, 2147483648
        %v2953 = vxor.u32 %v2785, 2147483648
        %v2954 = vxor.u32 %v2790, 2147483648
        %v2955 = vxor.u32 %v2793, 2147483648
        %v2956 = vxor.u32 %v2798, 2147483648
        %v2957 = vxor.u32 %v2801, 2147483648
        %v2958 = vxor.u32 %v2806, 2147483648
        %v2959 = vxor.u32 %v2809, 2147483648
        %v2960 = vxor.u32 %v2814, 2147483648
        %v2961 = vxor.u32 %v2817, 2147483648
        %v2962 = vxor.u32 %v2822, 2147483648
        %v2963 = vxor.u32 %v2825, 2147483648
        %v2964 = vxor.u32 %v2830, 2147483648
        %v2965 = vxor.u32 %v2833, 2147483648
        %v2966 = vxor.u32 %v2838, 2147483648
        %v2967 = vxor.u32 %v2841, 2147483648
        %v2968 = vxor.u32 %v2846, 2147483648
        %v2969 = vxor.u32 %v2849, 2147483648
        %v2970 = vxor.u32 %v2854, 2147483648
        %v2971 = vxor.u32 %v2857, 2147483648
        %v2972 = vxor.u32 %v2862, 2147483648
        %v2973 = vxor.u32 %v2865, 2147483648
        %v2974 = vxor.u32 %v2870, 2147483648
        %v2975 = vxor.u32 %v2873, 2147483648
        %v2976 = vxor.u32 %v2878, 2147483648
        %v2977 = vxor.u32 %v2881, 2147483648
        %v2978 = vxor.u32 %v2886, 2147483648
        %v2979 = vxor.u32 %v2889, 2147483648
        %v2980 = vxor.u32 %v2894, 2147483648
        %v2981 = vxor.u32 %v2897, 2147483648
        %v2982 = vxor.u32 %v2902, 2147483648
        %v2983 = vxor.u32 %v2905, 2147483648
        %v2984 = vxor.u32 %v2910, 2147483648
        %v2985 = vxor.u32 %v2913, 2147483648
        %v2986 = vxor.u32 %v2918, 2147483648
        %v2987 = vxor.u32 %v2921, 2147483648
        %v2988 = vmul.f32 %v2924, 1.442695
        %v2989 = vpow.pop %v2988
        %v2990 = vmul.f32 %v2925, 1.442695
        %v2991 = vpow.pop %v2990
        %v2992 = vmul.f32 %v2926, 1.442695
        %v2993 = vpow.pop %v2992
        %v2994 = vmul.f32 %v2927, 1.442695
        %v2995 = vpow.pop %v2994
        %v2996 = vmul.f32 %v2928, 1.442695
        %v2997 = vpow.pop %v2996
        %v2998 = vmul.f32 %v2929, 1.442695
        %v2999 = vpow.pop %v2998
        %v3000 = vmul.f32 %v2930, 1.442695
        %v3001 = vpow.pop %v3000
        %v3002 = vmul.f32 %v2931, 1.442695
        %v3003 = vpow.pop %v3002
        %v3004 = vmul.f32 %v2932, 1.442695
        %v3005 = vpow.pop %v3004
        %v3006 = vmul.f32 %v2933, 1.442695
        %v3007 = vpow.pop %v3006
        %v3008 = vmul.f32 %v2934, 1.442695
        %v3009 = vpow.pop %v3008
        %v3010 = vmul.f32 %v2935, 1.442695
        %v3011 = vpow.pop %v3010
        %v3012 = vmul.f32 %v2936, 1.442695
        %v3013 = vpow.pop %v3012
        %v3014 = vmul.f32 %v2937, 1.442695
        %v3015 = vpow.pop %v3014
        %v3016 = vmul.f32 %v2938, 1.442695
        %v3017 = vpow.pop %v3016
        %v3018 = vmul.f32 %v2939, 1.442695
        %v3019 = vpow.pop %v3018
        %v3020 = vmul.f32 %v2940, 1.442695
        %v3021 = vpow.pop %v3020
        %v3022 = vmul.f32 %v2941, 1.442695
        %v3023 = vpow.pop %v3022
        %v3024 = vmul.f32 %v2942, 1.442695
        %v3025 = vpow.pop %v3024
        %v3026 = vmul.f32 %v2943, 1.442695
        %v3027 = vpow.pop %v3026
        %v3028 = vmul.f32 %v2944, 1.442695
        %v3029 = vpow.pop %v3028
        %v3030 = vmul.f32 %v2945, 1.442695
        %v3031 = vpow.pop %v3030
        %v3032 = vmul.f32 %v2946, 1.442695
        %v3033 = vpow.pop %v3032
        %v3034 = vmul.f32 %v2947, 1.442695
        %v3035 = vpow.pop %v3034
        %v3036 = vmul.f32 %v2948, 1.442695
        %v3037 = vpow.pop %v3036
        %v3038 = vmul.f32 %v2949, 1.442695
        %v3039 = vpow.pop %v3038
        %v3040 = vmul.f32 %v2950, 1.442695
        %v3041 = vpow.pop %v3040
        %v3042 = vmul.f32 %v2951, 1.442695
        %v3043 = vpow.pop %v3042
        %v3044 = vmul.f32 %v2952, 1.442695
        %v3045 = vpow.pop %v3044
        %v3046 = vmul.f32 %v2953, 1.442695
        %v3047 = vpow.pop %v3046
        %v3048 = vmul.f32 %v2954, 1.442695
        %v3049 = vpow.pop %v3048
        %v3050 = vmul.f32 %v2955, 1.442695
        %v3051 = vpow.pop %v3050
        %v3052 = vmul.f32 %v2956, 1.442695
        %v3053 = vpow.pop %v3052
        %v3054 = vmul.f32 %v2957, 1.442695
        %v3055 = vpow.pop %v3054
        %v3056 = vmul.f32 %v2958, 1.442695
        %v3057 = vpow.pop %v3056
        %v3058 = vmul.f32 %v2959, 1.442695
        %v3059 = vpow.pop %v3058
        %v3060 = vmul.f32 %v2960, 1.442695
        %v3061 = vpow.pop %v3060
        %v3062 = vmul.f32 %v2961, 1.442695
        %v3063 = vpow.pop %v3062
        %v3064 = vmul.f32 %v2962, 1.442695
        %v3065 = vpow.pop %v3064
        %v3066 = vmul.f32 %v2963, 1.442695
        %v3067 = vpow.pop %v3066
        %v3068 = vmul.f32 %v2964, 1.442695
        %v3069 = vpow.pop %v3068
        %v3070 = vmul.f32 %v2965, 1.442695
        %v3071 = vpow.pop %v3070
        %v3072 = vmul.f32 %v2966, 1.442695
        %v3073 = vpow.pop %v3072
        %v3074 = vmul.f32 %v2967, 1.442695
        %v3075 = vpow.pop %v3074
        %v3076 = vmul.f32 %v2968, 1.442695
        %v3077 = vpow.pop %v3076
        %v3078 = vmul.f32 %v2969, 1.442695
        %v3079 = vpow.pop %v3078
        %v3080 = vmul.f32 %v2970, 1.442695
        %v3081 = vpow.pop %v3080
        %v3082 = vmul.f32 %v2971, 1.442695
        %v3083 = vpow.pop %v3082
        %v3084 = vmul.f32 %v2972, 1.442695
        %v3085 = vpow.pop %v3084
        %v3086 = vmul.f32 %v2973, 1.442695
        %v3087 = vpow.pop %v3086
        %v3088 = vmul.f32 %v2974, 1.442695
        %v3089 = vpow.pop %v3088
        %v3090 = vmul.f32 %v2975, 1.442695
        %v3091 = vpow.pop %v3090
        %v3092 = vmul.f32 %v2976, 1.442695
        %v3093 = vpow.pop %v3092
        %v3094 = vmul.f32 %v2977, 1.442695
        %v3095 = vpow.pop %v3094
        %v3096 = vmul.f32 %v2978, 1.442695
        %v3097 = vpow.pop %v3096
        %v3098 = vmul.f32 %v2979, 1.442695
        %v3099 = vpow.pop %v3098
        %v3100 = vmul.f32 %v2980, 1.442695
        %v3101 = vpow.pop %v3100
        %v3102 = vmul.f32 %v2981, 1.442695
        %v3103 = vpow.pop %v3102
        %v3104 = vmul.f32 %v2982, 1.442695
        %v3105 = vpow.pop %v3104
        %v3106 = vmul.f32 %v2983, 1.442695
        %v3107 = vpow.pop %v3106
        %v3108 = vmul.f32 %v2984, 1.442695
        %v3109 = vpow.pop %v3108
        %v3110 = vmul.f32 %v2985, 1.442695
        %v3111 = vpow.pop %v3110
        %v3112 = vmul.f32 %v2986, 1.442695
        %v3113 = vpow.pop %v3112
        %v3114 = vmul.f32 %v2987, 1.442695
        %v3115 = vpow.pop %v3114
        %v3116 = vadd.f32 %v2989, 1.0
        %v3117 = vadd.f32 %v2991, 1.0
        %v3118 = vadd.f32 %v2993, 1.0
        %v3119 = vadd.f32 %v2995, 1.0
        %v3120 = vadd.f32 %v2997, 1.0
        %v3121 = vadd.f32 %v2999, 1.0
        %v3122 = vadd.f32 %v3001, 1.0
        %v3123 = vadd.f32 %v3003, 1.0
        %v3124 = vadd.f32 %v3005, 1.0
        %v3125 = vadd.f32 %v3007, 1.0
        %v3126 = vadd.f32 %v3009, 1.0
        %v3127 = vadd.f32 %v3011, 1.0
        %v3128 = vadd.f32 %v3013, 1.0
        %v3129 = vadd.f32 %v3015, 1.0
        %v3130 = vadd.f32 %v3017, 1.0
        %v3131 = vadd.f32 %v3019, 1.0
        %v3132 = vadd.f32 %v3021, 1.0
        %v3133 = vadd.f32 %v3023, 1.0
        %v3134 = vadd.f32 %v3025, 1.0
        %v3135 = vadd.f32 %v3027, 1.0
        %v3136 = vadd.f32 %v3029, 1.0
        %v3137 = vadd.f32 %v3031, 1.0
        %v3138 = vadd.f32 %v3033, 1.0
        %v3139 = vadd.f32 %v3035, 1.0
        %v3140 = vadd.f32 %v3037, 1.0
        %v3141 = vadd.f32 %v3039, 1.0
        %v3142 = vadd.f32 %v3041, 1.0
        %v3143 = vadd.f32 %v3043, 1.0
        %v3144 = vadd.f32 %v3045, 1.0
        %v3145 = vadd.f32 %v3047, 1.0
        %v3146 = vadd.f32 %v3049, 1.0
        %v3147 = vadd.f32 %v3051, 1.0
        %v3148 = vadd.f32 %v3053, 1.0
        %v3149 = vadd.f32 %v3055, 1.0
        %v3150 = vadd.f32 %v3057, 1.0
        %v3151 = vadd.f32 %v3059, 1.0
        %v3152 = vadd.f32 %v3061, 1.0
        %v3153 = vadd.f32 %v3063, 1.0
        %v3154 = vadd.f32 %v3065, 1.0
        %v3155 = vadd.f32 %v3067, 1.0
        %v3156 = vadd.f32 %v3069, 1.0
        %v3157 = vadd.f32 %v3071, 1.0
        %v3158 = vadd.f32 %v3073, 1.0
        %v3159 = vadd.f32 %v3075, 1.0
        %v3160 = vadd.f32 %v3077, 1.0
        %v3161 = vadd.f32 %v3079, 1.0
        %v3162 = vadd.f32 %v3081, 1.0
        %v3163 = vadd.f32 %v3083, 1.0
        %v3164 = vadd.f32 %v3085, 1.0
        %v3165 = vadd.f32 %v3087, 1.0
        %v3166 = vadd.f32 %v3089, 1.0
        %v3167 = vadd.f32 %v3091, 1.0
        %v3168 = vadd.f32 %v3093, 1.0
        %v3169 = vadd.f32 %v3095, 1.0
        %v3170 = vadd.f32 %v3097, 1.0
        %v3171 = vadd.f32 %v3099, 1.0
        %v3172 = vadd.f32 %v3101, 1.0
        %v3173 = vadd.f32 %v3103, 1.0
        %v3174 = vadd.f32 %v3105, 1.0
        %v3175 = vadd.f32 %v3107, 1.0
        %v3176 = vadd.f32 %v3109, 1.0
        %v3177 = vadd.f32 %v3111, 1.0
        %v3178 = vadd.f32 %v3113, 1.0
        %v3179 = vadd.f32 %v3115, 1.0
        %v3180 = vrcp.pop %v3116
        %v3181 = vmul.f32 1.0, %v3180
        %v3182 = vrcp.pop %v3117
        %v3183 = vmul.f32 1.0, %v3182
        %v3184 = vrcp.pop %v3118
        %v3185 = vmul.f32 1.0, %v3184
        %v3186 = vrcp.pop %v3119
        %v3187 = vmul.f32 1.0, %v3186
        %v3188 = vrcp.pop %v3120
        %v3189 = vmul.f32 1.0, %v3188
        %v3190 = vrcp.pop %v3121
        %v3191 = vmul.f32 1.0, %v3190
        %v3192 = vrcp.pop %v3122
        %v3193 = vmul.f32 1.0, %v3192
        %v3194 = vrcp.pop %v3123
        %v3195 = vmul.f32 1.0, %v3194
        %v3196 = vrcp.pop %v3124
        %v3197 = vmul.f32 1.0, %v3196
        %v3198 = vrcp.pop %v3125
        %v3199 = vmul.f32 1.0, %v3198
        %v3200 = vrcp.pop %v3126
        %v3201 = vmul.f32 1.0, %v3200
        %v3202 = vrcp.pop %v3127
        %v3203 = vmul.f32 1.0, %v3202
        %v3204 = vrcp.pop %v3128
        %v3205 = vmul.f32 1.0, %v3204
        %v3206 = vrcp.pop %v3129
        %v3207 = vmul.f32 1.0, %v3206
        %v3208 = vrcp.pop %v3130
        %v3209 = vmul.f32 1.0, %v3208
        %v3210 = vrcp.pop %v3131
        %v3211 = vmul.f32 1.0, %v3210
        %v3212 = vrcp.pop %v3132
        %v3213 = vmul.f32 1.0, %v3212
        %v3214 = vrcp.pop %v3133
        %v3215 = vmul.f32 1.0, %v3214
        %v3216 = vrcp.pop %v3134
        %v3217 = vmul.f32 1.0, %v3216
        %v3218 = vrcp.pop %v3135
        %v3219 = vmul.f32 1.0, %v3218
        %v3220 = vrcp.pop %v3136
        %v3221 = vmul.f32 1.0, %v3220
        %v3222 = vrcp.pop %v3137
        %v3223 = vmul.f32 1.0, %v3222
        %v3224 = vrcp.pop %v3138
        %v3225 = vmul.f32 1.0, %v3224
        %v3226 = vrcp.pop %v3139
        %v3227 = vmul.f32 1.0, %v3226
        %v3228 = vrcp.pop %v3140
        %v3229 = vmul.f32 1.0, %v3228
        %v3230 = vrcp.pop %v3141
        %v3231 = vmul.f32 1.0, %v3230
        %v3232 = vrcp.pop %v3142
        %v3233 = vmul.f32 1.0, %v3232
        %v3234 = vrcp.pop %v3143
        %v3235 = vmul.f32 1.0, %v3234
        %v3236 = vrcp.pop %v3144
        %v3237 = vmul.f32 1.0, %v3236
        %v3238 = vrcp.pop %v3145
        %v3239 = vmul.f32 1.0, %v3238
        %v3240 = vrcp.pop %v3146
        %v3241 = vmul.f32 1.0, %v3240
        %v3242 = vrcp.pop %v3147
        %v3243 = vmul.f32 1.0, %v3242
        %v3244 = vrcp.pop %v3148
        %v3245 = vmul.f32 1.0, %v3244
        %v3246 = vrcp.pop %v3149
        %v3247 = vmul.f32 1.0, %v3246
        %v3248 = vrcp.pop %v3150
        %v3249 = vmul.f32 1.0, %v3248
        %v3250 = vrcp.pop %v3151
        %v3251 = vmul.f32 1.0, %v3250
        %v3252 = vrcp.pop %v3152
        %v3253 = vmul.f32 1.0, %v3252
        %v3254 = vrcp.pop %v3153
        %v3255 = vmul.f32 1.0, %v3254
        %v3256 = vrcp.pop %v3154
        %v3257 = vmul.f32 1.0, %v3256
        %v3258 = vrcp.pop %v3155
        %v3259 = vmul.f32 1.0, %v3258
        %v3260 = vrcp.pop %v3156
        %v3261 = vmul.f32 1.0, %v3260
        %v3262 = vrcp.pop %v3157
        %v3263 = vmul.f32 1.0, %v3262
        %v3264 = vrcp.pop %v3158
        %v3265 = vmul.f32 1.0, %v3264
        %v3266 = vrcp.pop %v3159
        %v3267 = vmul.f32 1.0, %v3266
        %v3268 = vrcp.pop %v3160
        %v3269 = vmul.f32 1.0, %v3268
        %v3270 = vrcp.pop %v3161
        %v3271 = vmul.f32 1.0, %v3270
        %v3272 = vrcp.pop %v3162
        %v3273 = vmul.f32 1.0, %v3272
        %v3274 = vrcp.pop %v3163
        %v3275 = vmul.f32 1.0, %v3274
        %v3276 = vrcp.pop %v3164
        %v3277 = vmul.f32 1.0, %v3276
        %v3278 = vrcp.pop %v3165
        %v3279 = vmul.f32 1.0, %v3278
        %v3280 = vrcp.pop %v3166
        %v3281 = vmul.f32 1.0, %v3280
        %v3282 = vrcp.pop %v3167
        %v3283 = vmul.f32 1.0, %v3282
        %v3284 = vrcp.pop %v3168
        %v3285 = vmul.f32 1.0, %v3284
        %v3286 = vrcp.pop %v3169
        %v3287 = vmul.f32 1.0, %v3286
        %v3288 = vrcp.pop %v3170
        %v3289 = vmul.f32 1.0, %v3288
        %v3290 = vrcp.pop %v3171
        %v3291 = vmul.f32 1.0, %v3290
        %v3292 = vrcp.pop %v3172
        %v3293 = vmul.f32 1.0, %v3292
        %v3294 = vrcp.pop %v3173
        %v3295 = vmul.f32 1.0, %v3294
        %v3296 = vrcp.pop %v3174
        %v3297 = vmul.f32 1.0, %v3296
        %v3298 = vrcp.pop %v3175
        %v3299 = vmul.f32 1.0, %v3298
        %v3300 = vrcp.pop %v3176
        %v3301 = vmul.f32 1.0, %v3300
        %v3302 = vrcp.pop %v3177
        %v3303 = vmul.f32 1.0, %v3302
        %v3304 = vrcp.pop %v3178
        %v3305 = vmul.f32 1.0, %v3304
        %v3306 = vrcp.pop %v3179
        %v3307 = vmul.f32 1.0, %v3306
        %3308 = vst [vmem:[%s245] sm:$0xff] %v3181
        %3309 = vst [vmem:[%s245 + $0x8] sm:$0xff] %v3183
        %3310 = vst [vmem:[%s245 + $0x10] sm:$0xff] %v3185
        %3311 = vst [vmem:[%s245 + $0x18] sm:$0xff] %v3187
        %3312 = vst [vmem:[%s245 + $0x20] sm:$0xff] %v3189
        %3313 = vst [vmem:[%s245 + $0x28] sm:$0xff] %v3191
        %3314 = vst [vmem:[%s245 + $0x30] sm:$0xff] %v3193
        %3315 = vst [vmem:[%s245 + $0x38] sm:$0xff] %v3195
        %3316 = vst [vmem:[%s245 + $0x40] sm:$0xff] %v3197
        %3317 = vst [vmem:[%s245 + $0x48] sm:$0xff] %v3199
        %3318 = vst [vmem:[%s245 + $0x50] sm:$0xff] %v3201
        %3319 = vst [vmem:[%s245 + $0x58] sm:$0xff] %v3203
        %3320 = vst [vmem:[%s245 + $0x60] sm:$0xff] %v3205
        %3321 = vst [vmem:[%s245 + $0x68] sm:$0xff] %v3207
        %3322 = vst [vmem:[%s245 + $0x70] sm:$0xff] %v3209
        %3323 = vst [vmem:[%s245 + $0x78] sm:$0xff] %v3211
        %3324 = vst [vmem:[%s245 + $0x80] sm:$0xff] %v3213
        %3325 = vst [vmem:[%s245 + $0x88] sm:$0xff] %v3215
        %3326 = vst [vmem:[%s245 + $0x90] sm:$0xff] %v3217
        %3327 = vst [vmem:[%s245 + $0x98] sm:$0xff] %v3219
        %3328 = vst [vmem:[%s245 + $0xa0] sm:$0xff] %v3221
        %3329 = vst [vmem:[%s245 + $0xa8] sm:$0xff] %v3223
        %3330 = vst [vmem:[%s245 + $0xb0] sm:$0xff] %v3225
        %3331 = vst [vmem:[%s245 + $0xb8] sm:$0xff] %v3227
        %3332 = vst [vmem:[%s245 + $0xc0] sm:$0xff] %v3229
        %3333 = vst [vmem:[%s245 + $0xc8] sm:$0xff] %v3231
        %3334 = vst [vmem:[%s245 + $0xd0] sm:$0xff] %v3233
        %3335 = vst [vmem:[%s245 + $0xd8] sm:$0xff] %v3235
        %3336 = vst [vmem:[%s245 + $0xe0] sm:$0xff] %v3237
        %3337 = vst [vmem:[%s245 + $0xe8] sm:$0xff] %v3239
        %3338 = vst [vmem:[%s245 + $0xf0] sm:$0xff] %v3241
        %3339 = vst [vmem:[%s245 + $0xf8] sm:$0xff] %v3243
        %3340 = vst [vmem:[%s245 + $0x100] sm:$0xff] %v3245
        %3341 = vst [vmem:[%s245 + $0x108] sm:$0xff] %v3247
        %3342 = vst [vmem:[%s245 + $0x110] sm:$0xff] %v3249
        %3343 = vst [vmem:[%s245 + $0x118] sm:$0xff] %v3251
        %3344 = vst [vmem:[%s245 + $0x120] sm:$0xff] %v3253
        %3345 = vst [vmem:[%s245 + $0x128] sm:$0xff] %v3255
        %3346 = vst [vmem:[%s245 + $0x130] sm:$0xff] %v3257
        %3347 = vst [vmem:[%s245 + $0x138] sm:$0xff] %v3259
        %3348 = vst [vmem:[%s245 + $0x140] sm:$0xff] %v3261
        %3349 = vst [vmem:[%s245 + $0x148] sm:$0xff] %v3263
        %3350 = vst [vmem:[%s245 + $0x150] sm:$0xff] %v3265
        %3351 = vst [vmem:[%s245 + $0x158] sm:$0xff] %v3267
        %3352 = vst [vmem:[%s245 + $0x160] sm:$0xff] %v3269
        %3353 = vst [vmem:[%s245 + $0x168] sm:$0xff] %v3271
        %3354 = vst [vmem:[%s245 + $0x170] sm:$0xff] %v3273
        %3355 = vst [vmem:[%s245 + $0x178] sm:$0xff] %v3275
        %3356 = vst [vmem:[%s245 + $0x180] sm:$0xff] %v3277
        %3357 = vst [vmem:[%s245 + $0x188] sm:$0xff] %v3279
        %3358 = vst [vmem:[%s245 + $0x190] sm:$0xff] %v3281
        %3359 = vst [vmem:[%s245 + $0x198] sm:$0xff] %v3283
        %3360 = vst [vmem:[%s245 + $0x1a0] sm:$0xff] %v3285
        %3361 = vst [vmem:[%s245 + $0x1a8] sm:$0xff] %v3287
        %3362 = vst [vmem:[%s245 + $0x1b0] sm:$0xff] %v3289
        %3363 = vst [vmem:[%s245 + $0x1b8] sm:$0xff] %v3291
        %3364 = vst [vmem:[%s245 + $0x1c0] sm:$0xff] %v3293
        %3365 = vst [vmem:[%s245 + $0x1c8] sm:$0xff] %v3295
        %3366 = vst [vmem:[%s245 + $0x1d0] sm:$0xff] %v3297
        %3367 = vst [vmem:[%s245 + $0x1d8] sm:$0xff] %v3299
        %3368 = vst [vmem:[%s245 + $0x1e0] sm:$0xff] %v3301
        %3369 = vst [vmem:[%s245 + $0x1e8] sm:$0xff] %v3303
        %3370 = vst [vmem:[%s245 + $0x1f0] sm:$0xff] %v3305
        %3371 = vst [vmem:[%s245 + $0x1f8] sm:$0xff] %v3307
        %s3372 = sand.u32 %s159, 1
        %s3373 = scalar_lea.sflag [#allocation3], %s3372
        %s3374 = sand.u32 %s159, 1
        %s3375 = smul.addr %s3374, 512
        %s3376 = scalar_lea.vmem [#allocation2], %s3375
        // Predicated region
        $region45: #{tpu_custom_call.1} parent=43 // pred_check
          %p3377 = pneg %p169
        $region46: #{tpu_custom_call.1} parent=43 // pred_check_branch
          %3379 = sbr.rel (%p3377) target = $region48
        $region47: #{tpu_custom_call.1} parent=43 // pred_region
          %s3380 = smul.u32 64, %s20
          %s3382 = ssub.s32 8192, 8192
          %3383 = vsyncadd %s3373, %s3382
          %s3384 = smul.addr %s3380, 128
          %s3385 = scalar_lea.hbm %s6, %s3384
          %s3386 = sshll.u32 %s3376, 4
          %s3387 = int_to_ptr.vmem [resolvable:$true] %s3386
          %3392 = dma.vmem_to_hbm [thread:$0]  %s3387, 8192, %s3385, %s3373, 128, 128, 8
        $region48: #{tpu_custom_call.1} parent=43 // pred_fallthru
          _
      $region44: #{tpu_custom_call.1} parent=5 // pred_fallthru
        _
      %p3393 = scmp.le.s32.totalorder 2, %s15
      // Predicated region
      $region49: #{tpu_custom_call.1} parent=5 // pred_check
        %p3394 = pneg %p3393
      $region50: #{tpu_custom_call.1} parent=5 // pred_check_branch
        %3396 = sbr.rel (%p3394) target = $region52
      $region51: #{tpu_custom_call.1} parent=5 // pred_region
        %s3397 = ssub.s32 %s15, 2
        // Predicated region
        $region53: #{tpu_custom_call.1} parent=51 // pred_check
          %p3398 = pneg %p175
        $region54: #{tpu_custom_call.1} parent=51 // pred_check_branch
          %3400 = sbr.rel (%p3398) target = $region56
        $region55: #{tpu_custom_call.1} parent=51 // pred_region
          %s3401 = sand.u32 %s160, 1
          %s3402 = scalar_lea.sflag [#allocation3], %s3401
          %s3403 = sand.u32 %s160, 1
          %s3404 = smul.addr %s3403, 512
          %s3405 = scalar_lea.vmem [#allocation2], %s3404
          %3406 = dma.done %s3402, 8192
        $region56: #{tpu_custom_call.1} parent=51 // pred_fallthru
          _
      $region52: #{tpu_custom_call.1} parent=5 // pred_fallthru
        _
    $region6: #{tpu_custom_call.1} parent=1 // loop_footer
      %s19 = sadd.s32 1, %s15
    $region7: #{tpu_custom_call.1} parent=1 // loop_footer_branch
      %14 = sbr.rel target = $region3
    $region8: #{tpu_custom_call.1} parent=1 // loop_exit
      _
    %3407 = vsyncpa [#allocation3], 1
    %s3408 = scalar_lea.sflag [#allocation3], 1
    %3409 = vsyncpa %s3408, 1

</llo_original>
